<compile_context>
chip_gen: v5e
topology: v5e:2x2
jax: 0.10.0
libtpu: 0.0.40
codegen_flags: <defaults>
</compile_context>

<pallas_src>
import functools
import math

import jax
import jax.numpy as jnp
from jax import lax
from jax.experimental import pallas as pl
from jax.experimental.pallas import tpu as pltpu


_BN_EPS = 1e-5
_VMEM_CAP = 48 << 20   # conservative scoped-VMEM ceiling (fits v7x's 64 MiB)


# --------------------------------------------------------------------------
# In-kernel helpers (plain Python, traced inside the kernel bodies)
# --------------------------------------------------------------------------
def _zero_halo(ref, H, W, p):
    """Zero only the p-wide halo border of a (H+2p, W+2p, C) VMEM scratch."""
    if p == 0:
        return
    C = ref.shape[-1]
    z_row = jnp.zeros((p, W + 2 * p, C), ref.dtype)
    z_col = jnp.zeros((H + 2 * p, p, C), ref.dtype)
    ref[:p, :, :] = z_row                      # top rows
    ref[H + p:H + 2 * p, :, :] = z_row         # bottom rows
    ref[:, :p, :] = z_col                      # left columns
    ref[:, W + p:W + 2 * p, :] = z_col         # right columns


def _conv3x3_from_padded(src_ref, w, bias_f32, *, H, W, K):
    """src_ref: (H+2p, W+2p, Cin) zero-padded VMEM scratch.
    w: (K*K, Cin, Cout) tap-major weights.  bias_f32: (1, Cout) f32.
    Returns ReLU(conv + bias) as (H*W, Cout) f32."""
    Cin = src_ref.shape[-1]
    Cout = w.shape[-1]
    # Accumulator initialized with the broadcast bias (saves one add pass).
    acc = jnp.broadcast_to(bias_f32, (H * W, Cout))
    for kx in range(K):
        # Only K column-shifted slabs are materialized (sublane shift).
        xs = src_ref[:, kx:kx + W, :]                      # (H+2p, W, Cin)
        for ky in range(K):
            tap = xs[ky:ky + H].reshape(H * W, Cin)        # free leading slice
            acc = acc + jnp.dot(tap, w[ky * K + kx],
                                preferred_element_type=jnp.float32)
    return jnp.maximum(acc, 0.0)                           # fused ReLU (f32)


# --------------------------------------------------------------------------
# Fused kernel: conv1(+BN+ReLU) -> conv2(+BN+ReLU), intermediate stays in VMEM
# --------------------------------------------------------------------------
def _unet_conv2_fused_kernel(x_ref, w1_ref, b1_ref, w2_ref, b2_ref, o_ref,
                             xpad_ref, ypad_ref, *, H, W, K):
    # x_ref : (1, H, W, Cin)          one batch element (full spatial tile)
    # w1_ref: (K*K, Cin, Cmid)        tap-major, BN-folded
    # w2_ref: (K*K, Cmid, Cout)       tap-major, BN-folded
    # b*_ref: (1, C)                  f32 BN-folded biases
    # o_ref : (1, H, W, Cout)
    # xpad_ref / ypad_ref: (H+2p, W+2p, C) VMEM halo scratches
    p = K // 2
    Cmid = w1_ref.shape[-1]
    Cout = o_ref.shape[-1]

    # ---- conv1: build halo in VMEM, conv + folded-BN bias + ReLU ----
    _zero_halo(xpad_ref, H, W, p)
    xpad_ref[p:p + H, p:p + W, :] = x_ref[0]
    y1 = _conv3x3_from_padded(xpad_ref, w1_ref[...],
                              b1_ref[...].astype(jnp.float32), H=H, W=W, K=K)

    # ---- conv2 consumes conv1's output straight from VMEM (no HBM trip) ----
    _zero_halo(ypad_ref, H, W, p)
    ypad_ref[p:p + H, p:p + W, :] = y1.reshape(H, W, Cmid).astype(ypad_ref.dtype)
    y2 = _conv3x3_from_padded(ypad_ref, w2_ref[...],
                              b2_ref[...].astype(jnp.float32), H=H, W=W, K=K)

    o_ref[0] = y2.reshape(H, W, Cout).astype(o_ref.dtype)


def _fused_vmem_estimate(H, W, Cin, Cmid, Cout, K, itemsize):
    p = K // 2
    KK = K * K
    blk = (H * W * Cin + KK * Cin * Cmid + KK * Cmid * Cout
           + H * W * Cout) * itemsize + (Cmid + Cout) * 4
    scratch = (H + 2 * p) * (W + 2 * p) * (Cin + Cmid) * itemsize
    acc = 2 * H * W * max(Cmid, Cout) * 4          # f32 accumulators / live vals
    return 2 * blk + scratch + acc + (4 << 20)     # double-buffer + headroom


def unet_conv2_fused(x_nhwc, w1_taps, b1, w2_taps, b2, K=3):
    """Both conv blocks in one Pallas call.  x_nhwc: (B,H,W,Cin) -> (B,H,W,Cout)."""
    B, H, W, Cin = x_nhwc.shape
    KK, _, Cmid = w1_taps.shape
    _, _, Cout = w2_taps.shape
    p = K // 2
    dt = x_nhwc.dtype

    w1_taps = w1_taps.astype(dt)
    w2_taps = w2_taps.astype(dt)
    b1_2d = b1.reshape(1, Cmid).astype(jnp.float32)
    b2_2d = b2.reshape(1, Cout).astype(jnp.float32)

    item = jnp.dtype(dt).itemsize
    need = _fused_vmem_estimate(H, W, Cin, Cmid, Cout, K, item)
    vmem_limit = int(min(max(need, 16 << 20), _VMEM_CAP))

    kernel = functools.partial(_unet_conv2_fused_kernel, H=H, W=W, K=K)
    return pl.pallas_call(
        kernel,
        out_shape=jax.ShapeDtypeStruct((B, H, W, Cout), dt),
        grid_spec=pltpu.PrefetchScalarGridSpec(
            num_scalar_prefetch=0,
            grid=(B,),
            in_specs=[
                pl.BlockSpec((1, H, W, Cin), lambda b: (b, 0, 0, 0)),
                pl.BlockSpec((KK, Cin, Cmid), lambda b: (0, 0, 0)),
                pl.BlockSpec((1, Cmid), lambda b: (0, 0)),
                pl.BlockSpec((KK, Cmid, Cout), lambda b: (0, 0, 0)),
                pl.BlockSpec((1, Cout), lambda b: (0, 0)),
            ],
            out_specs=pl.BlockSpec((1, H, W, Cout), lambda b: (b, 0, 0, 0)),
            scratch_shapes=[
                pltpu.VMEM((H + 2 * p, W + 2 * p, Cin), dt),
                pltpu.VMEM((H + 2 * p, W + 2 * p, Cmid), dt),
            ],
        ),
        compiler_params=pltpu.CompilerParams(
            dimension_semantics=("parallel",),
            vmem_limit_bytes=vmem_limit,
        ),
    )(x_nhwc, w1_taps, b1_2d, w2_taps, b2_2d)


# --------------------------------------------------------------------------
# Fallback kernel (large shapes): one fused conv(+BN)+bias+ReLU block
# --------------------------------------------------------------------------
def _conv3x3_bias_relu_kernel(x_ref, w_ref, b_ref, o_ref, xpad_ref, *, H, W, K):
    p = K // 2
    _zero_halo(xpad_ref, H, W, p)
    xpad_ref[p:p + H, p:p + W, :] = x_ref[0]
    y = _conv3x3_from_padded(xpad_ref, w_ref[...],
                             b_ref[...].astype(jnp.float32), H=H, W=W, K=K)
    Cb = o_ref.shape[-1]
    o_ref[0] = y.reshape(H, W, Cb).astype(o_ref.dtype)


def conv3x3_bias_relu(x_nhwc, w_taps, bias, K=3):
    """x_nhwc: (B,H,W,Cin); w_taps: (K*K,Cin,Cout); bias: (Cout,) -> (B,H,W,Cout)."""
    B, H, W, Cin = x_nhwc.shape
    KK, _, Cout = w_taps.shape
    p = K // 2
    dt = x_nhwc.dtype

    # Lane-dense output channel tile: 128 lanes when Cout is a multiple of 128,
    # otherwise the full extent (legal block shape).
    Cb = 128 if Cout % 128 == 0 else Cout
    n_co = Cout // Cb

    w_taps = w_taps.astype(dt)
    bias2d = bias.reshape(1, Cout).astype(jnp.float32)

    item = jnp.dtype(dt).itemsize
    blk_bytes = (H * W * Cin + KK * Cin * Cb + H * W * Cb) * item + Cb * 4
    scratch_bytes = (H + 2 * p) * (W + 2 * p) * Cin * item
    need = 2 * blk_bytes + scratch_bytes + H * W * Cb * 4 + (4 << 20)
    vmem_limit = int(min(max(need, 16 << 20), _VMEM_CAP))

    kernel = functools.partial(_conv3x3_bias_relu_kernel, H=H, W=W, K=K)
    return pl.pallas_call(
        kernel,
        out_shape=jax.ShapeDtypeStruct((B, H, W, Cout), dt),
        grid_spec=pltpu.PrefetchScalarGridSpec(
            num_scalar_prefetch=0,
            grid=(B, n_co),
            in_specs=[
                pl.BlockSpec((1, H, W, Cin), lambda b, co: (b, 0, 0, 0)),
                pl.BlockSpec((KK, Cin, Cb), lambda b, co: (0, 0, co)),
                pl.BlockSpec((1, Cb), lambda b, co: (0, co)),
            ],
            out_specs=pl.BlockSpec((1, H, W, Cb), lambda b, co: (b, 0, 0, co)),
            scratch_shapes=[pltpu.VMEM((H + 2 * p, W + 2 * p, Cin), dt)],
        ),
        compiler_params=pltpu.CompilerParams(
            dimension_semantics=("parallel", "parallel"),
            vmem_limit_bytes=vmem_limit,
        ),
    )(x_nhwc, w_taps, bias2d)


# --------------------------------------------------------------------------
# Wrapper: fold BN into the convs, pick fused vs two-kernel path
# --------------------------------------------------------------------------
def _fold_conv_bn(p, is_batchnorm):
    """Returns tap-major effective weights (K*K,Cin,Cout) and bias (Cout,)."""
    w, b = p['w'], p['b']                                       # (O,I,K,K), (O,)
    if is_batchnorm:
        # TODO(synk): training-mode BatchNorm (batch statistics / running-stat
        # updates) not reproduced; eval-mode running stats folded into the conv.
        scale = p['gamma'] * lax.rsqrt(p['var'] + _BN_EPS)      # (O,)
        w = w * scale[:, None, None, None]
        b = (b - p['mean']) * scale + p['beta']
    K = w.shape[-1]
    Cout, Cin = w.shape[0], w.shape[1]
    w_taps = jnp.transpose(w, (2, 3, 1, 0)).reshape(K * K, Cin, Cout)
    return w_taps, b


def unet_conv2_forward(params, x_nchw, *, is_batchnorm=True, fuse=None):
    # Single layout change at each module boundary; both conv blocks run NHWC.
    x = jnp.transpose(x_nchw, (0, 2, 3, 1))                     # NCHW -> NHWC
    w1, b1 = _fold_conv_bn(params['conv1'], is_batchnorm)
    w2, b2 = _fold_conv_bn(params['conv2'], is_batchnorm)

    B, H, W, Cin = x.shape
    Cmid, Cout = w1.shape[-1], w2.shape[-1]
    if fuse is None:
        need = _fused_vmem_estimate(H, W, Cin, Cmid, Cout, 3,
                                    jnp.dtype(x.dtype).itemsize)
        fuse = need <= _VMEM_CAP

    if fuse:
        y = unet_conv2_fused(x, w1, b1, w2, b2, K=3)
    else:
        y = conv3x3_bias_relu(x, w1, b1, K=3)
        y = conv3x3_bias_relu(y, w2, b2, K=3)
    return jnp.transpose(y, (0, 3, 1, 2))                       # NHWC -> NCHW


# --------------------------------------------------------------------------
# Pure-JAX reference (mirrors the PyTorch forward, eval-mode BN)
# --------------------------------------------------------------------------
def _reference_forward(params, x, is_batchnorm=True):
    def block(h, p):
        y = lax.conv_general_dilated(
            h, p['w'], window_strides=(1, 1), padding=[(1, 1), (1, 1)],
            dimension_numbers=('NCHW', 'OIHW', 'NCHW'))
        y = y + p['b'][None, :, None, None]
        if is_batchnorm:
            y = (y - p['mean'][None, :, None, None]) * lax.rsqrt(
                p['var'][None, :, None, None] + _BN_EPS)
            y = y * p['gamma'][None, :, None, None] + p['beta'][None, :, None, None]
        return jnp.maximum(y, 0.0)

    return block(block(x, params['conv1']), params['conv2'])


# --------------------------------------------------------------------------
def init_params(key, in_size, out_size, K=3):
    ks = jax.random.split(key, 12)

    def conv_bn(kw, kb, kg, kbeta, km, kv, cin, cout):
        bound = 1.0 / math.sqrt(cin * K * K)
        return {
            'w': jax.random.uniform(kw, (cout, cin, K, K), jnp.float32, -bound, bound),
            'b': jax.random.uniform(kb, (cout,), jnp.float32, -bound, bound),
            'gamma': 1.0 + 0.1 * jax.random.normal(kg, (cout,), jnp.float32),
            'beta': 0.1 * jax.random.normal(kbeta, (cout,), jnp.float32),
            'mean': 0.1 * jax.random.normal(km, (cout,), jnp.float32),
            'var': 1.0 + 0.1 * jnp.abs(jax.random.normal(kv, (cout,), jnp.float32)),
        }

    return {
        'conv1': conv_bn(*ks[0:6], in_size, out_size),
        'conv2': conv_bn(*ks[6:12], out_size, out_size),
    }


if __name__ == "__main__":
    B, Cin, Cout, H, W = 2, 4, 32, 16, 16

    key = jax.random.PRNGKey(0)
    kp, kx = jax.random.split(key)
    params = init_params(kp, Cin, Cout)
    x = jax.random.normal(kx, (B, Cin, H, W), dtype=jnp.float32)

    ref = _reference_forward(params, x, is_batchnorm=True)

    # Primary path: single fused conv1+conv2 kernel (intermediate stays in VMEM).
    fwd_fused = jax.jit(functools.partial(unet_conv2_forward, is_batchnorm=True))
    out_fused = jax.block_until_ready(fwd_fused(params, x))
    assert out_fused.shape == (B, Cout, H, W)
    assert jnp.allclose(out_fused, ref, atol=2e-2, rtol=2e-2), "fused path mismatch"

    # Large-shape fallback path (two single-conv kernels), exercised at demo size.
    fwd_split = jax.jit(functools.partial(unet_conv2_forward,
                                          is_batchnorm=True, fuse=False))
    out_split = jax.block_until_ready(fwd_split(params, x))
    assert jnp.allclose(out_split, ref, atol=2e-2, rtol=2e-2), "split path mismatch"

    print("KERNEL_OK")
</pallas_src>

<mosaic_0001>
module attributes {stable_mosaic.version = 11 : i64} {
  func.func @_unet_conv2_fused_kernel(%arg0: i32, %arg1: memref<1x16x16x4xf32, #tpu.memory_space<vmem>>, %arg2: memref<9x4x32xf32, #tpu.memory_space<vmem>>, %arg3: memref<1x32xf32, #tpu.memory_space<vmem>>, %arg4: memref<9x32x32xf32, #tpu.memory_space<vmem>>, %arg5: memref<1x32xf32, #tpu.memory_space<vmem>>, %arg6: memref<1x16x16x32xf32, #tpu.memory_space<vmem>>, %arg7: memref<18x18x4xf32, #tpu.memory_space<vmem>>, %arg8: memref<18x18x32xf32, #tpu.memory_space<vmem>>) attributes {dimension_semantics = [#tpu.dimension_semantics<parallel>], iteration_bounds = array<i64: 2>, scalar_prefetch = 0 : i64, scratch_operands = 2 : i64, tpu.core_type = #tpu.core_type<tc>, window_params = [{transform_indices = @transform_0, window_bounds = array<i64: 1, 16, 16, 4>}, {pipeline_mode = #tpu.pipeline_mode<synchronous>, transform_indices = @transform_1, window_bounds = array<i64: 9, 4, 32>}, {pipeline_mode = #tpu.pipeline_mode<synchronous>, transform_indices = @transform_2, window_bounds = array<i64: 1, 32>}, {pipeline_mode = #tpu.pipeline_mode<synchronous>, transform_indices = @transform_3, window_bounds = array<i64: 9, 32, 32>}, {pipeline_mode = #tpu.pipeline_mode<synchronous>, transform_indices = @transform_4, window_bounds = array<i64: 1, 32>}, {transform_indices = @transform_5, window_bounds = array<i64: 1, 16, 16, 32>}]} {
    %cst = arith.constant 0.000000e+00 : f32
    %0 = vector.broadcast %cst : f32 to vector<1x18x4xf32>
    %cst_0 = arith.constant 0.000000e+00 : f32
    %1 = vector.broadcast %cst_0 : f32 to vector<18x1x4xf32>
    %c0 = arith.constant 0 : index
    %c0_1 = arith.constant 0 : index
    %c0_2 = arith.constant 0 : index
    %2 = vector.load %arg7[%c0, %c0_1, %c0_2] : memref<18x18x4xf32, #tpu.memory_space<vmem>>, vector<1x18x4xf32>
    tpu.vector_store %arg7[%c0, %c0_1, %c0_2], %0 {strides = array<i32>} : memref<18x18x4xf32, #tpu.memory_space<vmem>>, vector<1x18x4xf32>,
    %c17 = arith.constant 17 : index
    %c0_3 = arith.constant 0 : index
    %c0_4 = arith.constant 0 : index
    %3 = vector.load %arg7[%c17, %c0_3, %c0_4] : memref<18x18x4xf32, #tpu.memory_space<vmem>>, vector<1x18x4xf32>
    tpu.vector_store %arg7[%c17, %c0_3, %c0_4], %0 {strides = array<i32>} : memref<18x18x4xf32, #tpu.memory_space<vmem>>, vector<1x18x4xf32>,
    %c0_5 = arith.constant 0 : index
    %c0_6 = arith.constant 0 : index
    %c0_7 = arith.constant 0 : index
    %4 = vector.load %arg7[%c0_5, %c0_6, %c0_7] : memref<18x18x4xf32, #tpu.memory_space<vmem>>, vector<18x1x4xf32>
    tpu.vector_store %arg7[%c0_5, %c0_6, %c0_7], %1 {strides = array<i32>} : memref<18x18x4xf32, #tpu.memory_space<vmem>>, vector<18x1x4xf32>,
    %c0_8 = arith.constant 0 : index
    %c17_9 = arith.constant 17 : index
    %c0_10 = arith.constant 0 : index
    %5 = vector.load %arg7[%c0_8, %c17_9, %c0_10] : memref<18x18x4xf32, #tpu.memory_space<vmem>>, vector<18x1x4xf32>
    tpu.vector_store %arg7[%c0_8, %c17_9, %c0_10], %1 {strides = array<i32>} : memref<18x18x4xf32, #tpu.memory_space<vmem>>, vector<18x1x4xf32>,
    %c0_11 = arith.constant 0 : index
    %c0_12 = arith.constant 0 : index
    %c0_13 = arith.constant 0 : index
    %c0_14 = arith.constant 0 : index
    %6 = vector.load %arg1[%c0_11, %c0_12, %c0_13, %c0_14] : memref<1x16x16x4xf32, #tpu.memory_space<vmem>>, vector<1x16x16x4xf32>
    %7 = vector.shape_cast %6 : vector<1x16x16x4xf32> to vector<16x16x4xf32>
    %c1 = arith.constant 1 : index
    %c1_15 = arith.constant 1 : index
    %c0_16 = arith.constant 0 : index
    %8 = vector.load %arg7[%c1, %c1_15, %c0_16] : memref<18x18x4xf32, #tpu.memory_space<vmem>>, vector<16x16x4xf32>
    tpu.vector_store %arg7[%c1, %c1_15, %c0_16], %7 {strides = array<i32>} : memref<18x18x4xf32, #tpu.memory_space<vmem>>, vector<16x16x4xf32>,
    %c0_17 = arith.constant 0 : index
    %c0_18 = arith.constant 0 : index
    %c0_19 = arith.constant 0 : index
    %9 = vector.load %arg2[%c0_17, %c0_18, %c0_19] : memref<9x4x32xf32, #tpu.memory_space<vmem>>, vector<9x4x32xf32>
    %c0_20 = arith.constant 0 : index
    %c0_21 = arith.constant 0 : index
    %10 = vector.load %arg3[%c0_20, %c0_21] : memref<1x32xf32, #tpu.memory_space<vmem>>, vector<1x32xf32>
    %11 = vector.shape_cast %10 : vector<1x32xf32> to vector<1x32xf32>
    %12 = vector.broadcast %11 : vector<1x32xf32> to vector<256x32xf32>
    %c0_22 = arith.constant 0 : index
    %c0_23 = arith.constant 0 : index
    %c0_24 = arith.constant 0 : index
    %13 = vector.load %arg7[%c0_22, %c0_23, %c0_24] : memref<18x18x4xf32, #tpu.memory_space<vmem>>, vector<18x16x4xf32>
    %14 = vector.extract_strided_slice %13 {offsets = [0, 0, 0], sizes = [16, 16, 4], strides = [1, 1, 1]} : vector<18x16x4xf32> to vector<16x16x4xf32>
    %15 = vector.shape_cast %14 : vector<16x16x4xf32> to vector<256x4xf32>
    %16 = vector.extract_strided_slice %9 {offsets = [0, 0, 0], sizes = [1, 4, 32], strides = [1, 1, 1]} : vector<9x4x32xf32> to vector<1x4x32xf32>
    %17 = vector.shape_cast %16 : vector<1x4x32xf32> to vector<4x32xf32>
    %cst_25 = arith.constant dense<0.000000e+00> : vector<256x32xf32>
    %18 = tpu.matmul %15, %17, %cst_25 {dimension_numbers = #tpu.dot_dimension_numbers<[1], [0], [0], [1], [0, 0, 1, 1], [], []>} : vector<256x4xf32>, vector<4x32xf32>, vector<256x32xf32> -> vector<256x32xf32>
    %19 = arith.addf %12, %18 : vector<256x32xf32>
    %20 = vector.extract_strided_slice %13 {offsets = [1, 0, 0], sizes = [16, 16, 4], strides = [1, 1, 1]} : vector<18x16x4xf32> to vector<16x16x4xf32>
    %21 = vector.shape_cast %20 : vector<16x16x4xf32> to vector<256x4xf32>
    %22 = vector.extract_strided_slice %9 {offsets = [3, 0, 0], sizes = [1, 4, 32], strides = [1, 1, 1]} : vector<9x4x32xf32> to vector<1x4x32xf32>
    %23 = vector.shape_cast %22 : vector<1x4x32xf32> to vector<4x32xf32>
    %cst_26 = arith.constant dense<0.000000e+00> : vector<256x32xf32>
    %24 = tpu.matmul %21, %23, %cst_26 {dimension_numbers = #tpu.dot_dimension_numbers<[1], [0], [0], [1], [0, 0, 1, 1], [], []>} : vector<256x4xf32>, vector<4x32xf32>, vector<256x32xf32> -> vector<256x32xf32>
    %25 = arith.addf %19, %24 : vector<256x32xf32>
    %26 = vector.extract_strided_slice %13 {offsets = [2, 0, 0], sizes = [16, 16, 4], strides = [1, 1, 1]} : vector<18x16x4xf32> to vector<16x16x4xf32>
    %27 = vector.shape_cast %26 : vector<16x16x4xf32> to vector<256x4xf32>
    %28 = vector.extract_strided_slice %9 {offsets = [6, 0, 0], sizes = [1, 4, 32], strides = [1, 1, 1]} : vector<9x4x32xf32> to vector<1x4x32xf32>
    %29 = vector.shape_cast %28 : vector<1x4x32xf32> to vector<4x32xf32>
    %cst_27 = arith.constant dense<0.000000e+00> : vector<256x32xf32>
    %30 = tpu.matmul %27, %29, %cst_27 {dimension_numbers = #tpu.dot_dimension_numbers<[1], [0], [0], [1], [0, 0, 1, 1], [], []>} : vector<256x4xf32>, vector<4x32xf32>, vector<256x32xf32> -> vector<256x32xf32>
    %31 = arith.addf %25, %30 : vector<256x32xf32>
    %c0_28 = arith.constant 0 : index
    %c1_29 = arith.constant 1 : index
    %c0_30 = arith.constant 0 : index
    %32 = vector.load %arg7[%c0_28, %c1_29, %c0_30] : memref<18x18x4xf32, #tpu.memory_space<vmem>>, vector<18x16x4xf32>
    %33 = vector.extract_strided_slice %32 {offsets = [0, 0, 0], sizes = [16, 16, 4], strides = [1, 1, 1]} : vector<18x16x4xf32> to vector<16x16x4xf32>
    %34 = vector.shape_cast %33 : vector<16x16x4xf32> to vector<256x4xf32>
    %35 = vector.extract_strided_slice %9 {offsets = [1, 0, 0], sizes = [1, 4, 32], strides = [1, 1, 1]} : vector<9x4x32xf32> to vector<1x4x32xf32>
    %36 = vector.shape_cast %35 : vector<1x4x32xf32> to vector<4x32xf32>
    %cst_31 = arith.constant dense<0.000000e+00> : vector<256x32xf32>
    %37 = tpu.matmul %34, %36, %cst_31 {dimension_numbers = #tpu.dot_dimension_numbers<[1], [0], [0], [1], [0, 0, 1, 1], [], []>} : vector<256x4xf32>, vector<4x32xf32>, vector<256x32xf32> -> vector<256x32xf32>
    %38 = arith.addf %31, %37 : vector<256x32xf32>
    %39 = vector.extract_strided_slice %32 {offsets = [1, 0, 0], sizes = [16, 16, 4], strides = [1, 1, 1]} : vector<18x16x4xf32> to vector<16x16x4xf32>
    %40 = vector.shape_cast %39 : vector<16x16x4xf32> to vector<256x4xf32>
    %41 = vector.extract_strided_slice %9 {offsets = [4, 0, 0], sizes = [1, 4, 32], strides = [1, 1, 1]} : vector<9x4x32xf32> to vector<1x4x32xf32>
    %42 = vector.shape_cast %41 : vector<1x4x32xf32> to vector<4x32xf32>
    %cst_32 = arith.constant dense<0.000000e+00> : vector<256x32xf32>
    %43 = tpu.matmul %40, %42, %cst_32 {dimension_numbers = #tpu.dot_dimension_numbers<[1], [0], [0], [1], [0, 0, 1, 1], [], []>} : vector<256x4xf32>, vector<4x32xf32>, vector<256x32xf32> -> vector<256x32xf32>
    %44 = arith.addf %38, %43 : vector<256x32xf32>
    %45 = vector.extract_strided_slice %32 {offsets = [2, 0, 0], sizes = [16, 16, 4], strides = [1, 1, 1]} : vector<18x16x4xf32> to vector<16x16x4xf32>
    %46 = vector.shape_cast %45 : vector<16x16x4xf32> to vector<256x4xf32>
    %47 = vector.extract_strided_slice %9 {offsets = [7, 0, 0], sizes = [1, 4, 32], strides = [1, 1, 1]} : vector<9x4x32xf32> to vector<1x4x32xf32>
    %48 = vector.shape_cast %47 : vector<1x4x32xf32> to vector<4x32xf32>
    %cst_33 = arith.constant dense<0.000000e+00> : vector<256x32xf32>
    %49 = tpu.matmul %46, %48, %cst_33 {dimension_numbers = #tpu.dot_dimension_numbers<[1], [0], [0], [1], [0, 0, 1, 1], [], []>} : vector<256x4xf32>, vector<4x32xf32>, vector<256x32xf32> -> vector<256x32xf32>
    %50 = arith.addf %44, %49 : vector<256x32xf32>
    %c0_34 = arith.constant 0 : index
    %c2 = arith.constant 2 : index
    %c0_35 = arith.constant 0 : index
    %51 = vector.load %arg7[%c0_34, %c2, %c0_35] : memref<18x18x4xf32, #tpu.memory_space<vmem>>, vector<18x16x4xf32>
    %52 = vector.extract_strided_slice %51 {offsets = [0, 0, 0], sizes = [16, 16, 4], strides = [1, 1, 1]} : vector<18x16x4xf32> to vector<16x16x4xf32>
    %53 = vector.shape_cast %52 : vector<16x16x4xf32> to vector<256x4xf32>
    %54 = vector.extract_strided_slice %9 {offsets = [2, 0, 0], sizes = [1, 4, 32], strides = [1, 1, 1]} : vector<9x4x32xf32> to vector<1x4x32xf32>
    %55 = vector.shape_cast %54 : vector<1x4x32xf32> to vector<4x32xf32>
    %cst_36 = arith.constant dense<0.000000e+00> : vector<256x32xf32>
    %56 = tpu.matmul %53, %55, %cst_36 {dimension_numbers = #tpu.dot_dimension_numbers<[1], [0], [0], [1], [0, 0, 1, 1], [], []>} : vector<256x4xf32>, vector<4x32xf32>, vector<256x32xf32> -> vector<256x32xf32>
    %57 = arith.addf %50, %56 : vector<256x32xf32>
    %58 = vector.extract_strided_slice %51 {offsets = [1, 0, 0], sizes = [16, 16, 4], strides = [1, 1, 1]} : vector<18x16x4xf32> to vector<16x16x4xf32>
    %59 = vector.shape_cast %58 : vector<16x16x4xf32> to vector<256x4xf32>
    %60 = vector.extract_strided_slice %9 {offsets = [5, 0, 0], sizes = [1, 4, 32], strides = [1, 1, 1]} : vector<9x4x32xf32> to vector<1x4x32xf32>
    %61 = vector.shape_cast %60 : vector<1x4x32xf32> to vector<4x32xf32>
    %cst_37 = arith.constant dense<0.000000e+00> : vector<256x32xf32>
    %62 = tpu.matmul %59, %61, %cst_37 {dimension_numbers = #tpu.dot_dimension_numbers<[1], [0], [0], [1], [0, 0, 1, 1], [], []>} : vector<256x4xf32>, vector<4x32xf32>, vector<256x32xf32> -> vector<256x32xf32>
    %63 = arith.addf %57, %62 : vector<256x32xf32>
    %64 = vector.extract_strided_slice %51 {offsets = [2, 0, 0], sizes = [16, 16, 4], strides = [1, 1, 1]} : vector<18x16x4xf32> to vector<16x16x4xf32>
    %65 = vector.shape_cast %64 : vector<16x16x4xf32> to vector<256x4xf32>
    %66 = vector.extract_strided_slice %9 {offsets = [8, 0, 0], sizes = [1, 4, 32], strides = [1, 1, 1]} : vector<9x4x32xf32> to vector<1x4x32xf32>
    %67 = vector.shape_cast %66 : vector<1x4x32xf32> to vector<4x32xf32>
    %cst_38 = arith.constant dense<0.000000e+00> : vector<256x32xf32>
    %68 = tpu.matmul %65, %67, %cst_38 {dimension_numbers = #tpu.dot_dimension_numbers<[1], [0], [0], [1], [0, 0, 1, 1], [], []>} : vector<256x4xf32>, vector<4x32xf32>, vector<256x32xf32> -> vector<256x32xf32>
    %69 = arith.addf %63, %68 : vector<256x32xf32>
    %cst_39 = arith.constant 0.000000e+00 : f32
    %70 = vector.broadcast %cst_39 : f32 to vector<256x32xf32>
    %71 = arith.maximumf %69, %70 : vector<256x32xf32>
    %cst_40 = arith.constant 0.000000e+00 : f32
    %72 = vector.broadcast %cst_40 : f32 to vector<1x18x32xf32>
    %cst_41 = arith.constant 0.000000e+00 : f32
    %73 = vector.broadcast %cst_41 : f32 to vector<18x1x32xf32>
    %c0_42 = arith.constant 0 : index
    %c0_43 = arith.constant 0 : index
    %c0_44 = arith.constant 0 : index
    %74 = vector.load %arg8[%c0_42, %c0_43, %c0_44] : memref<18x18x32xf32, #tpu.memory_space<vmem>>, vector<1x18x32xf32>
    tpu.vector_store %arg8[%c0_42, %c0_43, %c0_44], %72 {strides = array<i32>} : memref<18x18x32xf32, #tpu.memory_space<vmem>>, vector<1x18x32xf32>,
    %c17_45 = arith.constant 17 : index
    %c0_46 = arith.constant 0 : index
    %c0_47 = arith.constant 0 : index
    %75 = vector.load %arg8[%c17_45, %c0_46, %c0_47] : memref<18x18x32xf32, #tpu.memory_space<vmem>>, vector<1x18x32xf32>
    tpu.vector_store %arg8[%c17_45, %c0_46, %c0_47], %72 {strides = array<i32>} : memref<18x18x32xf32, #tpu.memory_space<vmem>>, vector<1x18x32xf32>,
    %c0_48 = arith.constant 0 : index
    %c0_49 = arith.constant 0 : index
    %c0_50 = arith.constant 0 : index
    %76 = vector.load %arg8[%c0_48, %c0_49, %c0_50] : memref<18x18x32xf32, #tpu.memory_space<vmem>>, vector<18x1x32xf32>
    tpu.vector_store %arg8[%c0_48, %c0_49, %c0_50], %73 {strides = array<i32>} : memref<18x18x32xf32, #tpu.memory_space<vmem>>, vector<18x1x32xf32>,
    %c0_51 = arith.constant 0 : index
    %c17_52 = arith.constant 17 : index
    %c0_53 = arith.constant 0 : index
    %77 = vector.load %arg8[%c0_51, %c17_52, %c0_53] : memref<18x18x32xf32, #tpu.memory_space<vmem>>, vector<18x1x32xf32>
    tpu.vector_store %arg8[%c0_51, %c17_52, %c0_53], %73 {strides = array<i32>} : memref<18x18x32xf32, #tpu.memory_space<vmem>>, vector<18x1x32xf32>,
    %78 = vector.shape_cast %71 : vector<256x32xf32> to vector<16x16x32xf32>
    %c1_54 = arith.constant 1 : index
    %c1_55 = arith.constant 1 : index
    %c0_56 = arith.constant 0 : index
    %79 = vector.load %arg8[%c1_54, %c1_55, %c0_56] : memref<18x18x32xf32, #tpu.memory_space<vmem>>, vector<16x16x32xf32>
    tpu.vector_store %arg8[%c1_54, %c1_55, %c0_56], %78 {strides = array<i32>} : memref<18x18x32xf32, #tpu.memory_space<vmem>>, vector<16x16x32xf32>,
    %c0_57 = arith.constant 0 : index
    %c0_58 = arith.constant 0 : index
    %c0_59 = arith.constant 0 : index
    %80 = vector.load %arg4[%c0_57, %c0_58, %c0_59] : memref<9x32x32xf32, #tpu.memory_space<vmem>>, vector<9x32x32xf32>
    %c0_60 = arith.constant 0 : index
    %c0_61 = arith.constant 0 : index
    %81 = vector.load %arg5[%c0_60, %c0_61] : memref<1x32xf32, #tpu.memory_space<vmem>>, vector<1x32xf32>
    %82 = vector.shape_cast %81 : vector<1x32xf32> to vector<1x32xf32>
    %83 = vector.broadcast %82 : vector<1x32xf32> to vector<256x32xf32>
    %c0_62 = arith.constant 0 : index
    %c0_63 = arith.constant 0 : index
    %c0_64 = arith.constant 0 : index
    %84 = vector.load %arg8[%c0_62, %c0_63, %c0_64] : memref<18x18x32xf32, #tpu.memory_space<vmem>>, vector<18x16x32xf32>
    %85 = vector.extract_strided_slice %84 {offsets = [0, 0, 0], sizes = [16, 16, 32], strides = [1, 1, 1]} : vector<18x16x32xf32> to vector<16x16x32xf32>
    %86 = vector.shape_cast %85 : vector<16x16x32xf32> to vector<256x32xf32>
    %87 = vector.extract_strided_slice %80 {offsets = [0, 0, 0], sizes = [1, 32, 32], strides = [1, 1, 1]} : vector<9x32x32xf32> to vector<1x32x32xf32>
    %88 = vector.shape_cast %87 : vector<1x32x32xf32> to vector<32x32xf32>
    %cst_65 = arith.constant dense<0.000000e+00> : vector<256x32xf32>
    %89 = tpu.matmul %86, %88, %cst_65 {dimension_numbers = #tpu.dot_dimension_numbers<[1], [0], [0], [1], [0, 0, 1, 1], [], []>} : vector<256x32xf32>, vector<32x32xf32>, vector<256x32xf32> -> vector<256x32xf32>
    %90 = arith.addf %83, %89 : vector<256x32xf32>
    %91 = vector.extract_strided_slice %84 {offsets = [1, 0, 0], sizes = [16, 16, 32], strides = [1, 1, 1]} : vector<18x16x32xf32> to vector<16x16x32xf32>
    %92 = vector.shape_cast %91 : vector<16x16x32xf32> to vector<256x32xf32>
    %93 = vector.extract_strided_slice %80 {offsets = [3, 0, 0], sizes = [1, 32, 32], strides = [1, 1, 1]} : vector<9x32x32xf32> to vector<1x32x32xf32>
    %94 = vector.shape_cast %93 : vector<1x32x32xf32> to vector<32x32xf32>
    %cst_66 = arith.constant dense<0.000000e+00> : vector<256x32xf32>
    %95 = tpu.matmul %92, %94, %cst_66 {dimension_numbers = #tpu.dot_dimension_numbers<[1], [0], [0], [1], [0, 0, 1, 1], [], []>} : vector<256x32xf32>, vector<32x32xf32>, vector<256x32xf32> -> vector<256x32xf32>
    %96 = arith.addf %90, %95 : vector<256x32xf32>
    %97 = vector.extract_strided_slice %84 {offsets = [2, 0, 0], sizes = [16, 16, 32], strides = [1, 1, 1]} : vector<18x16x32xf32> to vector<16x16x32xf32>
    %98 = vector.shape_cast %97 : vector<16x16x32xf32> to vector<256x32xf32>
    %99 = vector.extract_strided_slice %80 {offsets = [6, 0, 0], sizes = [1, 32, 32], strides = [1, 1, 1]} : vector<9x32x32xf32> to vector<1x32x32xf32>
    %100 = vector.shape_cast %99 : vector<1x32x32xf32> to vector<32x32xf32>
    %cst_67 = arith.constant dense<0.000000e+00> : vector<256x32xf32>
    %101 = tpu.matmul %98, %100, %cst_67 {dimension_numbers = #tpu.dot_dimension_numbers<[1], [0], [0], [1], [0, 0, 1, 1], [], []>} : vector<256x32xf32>, vector<32x32xf32>, vector<256x32xf32> -> vector<256x32xf32>
    %102 = arith.addf %96, %101 : vector<256x32xf32>
    %c0_68 = arith.constant 0 : index
    %c1_69 = arith.constant 1 : index
    %c0_70 = arith.constant 0 : index
    %103 = vector.load %arg8[%c0_68, %c1_69, %c0_70] : memref<18x18x32xf32, #tpu.memory_space<vmem>>, vector<18x16x32xf32>
    %104 = vector.extract_strided_slice %103 {offsets = [0, 0, 0], sizes = [16, 16, 32], strides = [1, 1, 1]} : vector<18x16x32xf32> to vector<16x16x32xf32>
    %105 = vector.shape_cast %104 : vector<16x16x32xf32> to vector<256x32xf32>
    %106 = vector.extract_strided_slice %80 {offsets = [1, 0, 0], sizes = [1, 32, 32], strides = [1, 1, 1]} : vector<9x32x32xf32> to vector<1x32x32xf32>
    %107 = vector.shape_cast %106 : vector<1x32x32xf32> to vector<32x32xf32>
    %cst_71 = arith.constant dense<0.000000e+00> : vector<256x32xf32>
    %108 = tpu.matmul %105, %107, %cst_71 {dimension_numbers = #tpu.dot_dimension_numbers<[1], [0], [0], [1], [0, 0, 1, 1], [], []>} : vector<256x32xf32>, vector<32x32xf32>, vector<256x32xf32> -> vector<256x32xf32>
    %109 = arith.addf %102, %108 : vector<256x32xf32>
    %110 = vector.extract_strided_slice %103 {offsets = [1, 0, 0], sizes = [16, 16, 32], strides = [1, 1, 1]} : vector<18x16x32xf32> to vector<16x16x32xf32>
    %111 = vector.shape_cast %110 : vector<16x16x32xf32> to vector<256x32xf32>
    %112 = vector.extract_strided_slice %80 {offsets = [4, 0, 0], sizes = [1, 32, 32], strides = [1, 1, 1]} : vector<9x32x32xf32> to vector<1x32x32xf32>
    %113 = vector.shape_cast %112 : vector<1x32x32xf32> to vector<32x32xf32>
    %cst_72 = arith.constant dense<0.000000e+00> : vector<256x32xf32>
    %114 = tpu.matmul %111, %113, %cst_72 {dimension_numbers = #tpu.dot_dimension_numbers<[1], [0], [0], [1], [0, 0, 1, 1], [], []>} : vector<256x32xf32>, vector<32x32xf32>, vector<256x32xf32> -> vector<256x32xf32>
    %115 = arith.addf %109, %114 : vector<256x32xf32>
    %116 = vector.extract_strided_slice %103 {offsets = [2, 0, 0], sizes = [16, 16, 32], strides = [1, 1, 1]} : vector<18x16x32xf32> to vector<16x16x32xf32>
    %117 = vector.shape_cast %116 : vector<16x16x32xf32> to vector<256x32xf32>
    %118 = vector.extract_strided_slice %80 {offsets = [7, 0, 0], sizes = [1, 32, 32], strides = [1, 1, 1]} : vector<9x32x32xf32> to vector<1x32x32xf32>
    %119 = vector.shape_cast %118 : vector<1x32x32xf32> to vector<32x32xf32>
    %cst_73 = arith.constant dense<0.000000e+00> : vector<256x32xf32>
    %120 = tpu.matmul %117, %119, %cst_73 {dimension_numbers = #tpu.dot_dimension_numbers<[1], [0], [0], [1], [0, 0, 1, 1], [], []>} : vector<256x32xf32>, vector<32x32xf32>, vector<256x32xf32> -> vector<256x32xf32>
    %121 = arith.addf %115, %120 : vector<256x32xf32>
    %c0_74 = arith.constant 0 : index
    %c2_75 = arith.constant 2 : index
    %c0_76 = arith.constant 0 : index
    %122 = vector.load %arg8[%c0_74, %c2_75, %c0_76] : memref<18x18x32xf32, #tpu.memory_space<vmem>>, vector<18x16x32xf32>
    %123 = vector.extract_strided_slice %122 {offsets = [0, 0, 0], sizes = [16, 16, 32], strides = [1, 1, 1]} : vector<18x16x32xf32> to vector<16x16x32xf32>
    %124 = vector.shape_cast %123 : vector<16x16x32xf32> to vector<256x32xf32>
    %125 = vector.extract_strided_slice %80 {offsets = [2, 0, 0], sizes = [1, 32, 32], strides = [1, 1, 1]} : vector<9x32x32xf32> to vector<1x32x32xf32>
    %126 = vector.shape_cast %125 : vector<1x32x32xf32> to vector<32x32xf32>
    %cst_77 = arith.constant dense<0.000000e+00> : vector<256x32xf32>
    %127 = tpu.matmul %124, %126, %cst_77 {dimension_numbers = #tpu.dot_dimension_numbers<[1], [0], [0], [1], [0, 0, 1, 1], [], []>} : vector<256x32xf32>, vector<32x32xf32>, vector<256x32xf32> -> vector<256x32xf32>
    %128 = arith.addf %121, %127 : vector<256x32xf32>
    %129 = vector.extract_strided_slice %122 {offsets = [1, 0, 0], sizes = [16, 16, 32], strides = [1, 1, 1]} : vector<18x16x32xf32> to vector<16x16x32xf32>
    %130 = vector.shape_cast %129 : vector<16x16x32xf32> to vector<256x32xf32>
    %131 = vector.extract_strided_slice %80 {offsets = [5, 0, 0], sizes = [1, 32, 32], strides = [1, 1, 1]} : vector<9x32x32xf32> to vector<1x32x32xf32>
    %132 = vector.shape_cast %131 : vector<1x32x32xf32> to vector<32x32xf32>
    %cst_78 = arith.constant dense<0.000000e+00> : vector<256x32xf32>
    %133 = tpu.matmul %130, %132, %cst_78 {dimension_numbers = #tpu.dot_dimension_numbers<[1], [0], [0], [1], [0, 0, 1, 1], [], []>} : vector<256x32xf32>, vector<32x32xf32>, vector<256x32xf32> -> vector<256x32xf32>
    %134 = arith.addf %128, %133 : vector<256x32xf32>
    %135 = vector.extract_strided_slice %122 {offsets = [2, 0, 0], sizes = [16, 16, 32], strides = [1, 1, 1]} : vector<18x16x32xf32> to vector<16x16x32xf32>
    %136 = vector.shape_cast %135 : vector<16x16x32xf32> to vector<256x32xf32>
    %137 = vector.extract_strided_slice %80 {offsets = [8, 0, 0], sizes = [1, 32, 32], strides = [1, 1, 1]} : vector<9x32x32xf32> to vector<1x32x32xf32>
    %138 = vector.shape_cast %137 : vector<1x32x32xf32> to vector<32x32xf32>
    %cst_79 = arith.constant dense<0.000000e+00> : vector<256x32xf32>
    %139 = tpu.matmul %136, %138, %cst_79 {dimension_numbers = #tpu.dot_dimension_numbers<[1], [0], [0], [1], [0, 0, 1, 1], [], []>} : vector<256x32xf32>, vector<32x32xf32>, vector<256x32xf32> -> vector<256x32xf32>
    %140 = arith.addf %134, %139 : vector<256x32xf32>
    %cst_80 = arith.constant 0.000000e+00 : f32
    %141 = vector.broadcast %cst_80 : f32 to vector<256x32xf32>
    %142 = arith.maximumf %140, %141 : vector<256x32xf32>
    %143 = vector.shape_cast %142 : vector<256x32xf32> to vector<16x16x32xf32>
    %c0_81 = arith.constant 0 : index
    %c0_82 = arith.constant 0 : index
    %c0_83 = arith.constant 0 : index
    %c0_84 = arith.constant 0 : index
    %144 = vector.load %arg6[%c0_81, %c0_82, %c0_83, %c0_84] : memref<1x16x16x32xf32, #tpu.memory_space<vmem>>, vector<1x16x16x32xf32>
    %145 = vector.shape_cast %144 : vector<1x16x16x32xf32> to vector<16x16x32xf32>
    %146 = vector.shape_cast %143 : vector<16x16x32xf32> to vector<1x16x16x32xf32>
    tpu.vector_store %arg6[%c0_81, %c0_82, %c0_83, %c0_84], %146 {strides = array<i32>} : memref<1x16x16x32xf32, #tpu.memory_space<vmem>>, vector<1x16x16x32xf32>,
    return
  }
  func.func @transform_0(%arg0: i32) -> (i32, i32, i32, i32) {
    %c0_i32 = arith.constant 0 : i32
    %c0_i32_0 = arith.constant 0 : i32
    %c0_i32_1 = arith.constant 0 : i32
    %c0_i32_2 = arith.constant 0 : i32
    return %arg0, %c0_i32, %c0_i32_0, %c0_i32_1 : i32, i32, i32, i32
  }
  func.func @transform_1(%arg0: i32) -> (i32, i32, i32) {
    %c0_i32 = arith.constant 0 : i32
    %c0_i32_0 = arith.constant 0 : i32
    %c0_i32_1 = arith.constant 0 : i32
    %c0_i32_2 = arith.constant 0 : i32
    return %c0_i32, %c0_i32_0, %c0_i32_1 : i32, i32, i32
  }
  func.func @transform_2(%arg0: i32) -> (i32, i32) {
    %c0_i32 = arith.constant 0 : i32
    %c0_i32_0 = arith.constant 0 : i32
    %c0_i32_1 = arith.constant 0 : i32
    return %c0_i32, %c0_i32_0 : i32, i32
  }
  func.func @transform_3(%arg0: i32) -> (i32, i32, i32) {
    %c0_i32 = arith.constant 0 : i32
    %c0_i32_0 = arith.constant 0 : i32
    %c0_i32_1 = arith.constant 0 : i32
    %c0_i32_2 = arith.constant 0 : i32
    return %c0_i32, %c0_i32_0, %c0_i32_1 : i32, i32, i32
  }
  func.func @transform_4(%arg0: i32) -> (i32, i32) {
    %c0_i32 = arith.constant 0 : i32
    %c0_i32_0 = arith.constant 0 : i32
    %c0_i32_1 = arith.constant 0 : i32
    return %c0_i32, %c0_i32_0 : i32, i32
  }
  func.func @transform_5(%arg0: i32) -> (i32, i32, i32, i32) {
    %c0_i32 = arith.constant 0 : i32
    %c0_i32_0 = arith.constant 0 : i32
    %c0_i32_1 = arith.constant 0 : i32
    %c0_i32_2 = arith.constant 0 : i32
    return %arg0, %c0_i32, %c0_i32_0, %c0_i32_1 : i32, i32, i32, i32
  }
}

</mosaic_0001>

<llo_original>
// kernel: unet_conv2_forward.1
$region0: #{unet_conv2_forward.1}
  #allocation0 [shape = 'u32[]', space=smem, size = 0x4, offset = 0x4, fixed_abs, tag = 'smem constant byte address 0x4 - core index']
  #allocation1 [shape = 'u32[72,128]{1,0:T(1,128)}', space=vmem, size = 0x9000, scoped, tag = 'internal scratch']
  #allocation2 [shape = 'f32[18,18,4]{2,1,0:T(8,128)}', space=vmem, size = 0x36000, scoped, tag = 'scratch operand']
  #allocation3 [shape = 'f32[18,18,32]{2,1,0:T(8,128)}', space=vmem, size = 0x36000, scoped, tag = 'scratch operand']
  %s0 = inlined_call_operand.vmem [shape: f32[2,16,16,4], index: 0, kind: input, shape index: {}]
  %s1 = inlined_call_operand.vmem [shape: f32[9,4,32], index: 1, kind: input, shape index: {}]
  %s2 = inlined_call_operand.vmem [shape: f32[1,32], index: 2, kind: input, shape index: {}]
  %s3 = inlined_call_operand.vmem [shape: f32[9,32,32], index: 3, kind: input, shape index: {}]
  %s4 = inlined_call_operand.vmem [shape: f32[1,32], index: 4, kind: input, shape index: {}]
  %s5 = inlined_call_operand.hbm [shape: f32[2,16,16,32], index: 5, kind: output, shape index: {}]
  %s6 = sld [smem:[#allocation0]]
  $region53: #{unet_conv2_forward.1} parent=0
    _
  %s8 = ssub.s32 1, %s6
  %s9 = scalar_select 0, %s8, %s6
  $region1: #{unet_conv2_forward.1} parent=0
    #allocation4 [shape = 'u8[262144]{0}', space=vmem, size = 0x40000, scoped, tag = 'output window, operand 0']
    #allocation5 [shape = 's32[2]{0}', space=sflag, size = 0x8, scoped, tag = 'scoped memory for unet_conv2_forward.1']
    %10 = vsyncpa [#allocation5], 0
    %s11 = scalar_lea.sflag [#allocation5], 1
    %12 = vsyncpa %s11, 0
    loop: start=0, step=1, limit=4
    $region2: #{unet_conv2_forward.1} parent=1 // loop_pre_header
      _
    $region3: #{unet_conv2_forward.1} parent=1 // loop_header
      %s14 = sphi 0, %s18
      %p15 = scmp.ge.s32.totalorder %s14, 4
      %s24 = sphi 0, %s26
      %s27 = sphi 0, %s24
      %s28 = sphi 0, %s27
      %s44 = sphi 0, %s28
      %s48 = sphi 0, %s48
      %s50 = sphi 0, %s48
      %s51 = sphi 0, %s50
      %s65 = sphi 0, %s51
      %s69 = sphi 0, %s69
      %s71 = sphi 0, %s69
      %s72 = sphi 0, %s71
      %s86 = sphi 0, %s72
      %s90 = sphi 0, %s90
      %s92 = sphi 0, %s90
      %s93 = sphi 0, %s92
      %s107 = sphi 0, %s93
      %s111 = sphi 0, %s111
      %s113 = sphi 0, %s111
      %s114 = sphi 0, %s113
      %s128 = sphi 0, %s114
      %s134 = sphi 0, %s136
      %s137 = sphi 0, %s134
      %s138 = sphi 0, %s137
      %s154 = sphi 0, %s138
    $region4: #{unet_conv2_forward.1} parent=1 // loop_header_branch
      %17 = sbr.rel (%p15) target = $region8
    $region5: #{unet_conv2_forward.1} parent=1 // loop_body
      %s19 = ssub.s32 %s14, 1
      %s20 = ssub.s32 %s14, 2
      %s21 = sadd.s32 %s14, 1
      %s22 = ssub.s32 %s14, %s21
      %p23 = scmp.eq.s32.totalorder %s22, 0
      %s25 = sadd.s32 %s24, 1
      %s26 = scalar_select %p23, %s24, %s25
      %p29 = pneg %p23
      %p30 = scmp.eq.s32.totalorder %s14, 1
      %p31 = por %p29, %p30
      %p32 = scmp.ne.s32.totalorder %s24, %s27
      %p33 = scmp.eq.s32.totalorder %s14, 0
      %p34 = por %p32, %p33
      %p35 = scmp.ne.s32.totalorder %s24, %s27
      %p36 = scmp.eq.s32.totalorder %s19, 1
      %p37 = por %p35, %p36
      %p38 = scmp.ne.s32.totalorder %s27, %s28
      %p39 = scmp.eq.s32.totalorder %s19, 0
      %p40 = por %p38, %p39
      %p41 = scmp.ne.s32.totalorder %s27, %s28
      %p42 = scmp.eq.s32.totalorder %s20, 1
      %p43 = por %p41, %p42
      %p45 = scmp.ne.s32.totalorder %s28, %s44
      %p46 = scmp.eq.s32.totalorder %s20, 0
      %p47 = por %p45, %p46
      %s49 = sadd.s32 %s48, 1
      %p52 = scmp.eq.s32.totalorder %s14, 1
      %p53 = scmp.ne.s32.totalorder %s48, %s50
      %p54 = scmp.eq.s32.totalorder %s14, 0
      %p55 = por %p53, %p54
      %p56 = scmp.ne.s32.totalorder %s48, %s50
      %p57 = scmp.eq.s32.totalorder %s19, 1
      %p58 = por %p56, %p57
      %p59 = scmp.ne.s32.totalorder %s50, %s51
      %p60 = scmp.eq.s32.totalorder %s19, 0
      %p61 = por %p59, %p60
      %p62 = scmp.ne.s32.totalorder %s50, %s51
      %p63 = scmp.eq.s32.totalorder %s20, 1
      %p64 = por %p62, %p63
      %p66 = scmp.ne.s32.totalorder %s51, %s65
      %p67 = scmp.eq.s32.totalorder %s20, 0
      %p68 = por %p66, %p67
      %s70 = sadd.s32 %s69, 1
      %p73 = scmp.eq.s32.totalorder %s14, 1
      %p74 = scmp.ne.s32.totalorder %s69, %s71
      %p75 = scmp.eq.s32.totalorder %s14, 0
      %p76 = por %p74, %p75
      %p77 = scmp.ne.s32.totalorder %s69, %s71
      %p78 = scmp.eq.s32.totalorder %s19, 1
      %p79 = por %p77, %p78
      %p80 = scmp.ne.s32.totalorder %s71, %s72
      %p81 = scmp.eq.s32.totalorder %s19, 0
      %p82 = por %p80, %p81
      %p83 = scmp.ne.s32.totalorder %s71, %s72
      %p84 = scmp.eq.s32.totalorder %s20, 1
      %p85 = por %p83, %p84
      %p87 = scmp.ne.s32.totalorder %s72, %s86
      %p88 = scmp.eq.s32.totalorder %s20, 0
      %p89 = por %p87, %p88
      %s91 = sadd.s32 %s90, 1
      %p94 = scmp.eq.s32.totalorder %s14, 1
      %p95 = scmp.ne.s32.totalorder %s90, %s92
      %p96 = scmp.eq.s32.totalorder %s14, 0
      %p97 = por %p95, %p96
      %p98 = scmp.ne.s32.totalorder %s90, %s92
      %p99 = scmp.eq.s32.totalorder %s19, 1
      %p100 = por %p98, %p99
      %p101 = scmp.ne.s32.totalorder %s92, %s93
      %p102 = scmp.eq.s32.totalorder %s19, 0
      %p103 = por %p101, %p102
      %p104 = scmp.ne.s32.totalorder %s92, %s93
      %p105 = scmp.eq.s32.totalorder %s20, 1
      %p106 = por %p104, %p105
      %p108 = scmp.ne.s32.totalorder %s93, %s107
      %p109 = scmp.eq.s32.totalorder %s20, 0
      %p110 = por %p108, %p109
      %s112 = sadd.s32 %s111, 1
      %p115 = scmp.eq.s32.totalorder %s14, 1
      %p116 = scmp.ne.s32.totalorder %s111, %s113
      %p117 = scmp.eq.s32.totalorder %s14, 0
      %p118 = por %p116, %p117
      %p119 = scmp.ne.s32.totalorder %s111, %s113
      %p120 = scmp.eq.s32.totalorder %s19, 1
      %p121 = por %p119, %p120
      %p122 = scmp.ne.s32.totalorder %s113, %s114
      %p123 = scmp.eq.s32.totalorder %s19, 0
      %p124 = por %p122, %p123
      %p125 = scmp.ne.s32.totalorder %s113, %s114
      %p126 = scmp.eq.s32.totalorder %s20, 1
      %p127 = por %p125, %p126
      %p129 = scmp.ne.s32.totalorder %s114, %s128
      %p130 = scmp.eq.s32.totalorder %s20, 0
      %p131 = por %p129, %p130
      %s132 = ssub.s32 %s14, %s21
      %p133 = scmp.eq.s32.totalorder %s132, 0
      %s135 = sadd.s32 %s134, 1
      %s136 = scalar_select %p133, %s134, %s135
      %p139 = pneg %p133
      %p140 = scmp.eq.s32.totalorder %s14, 1
      %p141 = por %p139, %p140
      %p142 = scmp.ne.s32.totalorder %s134, %s137
      %p143 = scmp.eq.s32.totalorder %s14, 0
      %p144 = por %p142, %p143
      %p145 = scmp.ne.s32.totalorder %s134, %s137
      %p146 = scmp.eq.s32.totalorder %s19, 1
      %p147 = por %p145, %p146
      %p148 = scmp.ne.s32.totalorder %s137, %s138
      %p149 = scmp.eq.s32.totalorder %s19, 0
      %p150 = por %p148, %p149
      %p151 = scmp.ne.s32.totalorder %s137, %s138
      %p152 = scmp.eq.s32.totalorder %s20, 1
      %p153 = por %p151, %p152
      %p155 = scmp.ne.s32.totalorder %s138, %s154
      %p156 = scmp.eq.s32.totalorder %s20, 0
      %p157 = por %p155, %p156
      %p158 = scmp.le.s32.totalorder 1, %s14
      %p159 = scmp.lt.s32.totalorder %s14, 3
      %p160 = pnand %p158, %p159
      %p161 = pneg %p160
      // Predicated region
      $region9: #{unet_conv2_forward.1} parent=5 // pred_check
        _
      $region10: #{unet_conv2_forward.1} parent=5 // pred_check_branch
        %163 = sbr.rel (%p160) target = $region12
      $region11: #{unet_conv2_forward.1} parent=5 // pred_region
        %s164 = ssub.s32 %s14, 1
        // Predicated region
        $region13: #{unet_conv2_forward.1} parent=11 // pred_check
          %p165 = pneg %p61
        $region14: #{unet_conv2_forward.1} parent=11 // pred_check_branch
          %167 = sbr.rel (%p165) target = $region16
        $region15: #{unet_conv2_forward.1} parent=11 // pred_region
          _
        $region16: #{unet_conv2_forward.1} parent=11 // pred_fallthru
          _
        // Predicated region
        $region17: #{unet_conv2_forward.1} parent=11 // pred_check
          %p168 = pneg %p82
        $region18: #{unet_conv2_forward.1} parent=11 // pred_check_branch
          %170 = sbr.rel (%p168) target = $region20
        $region19: #{unet_conv2_forward.1} parent=11 // pred_region
          _
        $region20: #{unet_conv2_forward.1} parent=11 // pred_fallthru
          _
        // Predicated region
        $region21: #{unet_conv2_forward.1} parent=11 // pred_check
          %p171 = pneg %p103
        $region22: #{unet_conv2_forward.1} parent=11 // pred_check_branch
          %173 = sbr.rel (%p171) target = $region24
        $region23: #{unet_conv2_forward.1} parent=11 // pred_region
          _
        $region24: #{unet_conv2_forward.1} parent=11 // pred_fallthru
          _
        // Predicated region
        $region25: #{unet_conv2_forward.1} parent=11 // pred_check
          %p174 = pneg %p124
        $region26: #{unet_conv2_forward.1} parent=11 // pred_check_branch
          %176 = sbr.rel (%p174) target = $region28
        $region27: #{unet_conv2_forward.1} parent=11 // pred_region
          _
        $region28: #{unet_conv2_forward.1} parent=11 // pred_fallthru
          _
      $region12: #{unet_conv2_forward.1} parent=5 // pred_fallthru
        _
      %p177 = scmp.lt.s32.totalorder %s14, 2
      // Predicated region
      $region29: #{unet_conv2_forward.1} parent=5 // pred_check
        %p178 = pneg %p177
      $region30: #{unet_conv2_forward.1} parent=5 // pred_check_branch
        %180 = sbr.rel (%p178) target = $region32
      $region31: #{unet_conv2_forward.1} parent=5 // pred_region
        // Predicated region
        $region33: #{unet_conv2_forward.1} parent=31 // pred_check
          %p181 = pneg %p34
        $region34: #{unet_conv2_forward.1} parent=31 // pred_check_branch
          %183 = sbr.rel (%p181) target = $region36
        $region35: #{unet_conv2_forward.1} parent=31 // pred_region
          %p184 = scmp.lt.s32.totalorder %s14, 1
          %s185 = scalar_select %p184, %s14, 1
          %s186 = smul.addr %s185, 32
          %s187 = smul.addr %s186, 8
          %s188 = scalar_lea.vmem %s0, %s187
        $region36: #{unet_conv2_forward.1} parent=31 // pred_fallthru
          _
      $region32: #{unet_conv2_forward.1} parent=5 // pred_fallthru
        _
      %p189 = scmp.le.s32.totalorder 1, %s14
      %p190 = scmp.lt.s32.totalorder %s14, 3
      %p191 = pnand %p189, %p190
      %p192 = pneg %p191
      // Predicated region
      $region37: #{unet_conv2_forward.1} parent=5 // pred_check
        _
      $region38: #{unet_conv2_forward.1} parent=5 // pred_check_branch
        %194 = sbr.rel (%p191) target = $region40
      $region39: #{unet_conv2_forward.1} parent=5 // pred_region
        %s195 = ssub.s32 %s14, 1
        %p196 = scmp.lt.s32.totalorder %s19, 1
        %s197 = scalar_select %p196, %s19, 1
        %s198 = smul.addr %s197, 32
        %s199 = smul.addr %s198, 8
        %s200 = scalar_lea.vmem %s0, %s199
        %p201 = pneg %p40
        %p202 = pneg %p37
        %p203 = pneg %p61
        %p204 = pneg %p58
        %p205 = pneg %p82
        %p206 = pneg %p79
        %p207 = pneg %p103
        %p208 = pneg %p100
        %p209 = pneg %p124
        %p210 = pneg %p121
        %p211 = pneg %p150
        %p212 = pneg %p147
        %s213 = sand.u32 %s137, 1
        %s214 = scalar_lea.sflag [#allocation5], %s213
        %s215 = sand.u32 %s137, 1
        %s216 = smul.addr %s215, 256
        %s217 = scalar_lea.vmem [#allocation4], %s216
        %p218 = scmp.lt.s32.totalorder %s19, 1
        %s219 = scalar_select %p218, %s19, 1
        %s220 = smul.addr %s219, 32
        %s221 = smul.addr %s220, 8
        %s222 = scalar_lea.vmem %s0, %s221
        %vm223 = vcmask 31744
        %224 = vst.msk [vmem:[#allocation2] sm:$0xff] %vm223, 0.0
        %225 = vst.msk [vmem:[#allocation2 + $0x8] sm:$0xff] %vm223, 0.0
        %vm226 = vcmask 25600
        %227 = vst.msk [vmem:[#allocation2 + $0x10] sm:$0x3] %vm226, 0.0
        %s228 = scalar_lea.vmem [#allocation2], 408
        %229 = vst.msk [vmem:[%s228] sm:$0xff] %vm223, 0.0
        %230 = vst.msk [vmem:[%s228 + $0x8] sm:$0xff] %vm223, 0.0
        %231 = vst.msk [vmem:[%s228 + $0x10] sm:$0x3] %vm226, 0.0
        %vm232 = vcmask 24576
        %233 = vst.msk [vmem:[#allocation2] sm:$0x1] %vm232, 0.0
        %234 = vst.msk [vmem:[#allocation2 + $0x18] sm:$0x1] %vm232, 0.0
        %235 = vst.msk [vmem:[#allocation2 + $0x30] sm:$0x1] %vm232, 0.0
        %236 = vst.msk [vmem:[#allocation2 + $0x48] sm:$0x1] %vm232, 0.0
        %237 = vst.msk [vmem:[#allocation2 + $0x60] sm:$0x1] %vm232, 0.0
        %238 = vst.msk [vmem:[#allocation2 + $0x78] sm:$0x1] %vm232, 0.0
        %239 = vst.msk [vmem:[#allocation2 + $0x90] sm:$0x1] %vm232, 0.0
        %240 = vst.msk [vmem:[#allocation2 + $0xa8] sm:$0x1] %vm232, 0.0
        %241 = vst.msk [vmem:[#allocation2 + $0xc0] sm:$0x1] %vm232, 0.0
        %242 = vst.msk [vmem:[#allocation2 + $0xd8] sm:$0x1] %vm232, 0.0
        %243 = vst.msk [vmem:[#allocation2 + $0xf0] sm:$0x1] %vm232, 0.0
        %244 = vst.msk [vmem:[#allocation2 + $0x108] sm:$0x1] %vm232, 0.0
        %245 = vst.msk [vmem:[#allocation2 + $0x120] sm:$0x1] %vm232, 0.0
        %246 = vst.msk [vmem:[#allocation2 + $0x138] sm:$0x1] %vm232, 0.0
        %247 = vst.msk [vmem:[#allocation2 + $0x150] sm:$0x1] %vm232, 0.0
        %248 = vst.msk [vmem:[#allocation2 + $0x168] sm:$0x1] %vm232, 0.0
        %249 = vst.msk [vmem:[#allocation2 + $0x180] sm:$0x1] %vm232, 0.0
        %250 = vst.msk [vmem:[#allocation2 + $0x198] sm:$0x1] %vm232, 0.0
        %251 = vst.msk [vmem:[#allocation2 + $0x11] sm:$0x1] %vm232, 0.0
        %252 = vst.msk [vmem:[#allocation2 + $0x29] sm:$0x1] %vm232, 0.0
        %253 = vst.msk [vmem:[#allocation2 + $0x41] sm:$0x1] %vm232, 0.0
        %254 = vst.msk [vmem:[#allocation2 + $0x59] sm:$0x1] %vm232, 0.0
        %255 = vst.msk [vmem:[#allocation2 + $0x71] sm:$0x1] %vm232, 0.0
        %256 = vst.msk [vmem:[#allocation2 + $0x89] sm:$0x1] %vm232, 0.0
        %257 = vst.msk [vmem:[#allocation2 + $0xa1] sm:$0x1] %vm232, 0.0
        %258 = vst.msk [vmem:[#allocation2 + $0xb9] sm:$0x1] %vm232, 0.0
        %259 = vst.msk [vmem:[#allocation2 + $0xd1] sm:$0x1] %vm232, 0.0
        %260 = vst.msk [vmem:[#allocation2 + $0xe9] sm:$0x1] %vm232, 0.0
        %261 = vst.msk [vmem:[#allocation2 + $0x101] sm:$0x1] %vm232, 0.0
        %262 = vst.msk [vmem:[#allocation2 + $0x119] sm:$0x1] %vm232, 0.0
        %263 = vst.msk [vmem:[#allocation2 + $0x131] sm:$0x1] %vm232, 0.0
        %264 = vst.msk [vmem:[#allocation2 + $0x149] sm:$0x1] %vm232, 0.0
        %265 = vst.msk [vmem:[#allocation2 + $0x161] sm:$0x1] %vm232, 0.0
        %266 = vst.msk [vmem:[#allocation2 + $0x179] sm:$0x1] %vm232, 0.0
        %267 = vst.msk [vmem:[#allocation2 + $0x191] sm:$0x1] %vm232, 0.0
        %268 = vst.msk [vmem:[#allocation2 + $0x1a9] sm:$0x1] %vm232, 0.0
        %v269 = vld [vmem:[%s222] sm:$0xff]
        %v270 = vld [vmem:[%s222 + $0x8] sm:$0xff]
        %v271 = vld [vmem:[%s222 + $0x10] sm:$0xff]
        %v272 = vld [vmem:[%s222 + $0x18] sm:$0xff]
        %v273 = vld [vmem:[%s222 + $0x20] sm:$0xff]
        %v274 = vld [vmem:[%s222 + $0x28] sm:$0xff]
        %v275 = vld [vmem:[%s222 + $0x30] sm:$0xff]
        %v276 = vld [vmem:[%s222 + $0x38] sm:$0xff]
        %v277 = vld [vmem:[%s222 + $0x40] sm:$0xff]
        %v278 = vld [vmem:[%s222 + $0x48] sm:$0xff]
        %v279 = vld [vmem:[%s222 + $0x50] sm:$0xff]
        %v280 = vld [vmem:[%s222 + $0x58] sm:$0xff]
        %v281 = vld [vmem:[%s222 + $0x60] sm:$0xff]
        %v282 = vld [vmem:[%s222 + $0x68] sm:$0xff]
        %v283 = vld [vmem:[%s222 + $0x70] sm:$0xff]
        %v284 = vld [vmem:[%s222 + $0x78] sm:$0xff]
        %v285 = vld [vmem:[%s222 + $0x80] sm:$0xff]
        %v286 = vld [vmem:[%s222 + $0x88] sm:$0xff]
        %v287 = vld [vmem:[%s222 + $0x90] sm:$0xff]
        %v288 = vld [vmem:[%s222 + $0x98] sm:$0xff]
        %v289 = vld [vmem:[%s222 + $0xa0] sm:$0xff]
        %v290 = vld [vmem:[%s222 + $0xa8] sm:$0xff]
        %v291 = vld [vmem:[%s222 + $0xb0] sm:$0xff]
        %v292 = vld [vmem:[%s222 + $0xb8] sm:$0xff]
        %v293 = vld [vmem:[%s222 + $0xc0] sm:$0xff]
        %v294 = vld [vmem:[%s222 + $0xc8] sm:$0xff]
        %v295 = vld [vmem:[%s222 + $0xd0] sm:$0xff]
        %v296 = vld [vmem:[%s222 + $0xd8] sm:$0xff]
        %v297 = vld [vmem:[%s222 + $0xe0] sm:$0xff]
        %v298 = vld [vmem:[%s222 + $0xe8] sm:$0xff]
        %v299 = vld [vmem:[%s222 + $0xf0] sm:$0xff]
        %v300 = vld [vmem:[%s222 + $0xf8] sm:$0xff]
        %s301 = scalar_lea.vmem [#allocation2], 24
        %302 = vst.msk [vmem:[%s301 + $0x1] sm:$0xff] %vm223, %v269
        %303 = vst.msk [vmem:[%s301 + $0x9] sm:$0xff] %vm223, %v270
        %304 = vst.msk [vmem:[%s301 + $0x19] sm:$0xff] %vm223, %v271
        %305 = vst.msk [vmem:[%s301 + $0x21] sm:$0xff] %vm223, %v272
        %306 = vst.msk [vmem:[%s301 + $0x31] sm:$0xff] %vm223, %v273
        %307 = vst.msk [vmem:[%s301 + $0x39] sm:$0xff] %vm223, %v274
        %308 = vst.msk [vmem:[%s301 + $0x49] sm:$0xff] %vm223, %v275
        %309 = vst.msk [vmem:[%s301 + $0x51] sm:$0xff] %vm223, %v276
        %310 = vst.msk [vmem:[%s301 + $0x61] sm:$0xff] %vm223, %v277
        %311 = vst.msk [vmem:[%s301 + $0x69] sm:$0xff] %vm223, %v278
        %312 = vst.msk [vmem:[%s301 + $0x79] sm:$0xff] %vm223, %v279
        %313 = vst.msk [vmem:[%s301 + $0x81] sm:$0xff] %vm223, %v280
        %314 = vst.msk [vmem:[%s301 + $0x91] sm:$0xff] %vm223, %v281
        %315 = vst.msk [vmem:[%s301 + $0x99] sm:$0xff] %vm223, %v282
        %316 = vst.msk [vmem:[%s301 + $0xa9] sm:$0xff] %vm223, %v283
        %317 = vst.msk [vmem:[%s301 + $0xb1] sm:$0xff] %vm223, %v284
        %318 = vst.msk [vmem:[%s301 + $0xc1] sm:$0xff] %vm223, %v285
        %319 = vst.msk [vmem:[%s301 + $0xc9] sm:$0xff] %vm223, %v286
        %320 = vst.msk [vmem:[%s301 + $0xd9] sm:$0xff] %vm223, %v287
        %321 = vst.msk [vmem:[%s301 + $0xe1] sm:$0xff] %vm223, %v288
        %322 = vst.msk [vmem:[%s301 + $0xf1] sm:$0xff] %vm223, %v289
        %323 = vst.msk [vmem:[%s301 + $0xf9] sm:$0xff] %vm223, %v290
        %324 = vst.msk [vmem:[%s301 + $0x109] sm:$0xff] %vm223, %v291
        %325 = vst.msk [vmem:[%s301 + $0x111] sm:$0xff] %vm223, %v292
        %326 = vst.msk [vmem:[%s301 + $0x121] sm:$0xff] %vm223, %v293
        %327 = vst.msk [vmem:[%s301 + $0x129] sm:$0xff] %vm223, %v294
        %328 = vst.msk [vmem:[%s301 + $0x139] sm:$0xff] %vm223, %v295
        %329 = vst.msk [vmem:[%s301 + $0x141] sm:$0xff] %vm223, %v296
        %330 = vst.msk [vmem:[%s301 + $0x151] sm:$0xff] %vm223, %v297
        %331 = vst.msk [vmem:[%s301 + $0x159] sm:$0xff] %vm223, %v298
        %332 = vst.msk [vmem:[%s301 + $0x169] sm:$0xff] %vm223, %v299
        %333 = vst.msk [vmem:[%s301 + $0x171] sm:$0xff] %vm223, %v300
        %v334 = vld [vmem:[%s1] sm:$0xf]
        %v335 = vld [vmem:[%s1 + $0x4] sm:$0xf]
        %v336 = vld [vmem:[%s1 + $0x8] sm:$0xf]
        %v337 = vld [vmem:[%s1 + $0xc] sm:$0xf]
        %v338 = vld [vmem:[%s1 + $0x10] sm:$0xf]
        %v339 = vld [vmem:[%s1 + $0x14] sm:$0xf]
        %v340 = vld [vmem:[%s1 + $0x18] sm:$0xf]
        %v341 = vld [vmem:[%s1 + $0x1c] sm:$0xf]
        %v342 = vld [vmem:[%s1 + $0x20] sm:$0xf]
        %v343 = vld [vmem:[%s2] sm:$0x1]
        %v345 = vperm.slane %v343, 0
        %v347 = vld [vmem:[#allocation2] sm:$0xff]
        %v348 = vld [vmem:[#allocation2 + $0x8] sm:$0xff]
        %v349 = vld [vmem:[#allocation2 + $0x18] sm:$0xff]
        %v350 = vld [vmem:[#allocation2 + $0x20] sm:$0xff]
        %v351 = vld [vmem:[#allocation2 + $0x30] sm:$0xff]
        %v352 = vld [vmem:[#allocation2 + $0x38] sm:$0xff]
        %v353 = vld [vmem:[#allocation2 + $0x48] sm:$0xff]
        %v354 = vld [vmem:[#allocation2 + $0x50] sm:$0xff]
        %v355 = vld [vmem:[#allocation2 + $0x60] sm:$0xff]
        %v356 = vld [vmem:[#allocation2 + $0x68] sm:$0xff]
        %v357 = vld [vmem:[#allocation2 + $0x78] sm:$0xff]
        %v358 = vld [vmem:[#allocation2 + $0x80] sm:$0xff]
        %v359 = vld [vmem:[#allocation2 + $0x90] sm:$0xff]
        %v360 = vld [vmem:[#allocation2 + $0x98] sm:$0xff]
        %v361 = vld [vmem:[#allocation2 + $0xa8] sm:$0xff]
        %v362 = vld [vmem:[#allocation2 + $0xb0] sm:$0xff]
        %v363 = vld [vmem:[#allocation2 + $0xc0] sm:$0xff]
        %v364 = vld [vmem:[#allocation2 + $0xc8] sm:$0xff]
        %v365 = vld [vmem:[#allocation2 + $0xd8] sm:$0xff]
        %v366 = vld [vmem:[#allocation2 + $0xe0] sm:$0xff]
        %v367 = vld [vmem:[#allocation2 + $0xf0] sm:$0xff]
        %v368 = vld [vmem:[#allocation2 + $0xf8] sm:$0xff]
        %v369 = vld [vmem:[#allocation2 + $0x108] sm:$0xff]
        %v370 = vld [vmem:[#allocation2 + $0x110] sm:$0xff]
        %v371 = vld [vmem:[#allocation2 + $0x120] sm:$0xff]
        %v372 = vld [vmem:[#allocation2 + $0x128] sm:$0xff]
        %v373 = vld [vmem:[#allocation2 + $0x138] sm:$0xff]
        %v374 = vld [vmem:[#allocation2 + $0x140] sm:$0xff]
        %v375 = vld [vmem:[#allocation2 + $0x150] sm:$0xff]
        %v376 = vld [vmem:[#allocation2 + $0x158] sm:$0xff]
        %v377 = vld [vmem:[#allocation2 + $0x168] sm:$0xff]
        %v378 = vld [vmem:[#allocation2 + $0x170] sm:$0xff]
        %v379 = vld [vmem:[#allocation2 + $0x180] sm:$0xff]
        %v380 = vld [vmem:[#allocation2 + $0x188] sm:$0xff]
        %v381 = vld [vmem:[#allocation2 + $0x198] sm:$0xff]
        %v382 = vld [vmem:[#allocation2 + $0x1a0] sm:$0xff]
        %v384 = vsel %vm223, %v347, 0
        %v387 = vsel %vm223, %v348, 0
        %v390 = vsel %vm223, %v349, 0
        %v393 = vsel %vm223, %v350, 0
        %v396 = vsel %vm223, %v351, 0
        %v399 = vsel %vm223, %v352, 0
        %v402 = vsel %vm223, %v353, 0
        %v405 = vsel %vm223, %v354, 0
        %v408 = vsel %vm223, %v355, 0
        %v411 = vsel %vm223, %v356, 0
        %v414 = vsel %vm223, %v357, 0
        %v417 = vsel %vm223, %v358, 0
        %v420 = vsel %vm223, %v359, 0
        %v423 = vsel %vm223, %v360, 0
        %v426 = vsel %vm223, %v361, 0
        %v429 = vsel %vm223, %v362, 0
        %v432 = vsel %vm223, %v363, 0
        %v435 = vsel %vm223, %v364, 0
        %v438 = vsel %vm223, %v365, 0
        %v441 = vsel %vm223, %v366, 0
        %v444 = vsel %vm223, %v367, 0
        %v447 = vsel %vm223, %v368, 0
        %v450 = vsel %vm223, %v369, 0
        %v453 = vsel %vm223, %v370, 0
        %v456 = vsel %vm223, %v371, 0
        %v459 = vsel %vm223, %v372, 0
        %v462 = vsel %vm223, %v373, 0
        %v465 = vsel %vm223, %v374, 0
        %v468 = vsel %vm223, %v375, 0
        %v471 = vsel %vm223, %v376, 0
        %v474 = vsel %vm223, %v377, 0
        %v477 = vsel %vm223, %v378, 0
        %vm479 = vcmask 1043456
        %v481 = vsel %vm479, %v334, 0
        %483 = vmatpush.msra.mxu0 0.0
        %484 = vmatpush.msra.mxu0 0.0
        %485 = vmatpush.msra.mxu0 0.0
        %486 = vmatpush.msra.mxu0 0.0
        %487 = vmatpush.msra.mxu0 0.0
        %488 = vmatpush.msra.mxu0 0.0
        %489 = vmatpush.msra.mxu0 0.0
        %490 = vmatpush.msra.mxu0 0.0
        %491 = vmatpush.msra.mxu0 0.0
        %492 = vmatpush.msra.mxu0 0.0
        %493 = vmatpush.msra.mxu0 0.0
        %494 = vmatpush.msra.mxu0 0.0
        %495 = vmatpush.msra.mxu0 0.0
        %496 = vmatpush.msra.mxu0 0.0
        %497 = vmatpush.msra.mxu0 0.0
        %498 = vmatpush.msra.mxu0 %v481
        %499 = vmatmul.f32.gmra.mxu0 %v384
        %v500 = vpop.f32.mrf.mxu0
        %v501 = vadd.f32 0.0, %v500
        %502 = vmatmul.f32.gmra.mxu0 %v387
        %v503 = vpop.f32.mrf.mxu0
        %v504 = vadd.f32 0.0, %v503
        %505 = vmatmul.f32.gmra.mxu0 %v390
        %v506 = vpop.f32.mrf.mxu0
        %v507 = vadd.f32 0.0, %v506
        %508 = vmatmul.f32.gmra.mxu0 %v393
        %v509 = vpop.f32.mrf.mxu0
        %v510 = vadd.f32 0.0, %v509
        %511 = vmatmul.f32.gmra.mxu0 %v396
        %v512 = vpop.f32.mrf.mxu0
        %v513 = vadd.f32 0.0, %v512
        %514 = vmatmul.f32.gmra.mxu0 %v399
        %v515 = vpop.f32.mrf.mxu0
        %v516 = vadd.f32 0.0, %v515
        %517 = vmatmul.f32.gmra.mxu0 %v402
        %v518 = vpop.f32.mrf.mxu0
        %v519 = vadd.f32 0.0, %v518
        %520 = vmatmul.f32.gmra.mxu0 %v405
        %v521 = vpop.f32.mrf.mxu0
        %v522 = vadd.f32 0.0, %v521
        %523 = vmatmul.f32.gmra.mxu0 %v408
        %v524 = vpop.f32.mrf.mxu0
        %v525 = vadd.f32 0.0, %v524
        %526 = vmatmul.f32.gmra.mxu0 %v411
        %v527 = vpop.f32.mrf.mxu0
        %v528 = vadd.f32 0.0, %v527
        %529 = vmatmul.f32.gmra.mxu0 %v414
        %v530 = vpop.f32.mrf.mxu0
        %v531 = vadd.f32 0.0, %v530
        %532 = vmatmul.f32.gmra.mxu0 %v417
        %v533 = vpop.f32.mrf.mxu0
        %v534 = vadd.f32 0.0, %v533
        %535 = vmatmul.f32.gmra.mxu0 %v420
        %v536 = vpop.f32.mrf.mxu0
        %v537 = vadd.f32 0.0, %v536
        %538 = vmatmul.f32.gmra.mxu0 %v423
        %v539 = vpop.f32.mrf.mxu0
        %v540 = vadd.f32 0.0, %v539
        %541 = vmatmul.f32.gmra.mxu0 %v426
        %v542 = vpop.f32.mrf.mxu0
        %v543 = vadd.f32 0.0, %v542
        %544 = vmatmul.f32.gmra.mxu0 %v429
        %v545 = vpop.f32.mrf.mxu0
        %v546 = vadd.f32 0.0, %v545
        %547 = vmatmul.f32.gmra.mxu0 %v432
        %v548 = vpop.f32.mrf.mxu0
        %v549 = vadd.f32 0.0, %v548
        %550 = vmatmul.f32.gmra.mxu0 %v435
        %v551 = vpop.f32.mrf.mxu0
        %v552 = vadd.f32 0.0, %v551
        %553 = vmatmul.f32.gmra.mxu0 %v438
        %v554 = vpop.f32.mrf.mxu0
        %v555 = vadd.f32 0.0, %v554
        %556 = vmatmul.f32.gmra.mxu0 %v441
        %v557 = vpop.f32.mrf.mxu0
        %v558 = vadd.f32 0.0, %v557
        %559 = vmatmul.f32.gmra.mxu0 %v444
        %v560 = vpop.f32.mrf.mxu0
        %v561 = vadd.f32 0.0, %v560
        %562 = vmatmul.f32.gmra.mxu0 %v447
        %v563 = vpop.f32.mrf.mxu0
        %v564 = vadd.f32 0.0, %v563
        %565 = vmatmul.f32.gmra.mxu0 %v450
        %v566 = vpop.f32.mrf.mxu0
        %v567 = vadd.f32 0.0, %v566
        %568 = vmatmul.f32.gmra.mxu0 %v453
        %v569 = vpop.f32.mrf.mxu0
        %v570 = vadd.f32 0.0, %v569
        %571 = vmatmul.f32.gmra.mxu0 %v456
        %v572 = vpop.f32.mrf.mxu0
        %v573 = vadd.f32 0.0, %v572
        %574 = vmatmul.f32.gmra.mxu0 %v459
        %v575 = vpop.f32.mrf.mxu0
        %v576 = vadd.f32 0.0, %v575
        %577 = vmatmul.f32.gmra.mxu0 %v462
        %v578 = vpop.f32.mrf.mxu0
        %v579 = vadd.f32 0.0, %v578
        %580 = vmatmul.f32.gmra.mxu0 %v465
        %v581 = vpop.f32.mrf.mxu0
        %v582 = vadd.f32 0.0, %v581
        %583 = vmatmul.f32.gmra.mxu0 %v468
        %v584 = vpop.f32.mrf.mxu0
        %v585 = vadd.f32 0.0, %v584
        %586 = vmatmul.f32.gmra.mxu0 %v471
        %v587 = vpop.f32.mrf.mxu0
        %v588 = vadd.f32 0.0, %v587
        %589 = vmatmul.f32.gmra.mxu0 %v474
        %v590 = vpop.f32.mrf.mxu0
        %v591 = vadd.f32 0.0, %v590
        %592 = vmatmul.f32.gmra.mxu0 %v477
        %v593 = vpop.f32.mrf.mxu0
        %v594 = vadd.f32 0.0, %v593
        %595 = vdwg.mxu0
        %v596 = vadd.f32 %v345, %v501
        %v597 = vadd.f32 %v345, %v504
        %v598 = vadd.f32 %v345, %v507
        %v599 = vadd.f32 %v345, %v510
        %v600 = vadd.f32 %v345, %v513
        %v601 = vadd.f32 %v345, %v516
        %v602 = vadd.f32 %v345, %v519
        %v603 = vadd.f32 %v345, %v522
        %v604 = vadd.f32 %v345, %v525
        %v605 = vadd.f32 %v345, %v528
        %v606 = vadd.f32 %v345, %v531
        %v607 = vadd.f32 %v345, %v534
        %v608 = vadd.f32 %v345, %v537
        %v609 = vadd.f32 %v345, %v540
        %v610 = vadd.f32 %v345, %v543
        %v611 = vadd.f32 %v345, %v546
        %v612 = vadd.f32 %v345, %v549
        %v613 = vadd.f32 %v345, %v552
        %v614 = vadd.f32 %v345, %v555
        %v615 = vadd.f32 %v345, %v558
        %v616 = vadd.f32 %v345, %v561
        %v617 = vadd.f32 %v345, %v564
        %v618 = vadd.f32 %v345, %v567
        %v619 = vadd.f32 %v345, %v570
        %v620 = vadd.f32 %v345, %v573
        %v621 = vadd.f32 %v345, %v576
        %v622 = vadd.f32 %v345, %v579
        %v623 = vadd.f32 %v345, %v582
        %v624 = vadd.f32 %v345, %v585
        %v625 = vadd.f32 %v345, %v588
        %v626 = vadd.f32 %v345, %v591
        %v627 = vadd.f32 %v345, %v594
        %v629 = vsel %vm223, %v379, 0
        %v632 = vsel %vm223, %v380, 0
        %v635 = vsel %vm479, %v337, 0
        %637 = vmatpush.msra.mxu0 0.0
        %638 = vmatpush.msra.mxu0 0.0
        %639 = vmatpush.msra.mxu0 0.0
        %640 = vmatpush.msra.mxu0 0.0
        %641 = vmatpush.msra.mxu0 0.0
        %642 = vmatpush.msra.mxu0 0.0
        %643 = vmatpush.msra.mxu0 0.0
        %644 = vmatpush.msra.mxu0 0.0
        %645 = vmatpush.msra.mxu0 0.0
        %646 = vmatpush.msra.mxu0 0.0
        %647 = vmatpush.msra.mxu0 0.0
        %648 = vmatpush.msra.mxu0 0.0
        %649 = vmatpush.msra.mxu0 0.0
        %650 = vmatpush.msra.mxu0 0.0
        %651 = vmatpush.msra.mxu0 0.0
        %652 = vmatpush.msra.mxu0 %v635
        %653 = vmatmul.f32.gmra.mxu0 %v390
        %v654 = vpop.f32.mrf.mxu0
        %v655 = vadd.f32 0.0, %v654
        %656 = vmatmul.f32.gmra.mxu0 %v393
        %v657 = vpop.f32.mrf.mxu0
        %v658 = vadd.f32 0.0, %v657
        %659 = vmatmul.f32.gmra.mxu0 %v396
        %v660 = vpop.f32.mrf.mxu0
        %v661 = vadd.f32 0.0, %v660
        %662 = vmatmul.f32.gmra.mxu0 %v399
        %v663 = vpop.f32.mrf.mxu0
        %v664 = vadd.f32 0.0, %v663
        %665 = vmatmul.f32.gmra.mxu0 %v402
        %v666 = vpop.f32.mrf.mxu0
        %v667 = vadd.f32 0.0, %v666
        %668 = vmatmul.f32.gmra.mxu0 %v405
        %v669 = vpop.f32.mrf.mxu0
        %v670 = vadd.f32 0.0, %v669
        %671 = vmatmul.f32.gmra.mxu0 %v408
        %v672 = vpop.f32.mrf.mxu0
        %v673 = vadd.f32 0.0, %v672
        %674 = vmatmul.f32.gmra.mxu0 %v411
        %v675 = vpop.f32.mrf.mxu0
        %v676 = vadd.f32 0.0, %v675
        %677 = vmatmul.f32.gmra.mxu0 %v414
        %v678 = vpop.f32.mrf.mxu0
        %v679 = vadd.f32 0.0, %v678
        %680 = vmatmul.f32.gmra.mxu0 %v417
        %v681 = vpop.f32.mrf.mxu0
        %v682 = vadd.f32 0.0, %v681
        %683 = vmatmul.f32.gmra.mxu0 %v420
        %v684 = vpop.f32.mrf.mxu0
        %v685 = vadd.f32 0.0, %v684
        %686 = vmatmul.f32.gmra.mxu0 %v423
        %v687 = vpop.f32.mrf.mxu0
        %v688 = vadd.f32 0.0, %v687
        %689 = vmatmul.f32.gmra.mxu0 %v426
        %v690 = vpop.f32.mrf.mxu0
        %v691 = vadd.f32 0.0, %v690
        %692 = vmatmul.f32.gmra.mxu0 %v429
        %v693 = vpop.f32.mrf.mxu0
        %v694 = vadd.f32 0.0, %v693
        %695 = vmatmul.f32.gmra.mxu0 %v432
        %v696 = vpop.f32.mrf.mxu0
        %v697 = vadd.f32 0.0, %v696
        %698 = vmatmul.f32.gmra.mxu0 %v435
        %v699 = vpop.f32.mrf.mxu0
        %v700 = vadd.f32 0.0, %v699
        %701 = vmatmul.f32.gmra.mxu0 %v438
        %v702 = vpop.f32.mrf.mxu0
        %v703 = vadd.f32 0.0, %v702
        %704 = vmatmul.f32.gmra.mxu0 %v441
        %v705 = vpop.f32.mrf.mxu0
        %v706 = vadd.f32 0.0, %v705
        %707 = vmatmul.f32.gmra.mxu0 %v444
        %v708 = vpop.f32.mrf.mxu0
        %v709 = vadd.f32 0.0, %v708
        %710 = vmatmul.f32.gmra.mxu0 %v447
        %v711 = vpop.f32.mrf.mxu0
        %v712 = vadd.f32 0.0, %v711
        %713 = vmatmul.f32.gmra.mxu0 %v450
        %v714 = vpop.f32.mrf.mxu0
        %v715 = vadd.f32 0.0, %v714
        %716 = vmatmul.f32.gmra.mxu0 %v453
        %v717 = vpop.f32.mrf.mxu0
        %v718 = vadd.f32 0.0, %v717
        %719 = vmatmul.f32.gmra.mxu0 %v456
        %v720 = vpop.f32.mrf.mxu0
        %v721 = vadd.f32 0.0, %v720
        %722 = vmatmul.f32.gmra.mxu0 %v459
        %v723 = vpop.f32.mrf.mxu0
        %v724 = vadd.f32 0.0, %v723
        %725 = vmatmul.f32.gmra.mxu0 %v462
        %v726 = vpop.f32.mrf.mxu0
        %v727 = vadd.f32 0.0, %v726
        %728 = vmatmul.f32.gmra.mxu0 %v465
        %v729 = vpop.f32.mrf.mxu0
        %v730 = vadd.f32 0.0, %v729
        %731 = vmatmul.f32.gmra.mxu0 %v468
        %v732 = vpop.f32.mrf.mxu0
        %v733 = vadd.f32 0.0, %v732
        %734 = vmatmul.f32.gmra.mxu0 %v471
        %v735 = vpop.f32.mrf.mxu0
        %v736 = vadd.f32 0.0, %v735
        %737 = vmatmul.f32.gmra.mxu0 %v474
        %v738 = vpop.f32.mrf.mxu0
        %v739 = vadd.f32 0.0, %v738
        %740 = vmatmul.f32.gmra.mxu0 %v477
        %v741 = vpop.f32.mrf.mxu0
        %v742 = vadd.f32 0.0, %v741
        %743 = vmatmul.f32.gmra.mxu0 %v629
        %v744 = vpop.f32.mrf.mxu0
        %v745 = vadd.f32 0.0, %v744
        %746 = vmatmul.f32.gmra.mxu0 %v632
        %v747 = vpop.f32.mrf.mxu0
        %v748 = vadd.f32 0.0, %v747
        %749 = vdwg.mxu0
        %v750 = vadd.f32 %v596, %v655
        %v751 = vadd.f32 %v597, %v658
        %v752 = vadd.f32 %v598, %v661
        %v753 = vadd.f32 %v599, %v664
        %v754 = vadd.f32 %v600, %v667
        %v755 = vadd.f32 %v601, %v670
        %v756 = vadd.f32 %v602, %v673
        %v757 = vadd.f32 %v603, %v676
        %v758 = vadd.f32 %v604, %v679
        %v759 = vadd.f32 %v605, %v682
        %v760 = vadd.f32 %v606, %v685
        %v761 = vadd.f32 %v607, %v688
        %v762 = vadd.f32 %v608, %v691
        %v763 = vadd.f32 %v609, %v694
        %v764 = vadd.f32 %v610, %v697
        %v765 = vadd.f32 %v611, %v700
        %v766 = vadd.f32 %v612, %v703
        %v767 = vadd.f32 %v613, %v706
        %v768 = vadd.f32 %v614, %v709
        %v769 = vadd.f32 %v615, %v712
        %v770 = vadd.f32 %v616, %v715
        %v771 = vadd.f32 %v617, %v718
        %v772 = vadd.f32 %v618, %v721
        %v773 = vadd.f32 %v619, %v724
        %v774 = vadd.f32 %v620, %v727
        %v775 = vadd.f32 %v621, %v730
        %v776 = vadd.f32 %v622, %v733
        %v777 = vadd.f32 %v623, %v736
        %v778 = vadd.f32 %v624, %v739
        %v779 = vadd.f32 %v625, %v742
        %v780 = vadd.f32 %v626, %v745
        %v781 = vadd.f32 %v627, %v748
        %v783 = vsel %vm223, %v381, 0
        %v786 = vsel %vm223, %v382, 0
        %v789 = vsel %vm479, %v340, 0
        %791 = vmatpush.msra.mxu0 0.0
        %792 = vmatpush.msra.mxu0 0.0
        %793 = vmatpush.msra.mxu0 0.0
        %794 = vmatpush.msra.mxu0 0.0
        %795 = vmatpush.msra.mxu0 0.0
        %796 = vmatpush.msra.mxu0 0.0
        %797 = vmatpush.msra.mxu0 0.0
        %798 = vmatpush.msra.mxu0 0.0
        %799 = vmatpush.msra.mxu0 0.0
        %800 = vmatpush.msra.mxu0 0.0
        %801 = vmatpush.msra.mxu0 0.0
        %802 = vmatpush.msra.mxu0 0.0
        %803 = vmatpush.msra.mxu0 0.0
        %804 = vmatpush.msra.mxu0 0.0
        %805 = vmatpush.msra.mxu0 0.0
        %806 = vmatpush.msra.mxu0 %v789
        %807 = vmatmul.f32.gmra.mxu0 %v396
        %v808 = vpop.f32.mrf.mxu0
        %v809 = vadd.f32 0.0, %v808
        %810 = vmatmul.f32.gmra.mxu0 %v399
        %v811 = vpop.f32.mrf.mxu0
        %v812 = vadd.f32 0.0, %v811
        %813 = vmatmul.f32.gmra.mxu0 %v402
        %v814 = vpop.f32.mrf.mxu0
        %v815 = vadd.f32 0.0, %v814
        %816 = vmatmul.f32.gmra.mxu0 %v405
        %v817 = vpop.f32.mrf.mxu0
        %v818 = vadd.f32 0.0, %v817
        %819 = vmatmul.f32.gmra.mxu0 %v408
        %v820 = vpop.f32.mrf.mxu0
        %v821 = vadd.f32 0.0, %v820
        %822 = vmatmul.f32.gmra.mxu0 %v411
        %v823 = vpop.f32.mrf.mxu0
        %v824 = vadd.f32 0.0, %v823
        %825 = vmatmul.f32.gmra.mxu0 %v414
        %v826 = vpop.f32.mrf.mxu0
        %v827 = vadd.f32 0.0, %v826
        %828 = vmatmul.f32.gmra.mxu0 %v417
        %v829 = vpop.f32.mrf.mxu0
        %v830 = vadd.f32 0.0, %v829
        %831 = vmatmul.f32.gmra.mxu0 %v420
        %v832 = vpop.f32.mrf.mxu0
        %v833 = vadd.f32 0.0, %v832
        %834 = vmatmul.f32.gmra.mxu0 %v423
        %v835 = vpop.f32.mrf.mxu0
        %v836 = vadd.f32 0.0, %v835
        %837 = vmatmul.f32.gmra.mxu0 %v426
        %v838 = vpop.f32.mrf.mxu0
        %v839 = vadd.f32 0.0, %v838
        %840 = vmatmul.f32.gmra.mxu0 %v429
        %v841 = vpop.f32.mrf.mxu0
        %v842 = vadd.f32 0.0, %v841
        %843 = vmatmul.f32.gmra.mxu0 %v432
        %v844 = vpop.f32.mrf.mxu0
        %v845 = vadd.f32 0.0, %v844
        %846 = vmatmul.f32.gmra.mxu0 %v435
        %v847 = vpop.f32.mrf.mxu0
        %v848 = vadd.f32 0.0, %v847
        %849 = vmatmul.f32.gmra.mxu0 %v438
        %v850 = vpop.f32.mrf.mxu0
        %v851 = vadd.f32 0.0, %v850
        %852 = vmatmul.f32.gmra.mxu0 %v441
        %v853 = vpop.f32.mrf.mxu0
        %v854 = vadd.f32 0.0, %v853
        %855 = vmatmul.f32.gmra.mxu0 %v444
        %v856 = vpop.f32.mrf.mxu0
        %v857 = vadd.f32 0.0, %v856
        %858 = vmatmul.f32.gmra.mxu0 %v447
        %v859 = vpop.f32.mrf.mxu0
        %v860 = vadd.f32 0.0, %v859
        %861 = vmatmul.f32.gmra.mxu0 %v450
        %v862 = vpop.f32.mrf.mxu0
        %v863 = vadd.f32 0.0, %v862
        %864 = vmatmul.f32.gmra.mxu0 %v453
        %v865 = vpop.f32.mrf.mxu0
        %v866 = vadd.f32 0.0, %v865
        %867 = vmatmul.f32.gmra.mxu0 %v456
        %v868 = vpop.f32.mrf.mxu0
        %v869 = vadd.f32 0.0, %v868
        %870 = vmatmul.f32.gmra.mxu0 %v459
        %v871 = vpop.f32.mrf.mxu0
        %v872 = vadd.f32 0.0, %v871
        %873 = vmatmul.f32.gmra.mxu0 %v462
        %v874 = vpop.f32.mrf.mxu0
        %v875 = vadd.f32 0.0, %v874
        %876 = vmatmul.f32.gmra.mxu0 %v465
        %v877 = vpop.f32.mrf.mxu0
        %v878 = vadd.f32 0.0, %v877
        %879 = vmatmul.f32.gmra.mxu0 %v468
        %v880 = vpop.f32.mrf.mxu0
        %v881 = vadd.f32 0.0, %v880
        %882 = vmatmul.f32.gmra.mxu0 %v471
        %v883 = vpop.f32.mrf.mxu0
        %v884 = vadd.f32 0.0, %v883
        %885 = vmatmul.f32.gmra.mxu0 %v474
        %v886 = vpop.f32.mrf.mxu0
        %v887 = vadd.f32 0.0, %v886
        %888 = vmatmul.f32.gmra.mxu0 %v477
        %v889 = vpop.f32.mrf.mxu0
        %v890 = vadd.f32 0.0, %v889
        %891 = vmatmul.f32.gmra.mxu0 %v629
        %v892 = vpop.f32.mrf.mxu0
        %v893 = vadd.f32 0.0, %v892
        %894 = vmatmul.f32.gmra.mxu0 %v632
        %v895 = vpop.f32.mrf.mxu0
        %v896 = vadd.f32 0.0, %v895
        %897 = vmatmul.f32.gmra.mxu0 %v783
        %v898 = vpop.f32.mrf.mxu0
        %v899 = vadd.f32 0.0, %v898
        %900 = vmatmul.f32.gmra.mxu0 %v786
        %v901 = vpop.f32.mrf.mxu0
        %v902 = vadd.f32 0.0, %v901
        %903 = vdwg.mxu0
        %v904 = vadd.f32 %v750, %v809
        %v905 = vadd.f32 %v751, %v812
        %v906 = vadd.f32 %v752, %v815
        %v907 = vadd.f32 %v753, %v818
        %v908 = vadd.f32 %v754, %v821
        %v909 = vadd.f32 %v755, %v824
        %v910 = vadd.f32 %v756, %v827
        %v911 = vadd.f32 %v757, %v830
        %v912 = vadd.f32 %v758, %v833
        %v913 = vadd.f32 %v759, %v836
        %v914 = vadd.f32 %v760, %v839
        %v915 = vadd.f32 %v761, %v842
        %v916 = vadd.f32 %v762, %v845
        %v917 = vadd.f32 %v763, %v848
        %v918 = vadd.f32 %v764, %v851
        %v919 = vadd.f32 %v765, %v854
        %v920 = vadd.f32 %v766, %v857
        %v921 = vadd.f32 %v767, %v860
        %v922 = vadd.f32 %v768, %v863
        %v923 = vadd.f32 %v769, %v866
        %v924 = vadd.f32 %v770, %v869
        %v925 = vadd.f32 %v771, %v872
        %v926 = vadd.f32 %v772, %v875
        %v927 = vadd.f32 %v773, %v878
        %v928 = vadd.f32 %v774, %v881
        %v929 = vadd.f32 %v775, %v884
        %v930 = vadd.f32 %v776, %v887
        %v931 = vadd.f32 %v777, %v890
        %v932 = vadd.f32 %v778, %v893
        %v933 = vadd.f32 %v779, %v896
        %v934 = vadd.f32 %v780, %v899
        %v935 = vadd.f32 %v781, %v902
        %v936 = vld [vmem:[#allocation2 + $0x1] sm:$0xff]
        %v937 = vld [vmem:[#allocation2 + $0x9] sm:$0xff]
        %v938 = vld [vmem:[#allocation2 + $0x19] sm:$0xff]
        %v939 = vld [vmem:[#allocation2 + $0x21] sm:$0xff]
        %v940 = vld [vmem:[#allocation2 + $0x31] sm:$0xff]
        %v941 = vld [vmem:[#allocation2 + $0x39] sm:$0xff]
        %v942 = vld [vmem:[#allocation2 + $0x49] sm:$0xff]
        %v943 = vld [vmem:[#allocation2 + $0x51] sm:$0xff]
        %v944 = vld [vmem:[#allocation2 + $0x61] sm:$0xff]
        %v945 = vld [vmem:[#allocation2 + $0x69] sm:$0xff]
        %v946 = vld [vmem:[#allocation2 + $0x79] sm:$0xff]
        %v947 = vld [vmem:[#allocation2 + $0x81] sm:$0xff]
        %v948 = vld [vmem:[#allocation2 + $0x91] sm:$0xff]
        %v949 = vld [vmem:[#allocation2 + $0x99] sm:$0xff]
        %v950 = vld [vmem:[#allocation2 + $0xa9] sm:$0xff]
        %v951 = vld [vmem:[#allocation2 + $0xb1] sm:$0xff]
        %v952 = vld [vmem:[#allocation2 + $0xc1] sm:$0xff]
        %v953 = vld [vmem:[#allocation2 + $0xc9] sm:$0xff]
        %v954 = vld [vmem:[#allocation2 + $0xd9] sm:$0xff]
        %v955 = vld [vmem:[#allocation2 + $0xe1] sm:$0xff]
        %v956 = vld [vmem:[#allocation2 + $0xf1] sm:$0xff]
        %v957 = vld [vmem:[#allocation2 + $0xf9] sm:$0xff]
        %v958 = vld [vmem:[#allocation2 + $0x109] sm:$0xff]
        %v959 = vld [vmem:[#allocation2 + $0x111] sm:$0xff]
        %v960 = vld [vmem:[#allocation2 + $0x121] sm:$0xff]
        %v961 = vld [vmem:[#allocation2 + $0x129] sm:$0xff]
        %v962 = vld [vmem:[#allocation2 + $0x139] sm:$0xff]
        %v963 = vld [vmem:[#allocation2 + $0x141] sm:$0xff]
        %v964 = vld [vmem:[#allocation2 + $0x151] sm:$0xff]
        %v965 = vld [vmem:[#allocation2 + $0x159] sm:$0xff]
        %v966 = vld [vmem:[#allocation2 + $0x169] sm:$0xff]
        %v967 = vld [vmem:[#allocation2 + $0x171] sm:$0xff]
        %v968 = vld [vmem:[#allocation2 + $0x181] sm:$0xff]
        %v969 = vld [vmem:[#allocation2 + $0x189] sm:$0xff]
        %v970 = vld [vmem:[#allocation2 + $0x199] sm:$0xff]
        %v971 = vld [vmem:[#allocation2 + $0x1a1] sm:$0xff]
        %v973 = vsel %vm223, %v936, 0
        %v976 = vsel %vm223, %v937, 0
        %v979 = vsel %vm223, %v938, 0
        %v982 = vsel %vm223, %v939, 0
        %v985 = vsel %vm223, %v940, 0
        %v988 = vsel %vm223, %v941, 0
        %v991 = vsel %vm223, %v942, 0
        %v994 = vsel %vm223, %v943, 0
        %v997 = vsel %vm223, %v944, 0
        %v1000 = vsel %vm223, %v945, 0
        %v1003 = vsel %vm223, %v946, 0
        %v1006 = vsel %vm223, %v947, 0
        %v1009 = vsel %vm223, %v948, 0
        %v1012 = vsel %vm223, %v949, 0
        %v1015 = vsel %vm223, %v950, 0
        %v1018 = vsel %vm223, %v951, 0
        %v1021 = vsel %vm223, %v952, 0
        %v1024 = vsel %vm223, %v953, 0
        %v1027 = vsel %vm223, %v954, 0
        %v1030 = vsel %vm223, %v955, 0
        %v1033 = vsel %vm223, %v956, 0
        %v1036 = vsel %vm223, %v957, 0
        %v1039 = vsel %vm223, %v958, 0
        %v1042 = vsel %vm223, %v959, 0
        %v1045 = vsel %vm223, %v960, 0
        %v1048 = vsel %vm223, %v961, 0
        %v1051 = vsel %vm223, %v962, 0
        %v1054 = vsel %vm223, %v963, 0
        %v1057 = vsel %vm223, %v964, 0
        %v1060 = vsel %vm223, %v965, 0
        %v1063 = vsel %vm223, %v966, 0
        %v1066 = vsel %vm223, %v967, 0
        %v1069 = vsel %vm479, %v335, 0
        %1071 = vmatpush.msra.mxu0 0.0
        %1072 = vmatpush.msra.mxu0 0.0
        %1073 = vmatpush.msra.mxu0 0.0
        %1074 = vmatpush.msra.mxu0 0.0
        %1075 = vmatpush.msra.mxu0 0.0
        %1076 = vmatpush.msra.mxu0 0.0
        %1077 = vmatpush.msra.mxu0 0.0
        %1078 = vmatpush.msra.mxu0 0.0
        %1079 = vmatpush.msra.mxu0 0.0
        %1080 = vmatpush.msra.mxu0 0.0
        %1081 = vmatpush.msra.mxu0 0.0
        %1082 = vmatpush.msra.mxu0 0.0
        %1083 = vmatpush.msra.mxu0 0.0
        %1084 = vmatpush.msra.mxu0 0.0
        %1085 = vmatpush.msra.mxu0 0.0
        %1086 = vmatpush.msra.mxu0 %v1069
        %1087 = vmatmul.f32.gmra.mxu0 %v973
        %v1088 = vpop.f32.mrf.mxu0
        %v1089 = vadd.f32 0.0, %v1088
        %1090 = vmatmul.f32.gmra.mxu0 %v976
        %v1091 = vpop.f32.mrf.mxu0
        %v1092 = vadd.f32 0.0, %v1091
        %1093 = vmatmul.f32.gmra.mxu0 %v979
        %v1094 = vpop.f32.mrf.mxu0
        %v1095 = vadd.f32 0.0, %v1094
        %1096 = vmatmul.f32.gmra.mxu0 %v982
        %v1097 = vpop.f32.mrf.mxu0
        %v1098 = vadd.f32 0.0, %v1097
        %1099 = vmatmul.f32.gmra.mxu0 %v985
        %v1100 = vpop.f32.mrf.mxu0
        %v1101 = vadd.f32 0.0, %v1100
        %1102 = vmatmul.f32.gmra.mxu0 %v988
        %v1103 = vpop.f32.mrf.mxu0
        %v1104 = vadd.f32 0.0, %v1103
        %1105 = vmatmul.f32.gmra.mxu0 %v991
        %v1106 = vpop.f32.mrf.mxu0
        %v1107 = vadd.f32 0.0, %v1106
        %1108 = vmatmul.f32.gmra.mxu0 %v994
        %v1109 = vpop.f32.mrf.mxu0
        %v1110 = vadd.f32 0.0, %v1109
        %1111 = vmatmul.f32.gmra.mxu0 %v997
        %v1112 = vpop.f32.mrf.mxu0
        %v1113 = vadd.f32 0.0, %v1112
        %1114 = vmatmul.f32.gmra.mxu0 %v1000
        %v1115 = vpop.f32.mrf.mxu0
        %v1116 = vadd.f32 0.0, %v1115
        %1117 = vmatmul.f32.gmra.mxu0 %v1003
        %v1118 = vpop.f32.mrf.mxu0
        %v1119 = vadd.f32 0.0, %v1118
        %1120 = vmatmul.f32.gmra.mxu0 %v1006
        %v1121 = vpop.f32.mrf.mxu0
        %v1122 = vadd.f32 0.0, %v1121
        %1123 = vmatmul.f32.gmra.mxu0 %v1009
        %v1124 = vpop.f32.mrf.mxu0
        %v1125 = vadd.f32 0.0, %v1124
        %1126 = vmatmul.f32.gmra.mxu0 %v1012
        %v1127 = vpop.f32.mrf.mxu0
        %v1128 = vadd.f32 0.0, %v1127
        %1129 = vmatmul.f32.gmra.mxu0 %v1015
        %v1130 = vpop.f32.mrf.mxu0
        %v1131 = vadd.f32 0.0, %v1130
        %1132 = vmatmul.f32.gmra.mxu0 %v1018
        %v1133 = vpop.f32.mrf.mxu0
        %v1134 = vadd.f32 0.0, %v1133
        %1135 = vmatmul.f32.gmra.mxu0 %v1021
        %v1136 = vpop.f32.mrf.mxu0
        %v1137 = vadd.f32 0.0, %v1136
        %1138 = vmatmul.f32.gmra.mxu0 %v1024
        %v1139 = vpop.f32.mrf.mxu0
        %v1140 = vadd.f32 0.0, %v1139
        %1141 = vmatmul.f32.gmra.mxu0 %v1027
        %v1142 = vpop.f32.mrf.mxu0
        %v1143 = vadd.f32 0.0, %v1142
        %1144 = vmatmul.f32.gmra.mxu0 %v1030
        %v1145 = vpop.f32.mrf.mxu0
        %v1146 = vadd.f32 0.0, %v1145
        %1147 = vmatmul.f32.gmra.mxu0 %v1033
        %v1148 = vpop.f32.mrf.mxu0
        %v1149 = vadd.f32 0.0, %v1148
        %1150 = vmatmul.f32.gmra.mxu0 %v1036
        %v1151 = vpop.f32.mrf.mxu0
        %v1152 = vadd.f32 0.0, %v1151
        %1153 = vmatmul.f32.gmra.mxu0 %v1039
        %v1154 = vpop.f32.mrf.mxu0
        %v1155 = vadd.f32 0.0, %v1154
        %1156 = vmatmul.f32.gmra.mxu0 %v1042
        %v1157 = vpop.f32.mrf.mxu0
        %v1158 = vadd.f32 0.0, %v1157
        %1159 = vmatmul.f32.gmra.mxu0 %v1045
        %v1160 = vpop.f32.mrf.mxu0
        %v1161 = vadd.f32 0.0, %v1160
        %1162 = vmatmul.f32.gmra.mxu0 %v1048
        %v1163 = vpop.f32.mrf.mxu0
        %v1164 = vadd.f32 0.0, %v1163
        %1165 = vmatmul.f32.gmra.mxu0 %v1051
        %v1166 = vpop.f32.mrf.mxu0
        %v1167 = vadd.f32 0.0, %v1166
        %1168 = vmatmul.f32.gmra.mxu0 %v1054
        %v1169 = vpop.f32.mrf.mxu0
        %v1170 = vadd.f32 0.0, %v1169
        %1171 = vmatmul.f32.gmra.mxu0 %v1057
        %v1172 = vpop.f32.mrf.mxu0
        %v1173 = vadd.f32 0.0, %v1172
        %1174 = vmatmul.f32.gmra.mxu0 %v1060
        %v1175 = vpop.f32.mrf.mxu0
        %v1176 = vadd.f32 0.0, %v1175
        %1177 = vmatmul.f32.gmra.mxu0 %v1063
        %v1178 = vpop.f32.mrf.mxu0
        %v1179 = vadd.f32 0.0, %v1178
        %1180 = vmatmul.f32.gmra.mxu0 %v1066
        %v1181 = vpop.f32.mrf.mxu0
        %v1182 = vadd.f32 0.0, %v1181
        %1183 = vdwg.mxu0
        %v1184 = vadd.f32 %v904, %v1089
        %v1185 = vadd.f32 %v905, %v1092
        %v1186 = vadd.f32 %v906, %v1095
        %v1187 = vadd.f32 %v907, %v1098
        %v1188 = vadd.f32 %v908, %v1101
        %v1189 = vadd.f32 %v909, %v1104
        %v1190 = vadd.f32 %v910, %v1107
        %v1191 = vadd.f32 %v911, %v1110
        %v1192 = vadd.f32 %v912, %v1113
        %v1193 = vadd.f32 %v913, %v1116
        %v1194 = vadd.f32 %v914, %v1119
        %v1195 = vadd.f32 %v915, %v1122
        %v1196 = vadd.f32 %v916, %v1125
        %v1197 = vadd.f32 %v917, %v1128
        %v1198 = vadd.f32 %v918, %v1131
        %v1199 = vadd.f32 %v919, %v1134
        %v1200 = vadd.f32 %v920, %v1137
        %v1201 = vadd.f32 %v921, %v1140
        %v1202 = vadd.f32 %v922, %v1143
        %v1203 = vadd.f32 %v923, %v1146
        %v1204 = vadd.f32 %v924, %v1149
        %v1205 = vadd.f32 %v925, %v1152
        %v1206 = vadd.f32 %v926, %v1155
        %v1207 = vadd.f32 %v927, %v1158
        %v1208 = vadd.f32 %v928, %v1161
        %v1209 = vadd.f32 %v929, %v1164
        %v1210 = vadd.f32 %v930, %v1167
        %v1211 = vadd.f32 %v931, %v1170
        %v1212 = vadd.f32 %v932, %v1173
        %v1213 = vadd.f32 %v933, %v1176
        %v1214 = vadd.f32 %v934, %v1179
        %v1215 = vadd.f32 %v935, %v1182
        %v1217 = vsel %vm223, %v968, 0
        %v1220 = vsel %vm223, %v969, 0
        %v1223 = vsel %vm479, %v338, 0
        %1225 = vmatpush.msra.mxu0 0.0
        %1226 = vmatpush.msra.mxu0 0.0
        %1227 = vmatpush.msra.mxu0 0.0
        %1228 = vmatpush.msra.mxu0 0.0
        %1229 = vmatpush.msra.mxu0 0.0
        %1230 = vmatpush.msra.mxu0 0.0
        %1231 = vmatpush.msra.mxu0 0.0
        %1232 = vmatpush.msra.mxu0 0.0
        %1233 = vmatpush.msra.mxu0 0.0
        %1234 = vmatpush.msra.mxu0 0.0
        %1235 = vmatpush.msra.mxu0 0.0
        %1236 = vmatpush.msra.mxu0 0.0
        %1237 = vmatpush.msra.mxu0 0.0
        %1238 = vmatpush.msra.mxu0 0.0
        %1239 = vmatpush.msra.mxu0 0.0
        %1240 = vmatpush.msra.mxu0 %v1223
        %1241 = vmatmul.f32.gmra.mxu0 %v979
        %v1242 = vpop.f32.mrf.mxu0
        %v1243 = vadd.f32 0.0, %v1242
        %1244 = vmatmul.f32.gmra.mxu0 %v982
        %v1245 = vpop.f32.mrf.mxu0
        %v1246 = vadd.f32 0.0, %v1245
        %1247 = vmatmul.f32.gmra.mxu0 %v985
        %v1248 = vpop.f32.mrf.mxu0
        %v1249 = vadd.f32 0.0, %v1248
        %1250 = vmatmul.f32.gmra.mxu0 %v988
        %v1251 = vpop.f32.mrf.mxu0
        %v1252 = vadd.f32 0.0, %v1251
        %1253 = vmatmul.f32.gmra.mxu0 %v991
        %v1254 = vpop.f32.mrf.mxu0
        %v1255 = vadd.f32 0.0, %v1254
        %1256 = vmatmul.f32.gmra.mxu0 %v994
        %v1257 = vpop.f32.mrf.mxu0
        %v1258 = vadd.f32 0.0, %v1257
        %1259 = vmatmul.f32.gmra.mxu0 %v997
        %v1260 = vpop.f32.mrf.mxu0
        %v1261 = vadd.f32 0.0, %v1260
        %1262 = vmatmul.f32.gmra.mxu0 %v1000
        %v1263 = vpop.f32.mrf.mxu0
        %v1264 = vadd.f32 0.0, %v1263
        %1265 = vmatmul.f32.gmra.mxu0 %v1003
        %v1266 = vpop.f32.mrf.mxu0
        %v1267 = vadd.f32 0.0, %v1266
        %1268 = vmatmul.f32.gmra.mxu0 %v1006
        %v1269 = vpop.f32.mrf.mxu0
        %v1270 = vadd.f32 0.0, %v1269
        %1271 = vmatmul.f32.gmra.mxu0 %v1009
        %v1272 = vpop.f32.mrf.mxu0
        %v1273 = vadd.f32 0.0, %v1272
        %1274 = vmatmul.f32.gmra.mxu0 %v1012
        %v1275 = vpop.f32.mrf.mxu0
        %v1276 = vadd.f32 0.0, %v1275
        %1277 = vmatmul.f32.gmra.mxu0 %v1015
        %v1278 = vpop.f32.mrf.mxu0
        %v1279 = vadd.f32 0.0, %v1278
        %1280 = vmatmul.f32.gmra.mxu0 %v1018
        %v1281 = vpop.f32.mrf.mxu0
        %v1282 = vadd.f32 0.0, %v1281
        %1283 = vmatmul.f32.gmra.mxu0 %v1021
        %v1284 = vpop.f32.mrf.mxu0
        %v1285 = vadd.f32 0.0, %v1284
        %1286 = vmatmul.f32.gmra.mxu0 %v1024
        %v1287 = vpop.f32.mrf.mxu0
        %v1288 = vadd.f32 0.0, %v1287
        %1289 = vmatmul.f32.gmra.mxu0 %v1027
        %v1290 = vpop.f32.mrf.mxu0
        %v1291 = vadd.f32 0.0, %v1290
        %1292 = vmatmul.f32.gmra.mxu0 %v1030
        %v1293 = vpop.f32.mrf.mxu0
        %v1294 = vadd.f32 0.0, %v1293
        %1295 = vmatmul.f32.gmra.mxu0 %v1033
        %v1296 = vpop.f32.mrf.mxu0
        %v1297 = vadd.f32 0.0, %v1296
        %1298 = vmatmul.f32.gmra.mxu0 %v1036
        %v1299 = vpop.f32.mrf.mxu0
        %v1300 = vadd.f32 0.0, %v1299
        %1301 = vmatmul.f32.gmra.mxu0 %v1039
        %v1302 = vpop.f32.mrf.mxu0
        %v1303 = vadd.f32 0.0, %v1302
        %1304 = vmatmul.f32.gmra.mxu0 %v1042
        %v1305 = vpop.f32.mrf.mxu0
        %v1306 = vadd.f32 0.0, %v1305
        %1307 = vmatmul.f32.gmra.mxu0 %v1045
        %v1308 = vpop.f32.mrf.mxu0
        %v1309 = vadd.f32 0.0, %v1308
        %1310 = vmatmul.f32.gmra.mxu0 %v1048
        %v1311 = vpop.f32.mrf.mxu0
        %v1312 = vadd.f32 0.0, %v1311
        %1313 = vmatmul.f32.gmra.mxu0 %v1051
        %v1314 = vpop.f32.mrf.mxu0
        %v1315 = vadd.f32 0.0, %v1314
        %1316 = vmatmul.f32.gmra.mxu0 %v1054
        %v1317 = vpop.f32.mrf.mxu0
        %v1318 = vadd.f32 0.0, %v1317
        %1319 = vmatmul.f32.gmra.mxu0 %v1057
        %v1320 = vpop.f32.mrf.mxu0
        %v1321 = vadd.f32 0.0, %v1320
        %1322 = vmatmul.f32.gmra.mxu0 %v1060
        %v1323 = vpop.f32.mrf.mxu0
        %v1324 = vadd.f32 0.0, %v1323
        %1325 = vmatmul.f32.gmra.mxu0 %v1063
        %v1326 = vpop.f32.mrf.mxu0
        %v1327 = vadd.f32 0.0, %v1326
        %1328 = vmatmul.f32.gmra.mxu0 %v1066
        %v1329 = vpop.f32.mrf.mxu0
        %v1330 = vadd.f32 0.0, %v1329
        %1331 = vmatmul.f32.gmra.mxu0 %v1217
        %v1332 = vpop.f32.mrf.mxu0
        %v1333 = vadd.f32 0.0, %v1332
        %1334 = vmatmul.f32.gmra.mxu0 %v1220
        %v1335 = vpop.f32.mrf.mxu0
        %v1336 = vadd.f32 0.0, %v1335
        %1337 = vdwg.mxu0
        %v1338 = vadd.f32 %v1184, %v1243
        %v1339 = vadd.f32 %v1185, %v1246
        %v1340 = vadd.f32 %v1186, %v1249
        %v1341 = vadd.f32 %v1187, %v1252
        %v1342 = vadd.f32 %v1188, %v1255
        %v1343 = vadd.f32 %v1189, %v1258
        %v1344 = vadd.f32 %v1190, %v1261
        %v1345 = vadd.f32 %v1191, %v1264
        %v1346 = vadd.f32 %v1192, %v1267
        %v1347 = vadd.f32 %v1193, %v1270
        %v1348 = vadd.f32 %v1194, %v1273
        %v1349 = vadd.f32 %v1195, %v1276
        %v1350 = vadd.f32 %v1196, %v1279
        %v1351 = vadd.f32 %v1197, %v1282
        %v1352 = vadd.f32 %v1198, %v1285
        %v1353 = vadd.f32 %v1199, %v1288
        %v1354 = vadd.f32 %v1200, %v1291
        %v1355 = vadd.f32 %v1201, %v1294
        %v1356 = vadd.f32 %v1202, %v1297
        %v1357 = vadd.f32 %v1203, %v1300
        %v1358 = vadd.f32 %v1204, %v1303
        %v1359 = vadd.f32 %v1205, %v1306
        %v1360 = vadd.f32 %v1206, %v1309
        %v1361 = vadd.f32 %v1207, %v1312
        %v1362 = vadd.f32 %v1208, %v1315
        %v1363 = vadd.f32 %v1209, %v1318
        %v1364 = vadd.f32 %v1210, %v1321
        %v1365 = vadd.f32 %v1211, %v1324
        %v1366 = vadd.f32 %v1212, %v1327
        %v1367 = vadd.f32 %v1213, %v1330
        %v1368 = vadd.f32 %v1214, %v1333
        %v1369 = vadd.f32 %v1215, %v1336
        %v1371 = vsel %vm223, %v970, 0
        %v1374 = vsel %vm223, %v971, 0
        %v1377 = vsel %vm479, %v341, 0
        %1379 = vmatpush.msra.mxu0 0.0
        %1380 = vmatpush.msra.mxu0 0.0
        %1381 = vmatpush.msra.mxu0 0.0
        %1382 = vmatpush.msra.mxu0 0.0
        %1383 = vmatpush.msra.mxu0 0.0
        %1384 = vmatpush.msra.mxu0 0.0
        %1385 = vmatpush.msra.mxu0 0.0
        %1386 = vmatpush.msra.mxu0 0.0
        %1387 = vmatpush.msra.mxu0 0.0
        %1388 = vmatpush.msra.mxu0 0.0
        %1389 = vmatpush.msra.mxu0 0.0
        %1390 = vmatpush.msra.mxu0 0.0
        %1391 = vmatpush.msra.mxu0 0.0
        %1392 = vmatpush.msra.mxu0 0.0
        %1393 = vmatpush.msra.mxu0 0.0
        %1394 = vmatpush.msra.mxu0 %v1377
        %1395 = vmatmul.f32.gmra.mxu0 %v985
        %v1396 = vpop.f32.mrf.mxu0
        %v1397 = vadd.f32 0.0, %v1396
        %1398 = vmatmul.f32.gmra.mxu0 %v988
        %v1399 = vpop.f32.mrf.mxu0
        %v1400 = vadd.f32 0.0, %v1399
        %1401 = vmatmul.f32.gmra.mxu0 %v991
        %v1402 = vpop.f32.mrf.mxu0
        %v1403 = vadd.f32 0.0, %v1402
        %1404 = vmatmul.f32.gmra.mxu0 %v994
        %v1405 = vpop.f32.mrf.mxu0
        %v1406 = vadd.f32 0.0, %v1405
        %1407 = vmatmul.f32.gmra.mxu0 %v997
        %v1408 = vpop.f32.mrf.mxu0
        %v1409 = vadd.f32 0.0, %v1408
        %1410 = vmatmul.f32.gmra.mxu0 %v1000
        %v1411 = vpop.f32.mrf.mxu0
        %v1412 = vadd.f32 0.0, %v1411
        %1413 = vmatmul.f32.gmra.mxu0 %v1003
        %v1414 = vpop.f32.mrf.mxu0
        %v1415 = vadd.f32 0.0, %v1414
        %1416 = vmatmul.f32.gmra.mxu0 %v1006
        %v1417 = vpop.f32.mrf.mxu0
        %v1418 = vadd.f32 0.0, %v1417
        %1419 = vmatmul.f32.gmra.mxu0 %v1009
        %v1420 = vpop.f32.mrf.mxu0
        %v1421 = vadd.f32 0.0, %v1420
        %1422 = vmatmul.f32.gmra.mxu0 %v1012
        %v1423 = vpop.f32.mrf.mxu0
        %v1424 = vadd.f32 0.0, %v1423
        %1425 = vmatmul.f32.gmra.mxu0 %v1015
        %v1426 = vpop.f32.mrf.mxu0
        %v1427 = vadd.f32 0.0, %v1426
        %1428 = vmatmul.f32.gmra.mxu0 %v1018
        %v1429 = vpop.f32.mrf.mxu0
        %v1430 = vadd.f32 0.0, %v1429
        %1431 = vmatmul.f32.gmra.mxu0 %v1021
        %v1432 = vpop.f32.mrf.mxu0
        %v1433 = vadd.f32 0.0, %v1432
        %1434 = vmatmul.f32.gmra.mxu0 %v1024
        %v1435 = vpop.f32.mrf.mxu0
        %v1436 = vadd.f32 0.0, %v1435
        %1437 = vmatmul.f32.gmra.mxu0 %v1027
        %v1438 = vpop.f32.mrf.mxu0
        %v1439 = vadd.f32 0.0, %v1438
        %1440 = vmatmul.f32.gmra.mxu0 %v1030
        %v1441 = vpop.f32.mrf.mxu0
        %v1442 = vadd.f32 0.0, %v1441
        %1443 = vmatmul.f32.gmra.mxu0 %v1033
        %v1444 = vpop.f32.mrf.mxu0
        %v1445 = vadd.f32 0.0, %v1444
        %1446 = vmatmul.f32.gmra.mxu0 %v1036
        %v1447 = vpop.f32.mrf.mxu0
        %v1448 = vadd.f32 0.0, %v1447
        %1449 = vmatmul.f32.gmra.mxu0 %v1039
        %v1450 = vpop.f32.mrf.mxu0
        %v1451 = vadd.f32 0.0, %v1450
        %1452 = vmatmul.f32.gmra.mxu0 %v1042
        %v1453 = vpop.f32.mrf.mxu0
        %v1454 = vadd.f32 0.0, %v1453
        %1455 = vmatmul.f32.gmra.mxu0 %v1045
        %v1456 = vpop.f32.mrf.mxu0
        %v1457 = vadd.f32 0.0, %v1456
        %1458 = vmatmul.f32.gmra.mxu0 %v1048
        %v1459 = vpop.f32.mrf.mxu0
        %v1460 = vadd.f32 0.0, %v1459
        %1461 = vmatmul.f32.gmra.mxu0 %v1051
        %v1462 = vpop.f32.mrf.mxu0
        %v1463 = vadd.f32 0.0, %v1462
        %1464 = vmatmul.f32.gmra.mxu0 %v1054
        %v1465 = vpop.f32.mrf.mxu0
        %v1466 = vadd.f32 0.0, %v1465
        %1467 = vmatmul.f32.gmra.mxu0 %v1057
        %v1468 = vpop.f32.mrf.mxu0
        %v1469 = vadd.f32 0.0, %v1468
        %1470 = vmatmul.f32.gmra.mxu0 %v1060
        %v1471 = vpop.f32.mrf.mxu0
        %v1472 = vadd.f32 0.0, %v1471
        %1473 = vmatmul.f32.gmra.mxu0 %v1063
        %v1474 = vpop.f32.mrf.mxu0
        %v1475 = vadd.f32 0.0, %v1474
        %1476 = vmatmul.f32.gmra.mxu0 %v1066
        %v1477 = vpop.f32.mrf.mxu0
        %v1478 = vadd.f32 0.0, %v1477
        %1479 = vmatmul.f32.gmra.mxu0 %v1217
        %v1480 = vpop.f32.mrf.mxu0
        %v1481 = vadd.f32 0.0, %v1480
        %1482 = vmatmul.f32.gmra.mxu0 %v1220
        %v1483 = vpop.f32.mrf.mxu0
        %v1484 = vadd.f32 0.0, %v1483
        %1485 = vmatmul.f32.gmra.mxu0 %v1371
        %v1486 = vpop.f32.mrf.mxu0
        %v1487 = vadd.f32 0.0, %v1486
        %1488 = vmatmul.f32.gmra.mxu0 %v1374
        %v1489 = vpop.f32.mrf.mxu0
        %v1490 = vadd.f32 0.0, %v1489
        %1491 = vdwg.mxu0
        %v1492 = vadd.f32 %v1338, %v1397
        %v1493 = vadd.f32 %v1339, %v1400
        %v1494 = vadd.f32 %v1340, %v1403
        %v1495 = vadd.f32 %v1341, %v1406
        %v1496 = vadd.f32 %v1342, %v1409
        %v1497 = vadd.f32 %v1343, %v1412
        %v1498 = vadd.f32 %v1344, %v1415
        %v1499 = vadd.f32 %v1345, %v1418
        %v1500 = vadd.f32 %v1346, %v1421
        %v1501 = vadd.f32 %v1347, %v1424
        %v1502 = vadd.f32 %v1348, %v1427
        %v1503 = vadd.f32 %v1349, %v1430
        %v1504 = vadd.f32 %v1350, %v1433
        %v1505 = vadd.f32 %v1351, %v1436
        %v1506 = vadd.f32 %v1352, %v1439
        %v1507 = vadd.f32 %v1353, %v1442
        %v1508 = vadd.f32 %v1354, %v1445
        %v1509 = vadd.f32 %v1355, %v1448
        %v1510 = vadd.f32 %v1356, %v1451
        %v1511 = vadd.f32 %v1357, %v1454
        %v1512 = vadd.f32 %v1358, %v1457
        %v1513 = vadd.f32 %v1359, %v1460
        %v1514 = vadd.f32 %v1360, %v1463
        %v1515 = vadd.f32 %v1361, %v1466
        %v1516 = vadd.f32 %v1362, %v1469
        %v1517 = vadd.f32 %v1363, %v1472
        %v1518 = vadd.f32 %v1364, %v1475
        %v1519 = vadd.f32 %v1365, %v1478
        %v1520 = vadd.f32 %v1366, %v1481
        %v1521 = vadd.f32 %v1367, %v1484
        %v1522 = vadd.f32 %v1368, %v1487
        %v1523 = vadd.f32 %v1369, %v1490
        %v1524 = vld [vmem:[#allocation2 + $0x2] sm:$0xff]
        %v1525 = vld [vmem:[#allocation2 + $0xa] sm:$0xff]
        %v1526 = vld [vmem:[#allocation2 + $0x1a] sm:$0xff]
        %v1527 = vld [vmem:[#allocation2 + $0x22] sm:$0xff]
        %v1528 = vld [vmem:[#allocation2 + $0x32] sm:$0xff]
        %v1529 = vld [vmem:[#allocation2 + $0x3a] sm:$0xff]
        %v1530 = vld [vmem:[#allocation2 + $0x4a] sm:$0xff]
        %v1531 = vld [vmem:[#allocation2 + $0x52] sm:$0xff]
        %v1532 = vld [vmem:[#allocation2 + $0x62] sm:$0xff]
        %v1533 = vld [vmem:[#allocation2 + $0x6a] sm:$0xff]
        %v1534 = vld [vmem:[#allocation2 + $0x7a] sm:$0xff]
        %v1535 = vld [vmem:[#allocation2 + $0x82] sm:$0xff]
        %v1536 = vld [vmem:[#allocation2 + $0x92] sm:$0xff]
        %v1537 = vld [vmem:[#allocation2 + $0x9a] sm:$0xff]
        %v1538 = vld [vmem:[#allocation2 + $0xaa] sm:$0xff]
        %v1539 = vld [vmem:[#allocation2 + $0xb2] sm:$0xff]
        %v1540 = vld [vmem:[#allocation2 + $0xc2] sm:$0xff]
        %v1541 = vld [vmem:[#allocation2 + $0xca] sm:$0xff]
        %v1542 = vld [vmem:[#allocation2 + $0xda] sm:$0xff]
        %v1543 = vld [vmem:[#allocation2 + $0xe2] sm:$0xff]
        %v1544 = vld [vmem:[#allocation2 + $0xf2] sm:$0xff]
        %v1545 = vld [vmem:[#allocation2 + $0xfa] sm:$0xff]
        %v1546 = vld [vmem:[#allocation2 + $0x10a] sm:$0xff]
        %v1547 = vld [vmem:[#allocation2 + $0x112] sm:$0xff]
        %v1548 = vld [vmem:[#allocation2 + $0x122] sm:$0xff]
        %v1549 = vld [vmem:[#allocation2 + $0x12a] sm:$0xff]
        %v1550 = vld [vmem:[#allocation2 + $0x13a] sm:$0xff]
        %v1551 = vld [vmem:[#allocation2 + $0x142] sm:$0xff]
        %v1552 = vld [vmem:[#allocation2 + $0x152] sm:$0xff]
        %v1553 = vld [vmem:[#allocation2 + $0x15a] sm:$0xff]
        %v1554 = vld [vmem:[#allocation2 + $0x16a] sm:$0xff]
        %v1555 = vld [vmem:[#allocation2 + $0x172] sm:$0xff]
        %v1556 = vld [vmem:[#allocation2 + $0x182] sm:$0xff]
        %v1557 = vld [vmem:[#allocation2 + $0x18a] sm:$0xff]
        %v1558 = vld [vmem:[#allocation2 + $0x19a] sm:$0xff]
        %v1559 = vld [vmem:[#allocation2 + $0x1a2] sm:$0xff]
        %v1561 = vsel %vm223, %v1524, 0
        %v1564 = vsel %vm223, %v1525, 0
        %v1567 = vsel %vm223, %v1526, 0
        %v1570 = vsel %vm223, %v1527, 0
        %v1573 = vsel %vm223, %v1528, 0
        %v1576 = vsel %vm223, %v1529, 0
        %v1579 = vsel %vm223, %v1530, 0
        %v1582 = vsel %vm223, %v1531, 0
        %v1585 = vsel %vm223, %v1532, 0
        %v1588 = vsel %vm223, %v1533, 0
        %v1591 = vsel %vm223, %v1534, 0
        %v1594 = vsel %vm223, %v1535, 0
        %v1597 = vsel %vm223, %v1536, 0
        %v1600 = vsel %vm223, %v1537, 0
        %v1603 = vsel %vm223, %v1538, 0
        %v1606 = vsel %vm223, %v1539, 0
        %v1609 = vsel %vm223, %v1540, 0
        %v1612 = vsel %vm223, %v1541, 0
        %v1615 = vsel %vm223, %v1542, 0
        %v1618 = vsel %vm223, %v1543, 0
        %v1621 = vsel %vm223, %v1544, 0
        %v1624 = vsel %vm223, %v1545, 0
        %v1627 = vsel %vm223, %v1546, 0
        %v1630 = vsel %vm223, %v1547, 0
        %v1633 = vsel %vm223, %v1548, 0
        %v1636 = vsel %vm223, %v1549, 0
        %v1639 = vsel %vm223, %v1550, 0
        %v1642 = vsel %vm223, %v1551, 0
        %v1645 = vsel %vm223, %v1552, 0
        %v1648 = vsel %vm223, %v1553, 0
        %v1651 = vsel %vm223, %v1554, 0
        %v1654 = vsel %vm223, %v1555, 0
        %v1657 = vsel %vm479, %v336, 0
        %1659 = vmatpush.msra.mxu0 0.0
        %1660 = vmatpush.msra.mxu0 0.0
        %1661 = vmatpush.msra.mxu0 0.0
        %1662 = vmatpush.msra.mxu0 0.0
        %1663 = vmatpush.msra.mxu0 0.0
        %1664 = vmatpush.msra.mxu0 0.0
        %1665 = vmatpush.msra.mxu0 0.0
        %1666 = vmatpush.msra.mxu0 0.0
        %1667 = vmatpush.msra.mxu0 0.0
        %1668 = vmatpush.msra.mxu0 0.0
        %1669 = vmatpush.msra.mxu0 0.0
        %1670 = vmatpush.msra.mxu0 0.0
        %1671 = vmatpush.msra.mxu0 0.0
        %1672 = vmatpush.msra.mxu0 0.0
        %1673 = vmatpush.msra.mxu0 0.0
        %1674 = vmatpush.msra.mxu0 %v1657
        %1675 = vmatmul.f32.gmra.mxu0 %v1561
        %v1676 = vpop.f32.mrf.mxu0
        %v1677 = vadd.f32 0.0, %v1676
        %1678 = vmatmul.f32.gmra.mxu0 %v1564
        %v1679 = vpop.f32.mrf.mxu0
        %v1680 = vadd.f32 0.0, %v1679
        %1681 = vmatmul.f32.gmra.mxu0 %v1567
        %v1682 = vpop.f32.mrf.mxu0
        %v1683 = vadd.f32 0.0, %v1682
        %1684 = vmatmul.f32.gmra.mxu0 %v1570
        %v1685 = vpop.f32.mrf.mxu0
        %v1686 = vadd.f32 0.0, %v1685
        %1687 = vmatmul.f32.gmra.mxu0 %v1573
        %v1688 = vpop.f32.mrf.mxu0
        %v1689 = vadd.f32 0.0, %v1688
        %1690 = vmatmul.f32.gmra.mxu0 %v1576
        %v1691 = vpop.f32.mrf.mxu0
        %v1692 = vadd.f32 0.0, %v1691
        %1693 = vmatmul.f32.gmra.mxu0 %v1579
        %v1694 = vpop.f32.mrf.mxu0
        %v1695 = vadd.f32 0.0, %v1694
        %1696 = vmatmul.f32.gmra.mxu0 %v1582
        %v1697 = vpop.f32.mrf.mxu0
        %v1698 = vadd.f32 0.0, %v1697
        %1699 = vmatmul.f32.gmra.mxu0 %v1585
        %v1700 = vpop.f32.mrf.mxu0
        %v1701 = vadd.f32 0.0, %v1700
        %1702 = vmatmul.f32.gmra.mxu0 %v1588
        %v1703 = vpop.f32.mrf.mxu0
        %v1704 = vadd.f32 0.0, %v1703
        %1705 = vmatmul.f32.gmra.mxu0 %v1591
        %v1706 = vpop.f32.mrf.mxu0
        %v1707 = vadd.f32 0.0, %v1706
        %1708 = vmatmul.f32.gmra.mxu0 %v1594
        %v1709 = vpop.f32.mrf.mxu0
        %v1710 = vadd.f32 0.0, %v1709
        %1711 = vmatmul.f32.gmra.mxu0 %v1597
        %v1712 = vpop.f32.mrf.mxu0
        %v1713 = vadd.f32 0.0, %v1712
        %1714 = vmatmul.f32.gmra.mxu0 %v1600
        %v1715 = vpop.f32.mrf.mxu0
        %v1716 = vadd.f32 0.0, %v1715
        %1717 = vmatmul.f32.gmra.mxu0 %v1603
        %v1718 = vpop.f32.mrf.mxu0
        %v1719 = vadd.f32 0.0, %v1718
        %1720 = vmatmul.f32.gmra.mxu0 %v1606
        %v1721 = vpop.f32.mrf.mxu0
        %v1722 = vadd.f32 0.0, %v1721
        %1723 = vmatmul.f32.gmra.mxu0 %v1609
        %v1724 = vpop.f32.mrf.mxu0
        %v1725 = vadd.f32 0.0, %v1724
        %1726 = vmatmul.f32.gmra.mxu0 %v1612
        %v1727 = vpop.f32.mrf.mxu0
        %v1728 = vadd.f32 0.0, %v1727
        %1729 = vmatmul.f32.gmra.mxu0 %v1615
        %v1730 = vpop.f32.mrf.mxu0
        %v1731 = vadd.f32 0.0, %v1730
        %1732 = vmatmul.f32.gmra.mxu0 %v1618
        %v1733 = vpop.f32.mrf.mxu0
        %v1734 = vadd.f32 0.0, %v1733
        %1735 = vmatmul.f32.gmra.mxu0 %v1621
        %v1736 = vpop.f32.mrf.mxu0
        %v1737 = vadd.f32 0.0, %v1736
        %1738 = vmatmul.f32.gmra.mxu0 %v1624
        %v1739 = vpop.f32.mrf.mxu0
        %v1740 = vadd.f32 0.0, %v1739
        %1741 = vmatmul.f32.gmra.mxu0 %v1627
        %v1742 = vpop.f32.mrf.mxu0
        %v1743 = vadd.f32 0.0, %v1742
        %1744 = vmatmul.f32.gmra.mxu0 %v1630
        %v1745 = vpop.f32.mrf.mxu0
        %v1746 = vadd.f32 0.0, %v1745
        %1747 = vmatmul.f32.gmra.mxu0 %v1633
        %v1748 = vpop.f32.mrf.mxu0
        %v1749 = vadd.f32 0.0, %v1748
        %1750 = vmatmul.f32.gmra.mxu0 %v1636
        %v1751 = vpop.f32.mrf.mxu0
        %v1752 = vadd.f32 0.0, %v1751
        %1753 = vmatmul.f32.gmra.mxu0 %v1639
        %v1754 = vpop.f32.mrf.mxu0
        %v1755 = vadd.f32 0.0, %v1754
        %1756 = vmatmul.f32.gmra.mxu0 %v1642
        %v1757 = vpop.f32.mrf.mxu0
        %v1758 = vadd.f32 0.0, %v1757
        %1759 = vmatmul.f32.gmra.mxu0 %v1645
        %v1760 = vpop.f32.mrf.mxu0
        %v1761 = vadd.f32 0.0, %v1760
        %1762 = vmatmul.f32.gmra.mxu0 %v1648
        %v1763 = vpop.f32.mrf.mxu0
        %v1764 = vadd.f32 0.0, %v1763
        %1765 = vmatmul.f32.gmra.mxu0 %v1651
        %v1766 = vpop.f32.mrf.mxu0
        %v1767 = vadd.f32 0.0, %v1766
        %1768 = vmatmul.f32.gmra.mxu0 %v1654
        %v1769 = vpop.f32.mrf.mxu0
        %v1770 = vadd.f32 0.0, %v1769
        %1771 = vdwg.mxu0
        %v1772 = vadd.f32 %v1492, %v1677
        %v1773 = vadd.f32 %v1493, %v1680
        %v1774 = vadd.f32 %v1494, %v1683
        %v1775 = vadd.f32 %v1495, %v1686
        %v1776 = vadd.f32 %v1496, %v1689
        %v1777 = vadd.f32 %v1497, %v1692
        %v1778 = vadd.f32 %v1498, %v1695
        %v1779 = vadd.f32 %v1499, %v1698
        %v1780 = vadd.f32 %v1500, %v1701
        %v1781 = vadd.f32 %v1501, %v1704
        %v1782 = vadd.f32 %v1502, %v1707
        %v1783 = vadd.f32 %v1503, %v1710
        %v1784 = vadd.f32 %v1504, %v1713
        %v1785 = vadd.f32 %v1505, %v1716
        %v1786 = vadd.f32 %v1506, %v1719
        %v1787 = vadd.f32 %v1507, %v1722
        %v1788 = vadd.f32 %v1508, %v1725
        %v1789 = vadd.f32 %v1509, %v1728
        %v1790 = vadd.f32 %v1510, %v1731
        %v1791 = vadd.f32 %v1511, %v1734
        %v1792 = vadd.f32 %v1512, %v1737
        %v1793 = vadd.f32 %v1513, %v1740
        %v1794 = vadd.f32 %v1514, %v1743
        %v1795 = vadd.f32 %v1515, %v1746
        %v1796 = vadd.f32 %v1516, %v1749
        %v1797 = vadd.f32 %v1517, %v1752
        %v1798 = vadd.f32 %v1518, %v1755
        %v1799 = vadd.f32 %v1519, %v1758
        %v1800 = vadd.f32 %v1520, %v1761
        %v1801 = vadd.f32 %v1521, %v1764
        %v1802 = vadd.f32 %v1522, %v1767
        %v1803 = vadd.f32 %v1523, %v1770
        %v1805 = vsel %vm223, %v1556, 0
        %v1808 = vsel %vm223, %v1557, 0
        %v1811 = vsel %vm479, %v339, 0
        %1813 = vmatpush.msra.mxu0 0.0
        %1814 = vmatpush.msra.mxu0 0.0
        %1815 = vmatpush.msra.mxu0 0.0
        %1816 = vmatpush.msra.mxu0 0.0
        %1817 = vmatpush.msra.mxu0 0.0
        %1818 = vmatpush.msra.mxu0 0.0
        %1819 = vmatpush.msra.mxu0 0.0
        %1820 = vmatpush.msra.mxu0 0.0
        %1821 = vmatpush.msra.mxu0 0.0
        %1822 = vmatpush.msra.mxu0 0.0
        %1823 = vmatpush.msra.mxu0 0.0
        %1824 = vmatpush.msra.mxu0 0.0
        %1825 = vmatpush.msra.mxu0 0.0
        %1826 = vmatpush.msra.mxu0 0.0
        %1827 = vmatpush.msra.mxu0 0.0
        %1828 = vmatpush.msra.mxu0 %v1811
        %1829 = vmatmul.f32.gmra.mxu0 %v1567
        %v1830 = vpop.f32.mrf.mxu0
        %v1831 = vadd.f32 0.0, %v1830
        %1832 = vmatmul.f32.gmra.mxu0 %v1570
        %v1833 = vpop.f32.mrf.mxu0
        %v1834 = vadd.f32 0.0, %v1833
        %1835 = vmatmul.f32.gmra.mxu0 %v1573
        %v1836 = vpop.f32.mrf.mxu0
        %v1837 = vadd.f32 0.0, %v1836
        %1838 = vmatmul.f32.gmra.mxu0 %v1576
        %v1839 = vpop.f32.mrf.mxu0
        %v1840 = vadd.f32 0.0, %v1839
        %1841 = vmatmul.f32.gmra.mxu0 %v1579
        %v1842 = vpop.f32.mrf.mxu0
        %v1843 = vadd.f32 0.0, %v1842
        %1844 = vmatmul.f32.gmra.mxu0 %v1582
        %v1845 = vpop.f32.mrf.mxu0
        %v1846 = vadd.f32 0.0, %v1845
        %1847 = vmatmul.f32.gmra.mxu0 %v1585
        %v1848 = vpop.f32.mrf.mxu0
        %v1849 = vadd.f32 0.0, %v1848
        %1850 = vmatmul.f32.gmra.mxu0 %v1588
        %v1851 = vpop.f32.mrf.mxu0
        %v1852 = vadd.f32 0.0, %v1851
        %1853 = vmatmul.f32.gmra.mxu0 %v1591
        %v1854 = vpop.f32.mrf.mxu0
        %v1855 = vadd.f32 0.0, %v1854
        %1856 = vmatmul.f32.gmra.mxu0 %v1594
        %v1857 = vpop.f32.mrf.mxu0
        %v1858 = vadd.f32 0.0, %v1857
        %1859 = vmatmul.f32.gmra.mxu0 %v1597
        %v1860 = vpop.f32.mrf.mxu0
        %v1861 = vadd.f32 0.0, %v1860
        %1862 = vmatmul.f32.gmra.mxu0 %v1600
        %v1863 = vpop.f32.mrf.mxu0
        %v1864 = vadd.f32 0.0, %v1863
        %1865 = vmatmul.f32.gmra.mxu0 %v1603
        %v1866 = vpop.f32.mrf.mxu0
        %v1867 = vadd.f32 0.0, %v1866
        %1868 = vmatmul.f32.gmra.mxu0 %v1606
        %v1869 = vpop.f32.mrf.mxu0
        %v1870 = vadd.f32 0.0, %v1869
        %1871 = vmatmul.f32.gmra.mxu0 %v1609
        %v1872 = vpop.f32.mrf.mxu0
        %v1873 = vadd.f32 0.0, %v1872
        %1874 = vmatmul.f32.gmra.mxu0 %v1612
        %v1875 = vpop.f32.mrf.mxu0
        %v1876 = vadd.f32 0.0, %v1875
        %1877 = vmatmul.f32.gmra.mxu0 %v1615
        %v1878 = vpop.f32.mrf.mxu0
        %v1879 = vadd.f32 0.0, %v1878
        %1880 = vmatmul.f32.gmra.mxu0 %v1618
        %v1881 = vpop.f32.mrf.mxu0
        %v1882 = vadd.f32 0.0, %v1881
        %1883 = vmatmul.f32.gmra.mxu0 %v1621
        %v1884 = vpop.f32.mrf.mxu0
        %v1885 = vadd.f32 0.0, %v1884
        %1886 = vmatmul.f32.gmra.mxu0 %v1624
        %v1887 = vpop.f32.mrf.mxu0
        %v1888 = vadd.f32 0.0, %v1887
        %1889 = vmatmul.f32.gmra.mxu0 %v1627
        %v1890 = vpop.f32.mrf.mxu0
        %v1891 = vadd.f32 0.0, %v1890
        %1892 = vmatmul.f32.gmra.mxu0 %v1630
        %v1893 = vpop.f32.mrf.mxu0
        %v1894 = vadd.f32 0.0, %v1893
        %1895 = vmatmul.f32.gmra.mxu0 %v1633
        %v1896 = vpop.f32.mrf.mxu0
        %v1897 = vadd.f32 0.0, %v1896
        %1898 = vmatmul.f32.gmra.mxu0 %v1636
        %v1899 = vpop.f32.mrf.mxu0
        %v1900 = vadd.f32 0.0, %v1899
        %1901 = vmatmul.f32.gmra.mxu0 %v1639
        %v1902 = vpop.f32.mrf.mxu0
        %v1903 = vadd.f32 0.0, %v1902
        %1904 = vmatmul.f32.gmra.mxu0 %v1642
        %v1905 = vpop.f32.mrf.mxu0
        %v1906 = vadd.f32 0.0, %v1905
        %1907 = vmatmul.f32.gmra.mxu0 %v1645
        %v1908 = vpop.f32.mrf.mxu0
        %v1909 = vadd.f32 0.0, %v1908
        %1910 = vmatmul.f32.gmra.mxu0 %v1648
        %v1911 = vpop.f32.mrf.mxu0
        %v1912 = vadd.f32 0.0, %v1911
        %1913 = vmatmul.f32.gmra.mxu0 %v1651
        %v1914 = vpop.f32.mrf.mxu0
        %v1915 = vadd.f32 0.0, %v1914
        %1916 = vmatmul.f32.gmra.mxu0 %v1654
        %v1917 = vpop.f32.mrf.mxu0
        %v1918 = vadd.f32 0.0, %v1917
        %1919 = vmatmul.f32.gmra.mxu0 %v1805
        %v1920 = vpop.f32.mrf.mxu0
        %v1921 = vadd.f32 0.0, %v1920
        %1922 = vmatmul.f32.gmra.mxu0 %v1808
        %v1923 = vpop.f32.mrf.mxu0
        %v1924 = vadd.f32 0.0, %v1923
        %1925 = vdwg.mxu0
        %v1926 = vadd.f32 %v1772, %v1831
        %v1927 = vadd.f32 %v1773, %v1834
        %v1928 = vadd.f32 %v1774, %v1837
        %v1929 = vadd.f32 %v1775, %v1840
        %v1930 = vadd.f32 %v1776, %v1843
        %v1931 = vadd.f32 %v1777, %v1846
        %v1932 = vadd.f32 %v1778, %v1849
        %v1933 = vadd.f32 %v1779, %v1852
        %v1934 = vadd.f32 %v1780, %v1855
        %v1935 = vadd.f32 %v1781, %v1858
        %v1936 = vadd.f32 %v1782, %v1861
        %v1937 = vadd.f32 %v1783, %v1864
        %v1938 = vadd.f32 %v1784, %v1867
        %v1939 = vadd.f32 %v1785, %v1870
        %v1940 = vadd.f32 %v1786, %v1873
        %v1941 = vadd.f32 %v1787, %v1876
        %v1942 = vadd.f32 %v1788, %v1879
        %v1943 = vadd.f32 %v1789, %v1882
        %v1944 = vadd.f32 %v1790, %v1885
        %v1945 = vadd.f32 %v1791, %v1888
        %v1946 = vadd.f32 %v1792, %v1891
        %v1947 = vadd.f32 %v1793, %v1894
        %v1948 = vadd.f32 %v1794, %v1897
        %v1949 = vadd.f32 %v1795, %v1900
        %v1950 = vadd.f32 %v1796, %v1903
        %v1951 = vadd.f32 %v1797, %v1906
        %v1952 = vadd.f32 %v1798, %v1909
        %v1953 = vadd.f32 %v1799, %v1912
        %v1954 = vadd.f32 %v1800, %v1915
        %v1955 = vadd.f32 %v1801, %v1918
        %v1956 = vadd.f32 %v1802, %v1921
        %v1957 = vadd.f32 %v1803, %v1924
        %v1959 = vsel %vm223, %v1558, 0
        %v1962 = vsel %vm223, %v1559, 0
        %v1965 = vsel %vm479, %v342, 0
        %1967 = vmatpush.msra.mxu0 0.0
        %1968 = vmatpush.msra.mxu0 0.0
        %1969 = vmatpush.msra.mxu0 0.0
        %1970 = vmatpush.msra.mxu0 0.0
        %1971 = vmatpush.msra.mxu0 0.0
        %1972 = vmatpush.msra.mxu0 0.0
        %1973 = vmatpush.msra.mxu0 0.0
        %1974 = vmatpush.msra.mxu0 0.0
        %1975 = vmatpush.msra.mxu0 0.0
        %1976 = vmatpush.msra.mxu0 0.0
        %1977 = vmatpush.msra.mxu0 0.0
        %1978 = vmatpush.msra.mxu0 0.0
        %1979 = vmatpush.msra.mxu0 0.0
        %1980 = vmatpush.msra.mxu0 0.0
        %1981 = vmatpush.msra.mxu0 0.0
        %1982 = vmatpush.msra.mxu0 %v1965
        %1983 = vmatmul.f32.gmra.mxu0 %v1573
        %v1984 = vpop.f32.mrf.mxu0
        %v1985 = vadd.f32 0.0, %v1984
        %1986 = vmatmul.f32.gmra.mxu0 %v1576
        %v1987 = vpop.f32.mrf.mxu0
        %v1988 = vadd.f32 0.0, %v1987
        %1989 = vmatmul.f32.gmra.mxu0 %v1579
        %v1990 = vpop.f32.mrf.mxu0
        %v1991 = vadd.f32 0.0, %v1990
        %1992 = vmatmul.f32.gmra.mxu0 %v1582
        %v1993 = vpop.f32.mrf.mxu0
        %v1994 = vadd.f32 0.0, %v1993
        %1995 = vmatmul.f32.gmra.mxu0 %v1585
        %v1996 = vpop.f32.mrf.mxu0
        %v1997 = vadd.f32 0.0, %v1996
        %1998 = vmatmul.f32.gmra.mxu0 %v1588
        %v1999 = vpop.f32.mrf.mxu0
        %v2000 = vadd.f32 0.0, %v1999
        %2001 = vmatmul.f32.gmra.mxu0 %v1591
        %v2002 = vpop.f32.mrf.mxu0
        %v2003 = vadd.f32 0.0, %v2002
        %2004 = vmatmul.f32.gmra.mxu0 %v1594
        %v2005 = vpop.f32.mrf.mxu0
        %v2006 = vadd.f32 0.0, %v2005
        %2007 = vmatmul.f32.gmra.mxu0 %v1597
        %v2008 = vpop.f32.mrf.mxu0
        %v2009 = vadd.f32 0.0, %v2008
        %2010 = vmatmul.f32.gmra.mxu0 %v1600
        %v2011 = vpop.f32.mrf.mxu0
        %v2012 = vadd.f32 0.0, %v2011
        %2013 = vmatmul.f32.gmra.mxu0 %v1603
        %v2014 = vpop.f32.mrf.mxu0
        %v2015 = vadd.f32 0.0, %v2014
        %2016 = vmatmul.f32.gmra.mxu0 %v1606
        %v2017 = vpop.f32.mrf.mxu0
        %v2018 = vadd.f32 0.0, %v2017
        %2019 = vmatmul.f32.gmra.mxu0 %v1609
        %v2020 = vpop.f32.mrf.mxu0
        %v2021 = vadd.f32 0.0, %v2020
        %2022 = vmatmul.f32.gmra.mxu0 %v1612
        %v2023 = vpop.f32.mrf.mxu0
        %v2024 = vadd.f32 0.0, %v2023
        %2025 = vmatmul.f32.gmra.mxu0 %v1615
        %v2026 = vpop.f32.mrf.mxu0
        %v2027 = vadd.f32 0.0, %v2026
        %2028 = vmatmul.f32.gmra.mxu0 %v1618
        %v2029 = vpop.f32.mrf.mxu0
        %v2030 = vadd.f32 0.0, %v2029
        %2031 = vmatmul.f32.gmra.mxu0 %v1621
        %v2032 = vpop.f32.mrf.mxu0
        %v2033 = vadd.f32 0.0, %v2032
        %2034 = vmatmul.f32.gmra.mxu0 %v1624
        %v2035 = vpop.f32.mrf.mxu0
        %v2036 = vadd.f32 0.0, %v2035
        %2037 = vmatmul.f32.gmra.mxu0 %v1627
        %v2038 = vpop.f32.mrf.mxu0
        %v2039 = vadd.f32 0.0, %v2038
        %2040 = vmatmul.f32.gmra.mxu0 %v1630
        %v2041 = vpop.f32.mrf.mxu0
        %v2042 = vadd.f32 0.0, %v2041
        %2043 = vmatmul.f32.gmra.mxu0 %v1633
        %v2044 = vpop.f32.mrf.mxu0
        %v2045 = vadd.f32 0.0, %v2044
        %2046 = vmatmul.f32.gmra.mxu0 %v1636
        %v2047 = vpop.f32.mrf.mxu0
        %v2048 = vadd.f32 0.0, %v2047
        %2049 = vmatmul.f32.gmra.mxu0 %v1639
        %v2050 = vpop.f32.mrf.mxu0
        %v2051 = vadd.f32 0.0, %v2050
        %2052 = vmatmul.f32.gmra.mxu0 %v1642
        %v2053 = vpop.f32.mrf.mxu0
        %v2054 = vadd.f32 0.0, %v2053
        %2055 = vmatmul.f32.gmra.mxu0 %v1645
        %v2056 = vpop.f32.mrf.mxu0
        %v2057 = vadd.f32 0.0, %v2056
        %2058 = vmatmul.f32.gmra.mxu0 %v1648
        %v2059 = vpop.f32.mrf.mxu0
        %v2060 = vadd.f32 0.0, %v2059
        %2061 = vmatmul.f32.gmra.mxu0 %v1651
        %v2062 = vpop.f32.mrf.mxu0
        %v2063 = vadd.f32 0.0, %v2062
        %2064 = vmatmul.f32.gmra.mxu0 %v1654
        %v2065 = vpop.f32.mrf.mxu0
        %v2066 = vadd.f32 0.0, %v2065
        %2067 = vmatmul.f32.gmra.mxu0 %v1805
        %v2068 = vpop.f32.mrf.mxu0
        %v2069 = vadd.f32 0.0, %v2068
        %2070 = vmatmul.f32.gmra.mxu0 %v1808
        %v2071 = vpop.f32.mrf.mxu0
        %v2072 = vadd.f32 0.0, %v2071
        %2073 = vmatmul.f32.gmra.mxu0 %v1959
        %v2074 = vpop.f32.mrf.mxu0
        %v2075 = vadd.f32 0.0, %v2074
        %2076 = vmatmul.f32.gmra.mxu0 %v1962
        %v2077 = vpop.f32.mrf.mxu0
        %v2078 = vadd.f32 0.0, %v2077
        %2079 = vdwg.mxu0
        %v2080 = vadd.f32 %v1926, %v1985
        %v2081 = vadd.f32 %v1927, %v1988
        %v2082 = vadd.f32 %v1928, %v1991
        %v2083 = vadd.f32 %v1929, %v1994
        %v2084 = vadd.f32 %v1930, %v1997
        %v2085 = vadd.f32 %v1931, %v2000
        %v2086 = vadd.f32 %v1932, %v2003
        %v2087 = vadd.f32 %v1933, %v2006
        %v2088 = vadd.f32 %v1934, %v2009
        %v2089 = vadd.f32 %v1935, %v2012
        %v2090 = vadd.f32 %v1936, %v2015
        %v2091 = vadd.f32 %v1937, %v2018
        %v2092 = vadd.f32 %v1938, %v2021
        %v2093 = vadd.f32 %v1939, %v2024
        %v2094 = vadd.f32 %v1940, %v2027
        %v2095 = vadd.f32 %v1941, %v2030
        %v2096 = vadd.f32 %v1942, %v2033
        %v2097 = vadd.f32 %v1943, %v2036
        %v2098 = vadd.f32 %v1944, %v2039
        %v2099 = vadd.f32 %v1945, %v2042
        %v2100 = vadd.f32 %v1946, %v2045
        %v2101 = vadd.f32 %v1947, %v2048
        %v2102 = vadd.f32 %v1948, %v2051
        %v2103 = vadd.f32 %v1949, %v2054
        %v2104 = vadd.f32 %v1950, %v2057
        %v2105 = vadd.f32 %v1951, %v2060
        %v2106 = vadd.f32 %v1952, %v2063
        %v2107 = vadd.f32 %v1953, %v2066
        %v2108 = vadd.f32 %v1954, %v2069
        %v2109 = vadd.f32 %v1955, %v2072
        %v2110 = vadd.f32 %v1956, %v2075
        %v2111 = vadd.f32 %v1957, %v2078
        %v2112 = vmax.f32 %v2080, 0.0
        %v2113 = vmax.f32 %v2081, 0.0
        %v2114 = vmax.f32 %v2082, 0.0
        %v2115 = vmax.f32 %v2083, 0.0
        %v2116 = vmax.f32 %v2084, 0.0
        %v2117 = vmax.f32 %v2085, 0.0
        %v2118 = vmax.f32 %v2086, 0.0
        %v2119 = vmax.f32 %v2087, 0.0
        %v2120 = vmax.f32 %v2088, 0.0
        %v2121 = vmax.f32 %v2089, 0.0
        %v2122 = vmax.f32 %v2090, 0.0
        %v2123 = vmax.f32 %v2091, 0.0
        %v2124 = vmax.f32 %v2092, 0.0
        %v2125 = vmax.f32 %v2093, 0.0
        %v2126 = vmax.f32 %v2094, 0.0
        %v2127 = vmax.f32 %v2095, 0.0
        %v2128 = vmax.f32 %v2096, 0.0
        %v2129 = vmax.f32 %v2097, 0.0
        %v2130 = vmax.f32 %v2098, 0.0
        %v2131 = vmax.f32 %v2099, 0.0
        %v2132 = vmax.f32 %v2100, 0.0
        %v2133 = vmax.f32 %v2101, 0.0
        %v2134 = vmax.f32 %v2102, 0.0
        %v2135 = vmax.f32 %v2103, 0.0
        %v2136 = vmax.f32 %v2104, 0.0
        %v2137 = vmax.f32 %v2105, 0.0
        %v2138 = vmax.f32 %v2106, 0.0
        %v2139 = vmax.f32 %v2107, 0.0
        %v2140 = vmax.f32 %v2108, 0.0
        %v2141 = vmax.f32 %v2109, 0.0
        %v2142 = vmax.f32 %v2110, 0.0
        %v2143 = vmax.f32 %v2111, 0.0
        %vm2144 = vcmask 261120
        %2145 = vst.msk [vmem:[#allocation3] sm:$0xff] %vm2144, 0.0
        %2146 = vst.msk [vmem:[#allocation3 + $0x8] sm:$0xff] %vm2144, 0.0
        %vm2147 = vcmask 254976
        %2148 = vst.msk [vmem:[#allocation3 + $0x10] sm:$0x3] %vm2147, 0.0
        %s2149 = scalar_lea.vmem [#allocation3], 408
        %2150 = vst.msk [vmem:[%s2149] sm:$0xff] %vm2144, 0.0
        %2151 = vst.msk [vmem:[%s2149 + $0x8] sm:$0xff] %vm2144, 0.0
        %2152 = vst.msk [vmem:[%s2149 + $0x10] sm:$0x3] %vm2147, 0.0
        %vm2153 = vcmask 253952
        %2154 = vst.msk [vmem:[#allocation3] sm:$0x1] %vm2153, 0.0
        %2155 = vst.msk [vmem:[#allocation3 + $0x18] sm:$0x1] %vm2153, 0.0
        %2156 = vst.msk [vmem:[#allocation3 + $0x30] sm:$0x1] %vm2153, 0.0
        %2157 = vst.msk [vmem:[#allocation3 + $0x48] sm:$0x1] %vm2153, 0.0
        %2158 = vst.msk [vmem:[#allocation3 + $0x60] sm:$0x1] %vm2153, 0.0
        %2159 = vst.msk [vmem:[#allocation3 + $0x78] sm:$0x1] %vm2153, 0.0
        %2160 = vst.msk [vmem:[#allocation3 + $0x90] sm:$0x1] %vm2153, 0.0
        %2161 = vst.msk [vmem:[#allocation3 + $0xa8] sm:$0x1] %vm2153, 0.0
        %2162 = vst.msk [vmem:[#allocation3 + $0xc0] sm:$0x1] %vm2153, 0.0
        %2163 = vst.msk [vmem:[#allocation3 + $0xd8] sm:$0x1] %vm2153, 0.0
        %2164 = vst.msk [vmem:[#allocation3 + $0xf0] sm:$0x1] %vm2153, 0.0
        %2165 = vst.msk [vmem:[#allocation3 + $0x108] sm:$0x1] %vm2153, 0.0
        %2166 = vst.msk [vmem:[#allocation3 + $0x120] sm:$0x1] %vm2153, 0.0
        %2167 = vst.msk [vmem:[#allocation3 + $0x138] sm:$0x1] %vm2153, 0.0
        %2168 = vst.msk [vmem:[#allocation3 + $0x150] sm:$0x1] %vm2153, 0.0
        %2169 = vst.msk [vmem:[#allocation3 + $0x168] sm:$0x1] %vm2153, 0.0
        %2170 = vst.msk [vmem:[#allocation3 + $0x180] sm:$0x1] %vm2153, 0.0
        %2171 = vst.msk [vmem:[#allocation3 + $0x198] sm:$0x1] %vm2153, 0.0
        %2172 = vst.msk [vmem:[#allocation3 + $0x11] sm:$0x1] %vm2153, 0.0
        %2173 = vst.msk [vmem:[#allocation3 + $0x29] sm:$0x1] %vm2153, 0.0
        %2174 = vst.msk [vmem:[#allocation3 + $0x41] sm:$0x1] %vm2153, 0.0
        %2175 = vst.msk [vmem:[#allocation3 + $0x59] sm:$0x1] %vm2153, 0.0
        %2176 = vst.msk [vmem:[#allocation3 + $0x71] sm:$0x1] %vm2153, 0.0
        %2177 = vst.msk [vmem:[#allocation3 + $0x89] sm:$0x1] %vm2153, 0.0
        %2178 = vst.msk [vmem:[#allocation3 + $0xa1] sm:$0x1] %vm2153, 0.0
        %2179 = vst.msk [vmem:[#allocation3 + $0xb9] sm:$0x1] %vm2153, 0.0
        %2180 = vst.msk [vmem:[#allocation3 + $0xd1] sm:$0x1] %vm2153, 0.0
        %2181 = vst.msk [vmem:[#allocation3 + $0xe9] sm:$0x1] %vm2153, 0.0
        %2182 = vst.msk [vmem:[#allocation3 + $0x101] sm:$0x1] %vm2153, 0.0
        %2183 = vst.msk [vmem:[#allocation3 + $0x119] sm:$0x1] %vm2153, 0.0
        %2184 = vst.msk [vmem:[#allocation3 + $0x131] sm:$0x1] %vm2153, 0.0
        %2185 = vst.msk [vmem:[#allocation3 + $0x149] sm:$0x1] %vm2153, 0.0
        %2186 = vst.msk [vmem:[#allocation3 + $0x161] sm:$0x1] %vm2153, 0.0
        %2187 = vst.msk [vmem:[#allocation3 + $0x179] sm:$0x1] %vm2153, 0.0
        %2188 = vst.msk [vmem:[#allocation3 + $0x191] sm:$0x1] %vm2153, 0.0
        %2189 = vst.msk [vmem:[#allocation3 + $0x1a9] sm:$0x1] %vm2153, 0.0
        %s2190 = scalar_lea.vmem [#allocation3], 24
        %2191 = vst.msk [vmem:[%s2190 + $0x1] sm:$0xff] %vm2144, %v2112
        %2192 = vst.msk [vmem:[%s2190 + $0x9] sm:$0xff] %vm2144, %v2113
        %2193 = vst.msk [vmem:[%s2190 + $0x19] sm:$0xff] %vm2144, %v2114
        %2194 = vst.msk [vmem:[%s2190 + $0x21] sm:$0xff] %vm2144, %v2115
        %2195 = vst.msk [vmem:[%s2190 + $0x31] sm:$0xff] %vm2144, %v2116
        %2196 = vst.msk [vmem:[%s2190 + $0x39] sm:$0xff] %vm2144, %v2117
        %2197 = vst.msk [vmem:[%s2190 + $0x49] sm:$0xff] %vm2144, %v2118
        %2198 = vst.msk [vmem:[%s2190 + $0x51] sm:$0xff] %vm2144, %v2119
        %2199 = vst.msk [vmem:[%s2190 + $0x61] sm:$0xff] %vm2144, %v2120
        %2200 = vst.msk [vmem:[%s2190 + $0x69] sm:$0xff] %vm2144, %v2121
        %2201 = vst.msk [vmem:[%s2190 + $0x79] sm:$0xff] %vm2144, %v2122
        %2202 = vst.msk [vmem:[%s2190 + $0x81] sm:$0xff] %vm2144, %v2123
        %2203 = vst.msk [vmem:[%s2190 + $0x91] sm:$0xff] %vm2144, %v2124
        %2204 = vst.msk [vmem:[%s2190 + $0x99] sm:$0xff] %vm2144, %v2125
        %2205 = vst.msk [vmem:[%s2190 + $0xa9] sm:$0xff] %vm2144, %v2126
        %2206 = vst.msk [vmem:[%s2190 + $0xb1] sm:$0xff] %vm2144, %v2127
        %2207 = vst.msk [vmem:[%s2190 + $0xc1] sm:$0xff] %vm2144, %v2128
        %2208 = vst.msk [vmem:[%s2190 + $0xc9] sm:$0xff] %vm2144, %v2129
        %2209 = vst.msk [vmem:[%s2190 + $0xd9] sm:$0xff] %vm2144, %v2130
        %2210 = vst.msk [vmem:[%s2190 + $0xe1] sm:$0xff] %vm2144, %v2131
        %2211 = vst.msk [vmem:[%s2190 + $0xf1] sm:$0xff] %vm2144, %v2132
        %2212 = vst.msk [vmem:[%s2190 + $0xf9] sm:$0xff] %vm2144, %v2133
        %2213 = vst.msk [vmem:[%s2190 + $0x109] sm:$0xff] %vm2144, %v2134
        %2214 = vst.msk [vmem:[%s2190 + $0x111] sm:$0xff] %vm2144, %v2135
        %2215 = vst.msk [vmem:[%s2190 + $0x121] sm:$0xff] %vm2144, %v2136
        %2216 = vst.msk [vmem:[%s2190 + $0x129] sm:$0xff] %vm2144, %v2137
        %2217 = vst.msk [vmem:[%s2190 + $0x139] sm:$0xff] %vm2144, %v2138
        %2218 = vst.msk [vmem:[%s2190 + $0x141] sm:$0xff] %vm2144, %v2139
        %2219 = vst.msk [vmem:[%s2190 + $0x151] sm:$0xff] %vm2144, %v2140
        %2220 = vst.msk [vmem:[%s2190 + $0x159] sm:$0xff] %vm2144, %v2141
        %2221 = vst.msk [vmem:[%s2190 + $0x169] sm:$0xff] %vm2144, %v2142
        %2222 = vst.msk [vmem:[%s2190 + $0x171] sm:$0xff] %vm2144, %v2143
        %v2223 = vld [vmem:[%s3] sm:$0xff]
        %v2224 = vld [vmem:[%s3 + $0x8] sm:$0xff]
        %v2225 = vld [vmem:[%s3 + $0x10] sm:$0xff]
        %v2226 = vld [vmem:[%s3 + $0x18] sm:$0xff]
        %v2227 = vld [vmem:[%s3 + $0x20] sm:$0xff]
        %v2228 = vld [vmem:[%s3 + $0x28] sm:$0xff]
        %v2229 = vld [vmem:[%s3 + $0x30] sm:$0xff]
        %v2230 = vld [vmem:[%s3 + $0x38] sm:$0xff]
        %v2231 = vld [vmem:[%s3 + $0x40] sm:$0xff]
        %v2232 = vld [vmem:[%s3 + $0x48] sm:$0xff]
        %v2233 = vld [vmem:[%s3 + $0x50] sm:$0xff]
        %v2234 = vld [vmem:[%s3 + $0x58] sm:$0xff]
        %v2235 = vld [vmem:[%s3 + $0x60] sm:$0xff]
        %v2236 = vld [vmem:[%s3 + $0x68] sm:$0xff]
        %v2237 = vld [vmem:[%s3 + $0x70] sm:$0xff]
        %v2238 = vld [vmem:[%s3 + $0x78] sm:$0xff]
        %v2239 = vld [vmem:[%s3 + $0x80] sm:$0xff]
        %v2240 = vld [vmem:[%s3 + $0x88] sm:$0xff]
        %v2241 = vld [vmem:[%s3 + $0x90] sm:$0xff]
        %v2242 = vld [vmem:[%s3 + $0x98] sm:$0xff]
        %v2243 = vld [vmem:[%s3 + $0xa0] sm:$0xff]
        %v2244 = vld [vmem:[%s3 + $0xa8] sm:$0xff]
        %v2245 = vld [vmem:[%s3 + $0xb0] sm:$0xff]
        %v2246 = vld [vmem:[%s3 + $0xb8] sm:$0xff]
        %v2247 = vld [vmem:[%s3 + $0xc0] sm:$0xff]
        %v2248 = vld [vmem:[%s3 + $0xc8] sm:$0xff]
        %v2249 = vld [vmem:[%s3 + $0xd0] sm:$0xff]
        %v2250 = vld [vmem:[%s3 + $0xd8] sm:$0xff]
        %v2251 = vld [vmem:[%s3 + $0xe0] sm:$0xff]
        %v2252 = vld [vmem:[%s3 + $0xe8] sm:$0xff]
        %v2253 = vld [vmem:[%s3 + $0xf0] sm:$0xff]
        %v2254 = vld [vmem:[%s3 + $0xf8] sm:$0xff]
        %v2255 = vld [vmem:[%s3 + $0x100] sm:$0xff]
        %v2256 = vld [vmem:[%s3 + $0x108] sm:$0xff]
        %v2257 = vld [vmem:[%s3 + $0x110] sm:$0xff]
        %v2258 = vld [vmem:[%s3 + $0x118] sm:$0xff]
        %v2259 = vld [vmem:[%s4] sm:$0x1]
        %v2261 = vperm.slane %v2259, 0
        %v2263 = vld [vmem:[#allocation3] sm:$0xff]
        %v2264 = vld [vmem:[#allocation3 + $0x8] sm:$0xff]
        %v2265 = vld [vmem:[#allocation3 + $0x18] sm:$0xff]
        %v2266 = vld [vmem:[#allocation3 + $0x20] sm:$0xff]
        %v2267 = vld [vmem:[#allocation3 + $0x30] sm:$0xff]
        %v2268 = vld [vmem:[#allocation3 + $0x38] sm:$0xff]
        %v2269 = vld [vmem:[#allocation3 + $0x48] sm:$0xff]
        %v2270 = vld [vmem:[#allocation3 + $0x50] sm:$0xff]
        %v2271 = vld [vmem:[#allocation3 + $0x60] sm:$0xff]
        %v2272 = vld [vmem:[#allocation3 + $0x68] sm:$0xff]
        %v2273 = vld [vmem:[#allocation3 + $0x78] sm:$0xff]
        %v2274 = vld [vmem:[#allocation3 + $0x80] sm:$0xff]
        %v2275 = vld [vmem:[#allocation3 + $0x90] sm:$0xff]
        %v2276 = vld [vmem:[#allocation3 + $0x98] sm:$0xff]
        %v2277 = vld [vmem:[#allocation3 + $0xa8] sm:$0xff]
        %v2278 = vld [vmem:[#allocation3 + $0xb0] sm:$0xff]
        %v2279 = vld [vmem:[#allocation3 + $0xc0] sm:$0xff]
        %v2280 = vld [vmem:[#allocation3 + $0xc8] sm:$0xff]
        %v2281 = vld [vmem:[#allocation3 + $0xd8] sm:$0xff]
        %v2282 = vld [vmem:[#allocation3 + $0xe0] sm:$0xff]
        %v2283 = vld [vmem:[#allocation3 + $0xf0] sm:$0xff]
        %v2284 = vld [vmem:[#allocation3 + $0xf8] sm:$0xff]
        %v2285 = vld [vmem:[#allocation3 + $0x108] sm:$0xff]
        %v2286 = vld [vmem:[#allocation3 + $0x110] sm:$0xff]
        %v2287 = vld [vmem:[#allocation3 + $0x120] sm:$0xff]
        %v2288 = vld [vmem:[#allocation3 + $0x128] sm:$0xff]
        %v2289 = vld [vmem:[#allocation3 + $0x138] sm:$0xff]
        %v2290 = vld [vmem:[#allocation3 + $0x140] sm:$0xff]
        %v2291 = vld [vmem:[#allocation3 + $0x150] sm:$0xff]
        %v2292 = vld [vmem:[#allocation3 + $0x158] sm:$0xff]
        %v2293 = vld [vmem:[#allocation3 + $0x168] sm:$0xff]
        %v2294 = vld [vmem:[#allocation3 + $0x170] sm:$0xff]
        %v2295 = vld [vmem:[#allocation3 + $0x180] sm:$0xff]
        %v2296 = vld [vmem:[#allocation3 + $0x188] sm:$0xff]
        %v2297 = vld [vmem:[#allocation3 + $0x198] sm:$0xff]
        %v2298 = vld [vmem:[#allocation3 + $0x1a0] sm:$0xff]
        %v2300 = vsel %vm2144, %v2263, 0
        %v2303 = vsel %vm2144, %v2264, 0
        %v2306 = vsel %vm2144, %v2265, 0
        %v2309 = vsel %vm2144, %v2266, 0
        %v2312 = vsel %vm2144, %v2267, 0
        %v2315 = vsel %vm2144, %v2268, 0
        %v2318 = vsel %vm2144, %v2269, 0
        %v2321 = vsel %vm2144, %v2270, 0
        %v2324 = vsel %vm2144, %v2271, 0
        %v2327 = vsel %vm2144, %v2272, 0
        %v2330 = vsel %vm2144, %v2273, 0
        %v2333 = vsel %vm2144, %v2274, 0
        %v2336 = vsel %vm2144, %v2275, 0
        %v2339 = vsel %vm2144, %v2276, 0
        %v2342 = vsel %vm2144, %v2277, 0
        %v2345 = vsel %vm2144, %v2278, 0
        %v2348 = vsel %vm2144, %v2279, 0
        %v2351 = vsel %vm2144, %v2280, 0
        %v2354 = vsel %vm2144, %v2281, 0
        %v2357 = vsel %vm2144, %v2282, 0
        %v2360 = vsel %vm2144, %v2283, 0
        %v2363 = vsel %vm2144, %v2284, 0
        %v2366 = vsel %vm2144, %v2285, 0
        %v2369 = vsel %vm2144, %v2286, 0
        %v2372 = vsel %vm2144, %v2287, 0
        %v2375 = vsel %vm2144, %v2288, 0
        %v2378 = vsel %vm2144, %v2289, 0
        %v2381 = vsel %vm2144, %v2290, 0
        %v2384 = vsel %vm2144, %v2291, 0
        %v2387 = vsel %vm2144, %v2292, 0
        %v2390 = vsel %vm2144, %v2293, 0
        %v2393 = vsel %vm2144, %v2294, 0
        %2395 = vmatpush.msra.mxu0 0.0
        %2396 = vmatpush.msra.mxu0 0.0
        %2397 = vmatpush.msra.mxu0 0.0
        %2398 = vmatpush.msra.mxu0 0.0
        %2399 = vmatpush.msra.mxu0 0.0
        %2400 = vmatpush.msra.mxu0 0.0
        %2401 = vmatpush.msra.mxu0 0.0
        %2402 = vmatpush.msra.mxu0 0.0
        %2403 = vmatpush.msra.mxu0 0.0
        %2404 = vmatpush.msra.mxu0 0.0
        %2405 = vmatpush.msra.mxu0 0.0
        %2406 = vmatpush.msra.mxu0 0.0
        %2407 = vmatpush.msra.mxu0 %v2226
        %2408 = vmatpush.msra.mxu0 %v2225
        %2409 = vmatpush.msra.mxu0 %v2224
        %2410 = vmatpush.msra.mxu0 %v2223
        %2411 = vmatmul.f32.gmra.mxu0 %v2300
        %v2412 = vpop.f32.mrf.mxu0
        %v2413 = vadd.f32 0.0, %v2412
        %2414 = vmatmul.f32.gmra.mxu0 %v2303
        %v2415 = vpop.f32.mrf.mxu0
        %v2416 = vadd.f32 0.0, %v2415
        %2417 = vmatmul.f32.gmra.mxu0 %v2306
        %v2418 = vpop.f32.mrf.mxu0
        %v2419 = vadd.f32 0.0, %v2418
        %2420 = vmatmul.f32.gmra.mxu0 %v2309
        %v2421 = vpop.f32.mrf.mxu0
        %v2422 = vadd.f32 0.0, %v2421
        %2423 = vmatmul.f32.gmra.mxu0 %v2312
        %v2424 = vpop.f32.mrf.mxu0
        %v2425 = vadd.f32 0.0, %v2424
        %2426 = vmatmul.f32.gmra.mxu0 %v2315
        %v2427 = vpop.f32.mrf.mxu0
        %v2428 = vadd.f32 0.0, %v2427
        %2429 = vmatmul.f32.gmra.mxu0 %v2318
        %v2430 = vpop.f32.mrf.mxu0
        %v2431 = vadd.f32 0.0, %v2430
        %2432 = vmatmul.f32.gmra.mxu0 %v2321
        %v2433 = vpop.f32.mrf.mxu0
        %v2434 = vadd.f32 0.0, %v2433
        %2435 = vmatmul.f32.gmra.mxu0 %v2324
        %v2436 = vpop.f32.mrf.mxu0
        %v2437 = vadd.f32 0.0, %v2436
        %2438 = vmatmul.f32.gmra.mxu0 %v2327
        %v2439 = vpop.f32.mrf.mxu0
        %v2440 = vadd.f32 0.0, %v2439
        %2441 = vmatmul.f32.gmra.mxu0 %v2330
        %v2442 = vpop.f32.mrf.mxu0
        %v2443 = vadd.f32 0.0, %v2442
        %2444 = vmatmul.f32.gmra.mxu0 %v2333
        %v2445 = vpop.f32.mrf.mxu0
        %v2446 = vadd.f32 0.0, %v2445
        %2447 = vmatmul.f32.gmra.mxu0 %v2336
        %v2448 = vpop.f32.mrf.mxu0
        %v2449 = vadd.f32 0.0, %v2448
        %2450 = vmatmul.f32.gmra.mxu0 %v2339
        %v2451 = vpop.f32.mrf.mxu0
        %v2452 = vadd.f32 0.0, %v2451
        %2453 = vmatmul.f32.gmra.mxu0 %v2342
        %v2454 = vpop.f32.mrf.mxu0
        %v2455 = vadd.f32 0.0, %v2454
        %2456 = vmatmul.f32.gmra.mxu0 %v2345
        %v2457 = vpop.f32.mrf.mxu0
        %v2458 = vadd.f32 0.0, %v2457
        %2459 = vmatmul.f32.gmra.mxu0 %v2348
        %v2460 = vpop.f32.mrf.mxu0
        %v2461 = vadd.f32 0.0, %v2460
        %2462 = vmatmul.f32.gmra.mxu0 %v2351
        %v2463 = vpop.f32.mrf.mxu0
        %v2464 = vadd.f32 0.0, %v2463
        %2465 = vmatmul.f32.gmra.mxu0 %v2354
        %v2466 = vpop.f32.mrf.mxu0
        %v2467 = vadd.f32 0.0, %v2466
        %2468 = vmatmul.f32.gmra.mxu0 %v2357
        %v2469 = vpop.f32.mrf.mxu0
        %v2470 = vadd.f32 0.0, %v2469
        %2471 = vmatmul.f32.gmra.mxu0 %v2360
        %v2472 = vpop.f32.mrf.mxu0
        %v2473 = vadd.f32 0.0, %v2472
        %2474 = vmatmul.f32.gmra.mxu0 %v2363
        %v2475 = vpop.f32.mrf.mxu0
        %v2476 = vadd.f32 0.0, %v2475
        %2477 = vmatmul.f32.gmra.mxu0 %v2366
        %v2478 = vpop.f32.mrf.mxu0
        %v2479 = vadd.f32 0.0, %v2478
        %2480 = vmatmul.f32.gmra.mxu0 %v2369
        %v2481 = vpop.f32.mrf.mxu0
        %v2482 = vadd.f32 0.0, %v2481
        %2483 = vmatmul.f32.gmra.mxu0 %v2372
        %v2484 = vpop.f32.mrf.mxu0
        %v2485 = vadd.f32 0.0, %v2484
        %2486 = vmatmul.f32.gmra.mxu0 %v2375
        %v2487 = vpop.f32.mrf.mxu0
        %v2488 = vadd.f32 0.0, %v2487
        %2489 = vmatmul.f32.gmra.mxu0 %v2378
        %v2490 = vpop.f32.mrf.mxu0
        %v2491 = vadd.f32 0.0, %v2490
        %2492 = vmatmul.f32.gmra.mxu0 %v2381
        %v2493 = vpop.f32.mrf.mxu0
        %v2494 = vadd.f32 0.0, %v2493
        %2495 = vmatmul.f32.gmra.mxu0 %v2384
        %v2496 = vpop.f32.mrf.mxu0
        %v2497 = vadd.f32 0.0, %v2496
        %2498 = vmatmul.f32.gmra.mxu0 %v2387
        %v2499 = vpop.f32.mrf.mxu0
        %v2500 = vadd.f32 0.0, %v2499
        %2501 = vmatmul.f32.gmra.mxu0 %v2390
        %v2502 = vpop.f32.mrf.mxu0
        %v2503 = vadd.f32 0.0, %v2502
        %2504 = vmatmul.f32.gmra.mxu0 %v2393
        %v2505 = vpop.f32.mrf.mxu0
        %v2506 = vadd.f32 0.0, %v2505
        %2507 = vdwg.mxu0
        %v2508 = vadd.f32 %v2261, %v2413
        %v2509 = vadd.f32 %v2261, %v2416
        %v2510 = vadd.f32 %v2261, %v2419
        %v2511 = vadd.f32 %v2261, %v2422
        %v2512 = vadd.f32 %v2261, %v2425
        %v2513 = vadd.f32 %v2261, %v2428
        %v2514 = vadd.f32 %v2261, %v2431
        %v2515 = vadd.f32 %v2261, %v2434
        %v2516 = vadd.f32 %v2261, %v2437
        %v2517 = vadd.f32 %v2261, %v2440
        %v2518 = vadd.f32 %v2261, %v2443
        %v2519 = vadd.f32 %v2261, %v2446
        %v2520 = vadd.f32 %v2261, %v2449
        %v2521 = vadd.f32 %v2261, %v2452
        %v2522 = vadd.f32 %v2261, %v2455
        %v2523 = vadd.f32 %v2261, %v2458
        %v2524 = vadd.f32 %v2261, %v2461
        %v2525 = vadd.f32 %v2261, %v2464
        %v2526 = vadd.f32 %v2261, %v2467
        %v2527 = vadd.f32 %v2261, %v2470
        %v2528 = vadd.f32 %v2261, %v2473
        %v2529 = vadd.f32 %v2261, %v2476
        %v2530 = vadd.f32 %v2261, %v2479
        %v2531 = vadd.f32 %v2261, %v2482
        %v2532 = vadd.f32 %v2261, %v2485
        %v2533 = vadd.f32 %v2261, %v2488
        %v2534 = vadd.f32 %v2261, %v2491
        %v2535 = vadd.f32 %v2261, %v2494
        %v2536 = vadd.f32 %v2261, %v2497
        %v2537 = vadd.f32 %v2261, %v2500
        %v2538 = vadd.f32 %v2261, %v2503
        %v2539 = vadd.f32 %v2261, %v2506
        %v2541 = vsel %vm2144, %v2295, 0
        %v2544 = vsel %vm2144, %v2296, 0
        %2546 = vmatpush.msra.mxu0 0.0
        %2547 = vmatpush.msra.mxu0 0.0
        %2548 = vmatpush.msra.mxu0 0.0
        %2549 = vmatpush.msra.mxu0 0.0
        %2550 = vmatpush.msra.mxu0 0.0
        %2551 = vmatpush.msra.mxu0 0.0
        %2552 = vmatpush.msra.mxu0 0.0
        %2553 = vmatpush.msra.mxu0 0.0
        %2554 = vmatpush.msra.mxu0 0.0
        %2555 = vmatpush.msra.mxu0 0.0
        %2556 = vmatpush.msra.mxu0 0.0
        %2557 = vmatpush.msra.mxu0 0.0
        %2558 = vmatpush.msra.mxu0 %v2238
        %2559 = vmatpush.msra.mxu0 %v2237
        %2560 = vmatpush.msra.mxu0 %v2236
        %2561 = vmatpush.msra.mxu0 %v2235
        %2562 = vmatmul.f32.gmra.mxu0 %v2306
        %v2563 = vpop.f32.mrf.mxu0
        %v2564 = vadd.f32 0.0, %v2563
        %2565 = vmatmul.f32.gmra.mxu0 %v2309
        %v2566 = vpop.f32.mrf.mxu0
        %v2567 = vadd.f32 0.0, %v2566
        %2568 = vmatmul.f32.gmra.mxu0 %v2312
        %v2569 = vpop.f32.mrf.mxu0
        %v2570 = vadd.f32 0.0, %v2569
        %2571 = vmatmul.f32.gmra.mxu0 %v2315
        %v2572 = vpop.f32.mrf.mxu0
        %v2573 = vadd.f32 0.0, %v2572
        %2574 = vmatmul.f32.gmra.mxu0 %v2318
        %v2575 = vpop.f32.mrf.mxu0
        %v2576 = vadd.f32 0.0, %v2575
        %2577 = vmatmul.f32.gmra.mxu0 %v2321
        %v2578 = vpop.f32.mrf.mxu0
        %v2579 = vadd.f32 0.0, %v2578
        %2580 = vmatmul.f32.gmra.mxu0 %v2324
        %v2581 = vpop.f32.mrf.mxu0
        %v2582 = vadd.f32 0.0, %v2581
        %2583 = vmatmul.f32.gmra.mxu0 %v2327
        %v2584 = vpop.f32.mrf.mxu0
        %v2585 = vadd.f32 0.0, %v2584
        %2586 = vmatmul.f32.gmra.mxu0 %v2330
        %v2587 = vpop.f32.mrf.mxu0
        %v2588 = vadd.f32 0.0, %v2587
        %2589 = vmatmul.f32.gmra.mxu0 %v2333
        %v2590 = vpop.f32.mrf.mxu0
        %v2591 = vadd.f32 0.0, %v2590
        %2592 = vmatmul.f32.gmra.mxu0 %v2336
        %v2593 = vpop.f32.mrf.mxu0
        %v2594 = vadd.f32 0.0, %v2593
        %2595 = vmatmul.f32.gmra.mxu0 %v2339
        %v2596 = vpop.f32.mrf.mxu0
        %v2597 = vadd.f32 0.0, %v2596
        %2598 = vmatmul.f32.gmra.mxu0 %v2342
        %v2599 = vpop.f32.mrf.mxu0
        %v2600 = vadd.f32 0.0, %v2599
        %2601 = vmatmul.f32.gmra.mxu0 %v2345
        %v2602 = vpop.f32.mrf.mxu0
        %v2603 = vadd.f32 0.0, %v2602
        %2604 = vmatmul.f32.gmra.mxu0 %v2348
        %v2605 = vpop.f32.mrf.mxu0
        %v2606 = vadd.f32 0.0, %v2605
        %2607 = vmatmul.f32.gmra.mxu0 %v2351
        %v2608 = vpop.f32.mrf.mxu0
        %v2609 = vadd.f32 0.0, %v2608
        %2610 = vmatmul.f32.gmra.mxu0 %v2354
        %v2611 = vpop.f32.mrf.mxu0
        %v2612 = vadd.f32 0.0, %v2611
        %2613 = vmatmul.f32.gmra.mxu0 %v2357
        %v2614 = vpop.f32.mrf.mxu0
        %v2615 = vadd.f32 0.0, %v2614
        %2616 = vmatmul.f32.gmra.mxu0 %v2360
        %v2617 = vpop.f32.mrf.mxu0
        %v2618 = vadd.f32 0.0, %v2617
        %2619 = vmatmul.f32.gmra.mxu0 %v2363
        %v2620 = vpop.f32.mrf.mxu0
        %v2621 = vadd.f32 0.0, %v2620
        %2622 = vmatmul.f32.gmra.mxu0 %v2366
        %v2623 = vpop.f32.mrf.mxu0
        %v2624 = vadd.f32 0.0, %v2623
        %2625 = vmatmul.f32.gmra.mxu0 %v2369
        %v2626 = vpop.f32.mrf.mxu0
        %v2627 = vadd.f32 0.0, %v2626
        %2628 = vmatmul.f32.gmra.mxu0 %v2372
        %v2629 = vpop.f32.mrf.mxu0
        %v2630 = vadd.f32 0.0, %v2629
        %2631 = vmatmul.f32.gmra.mxu0 %v2375
        %v2632 = vpop.f32.mrf.mxu0
        %v2633 = vadd.f32 0.0, %v2632
        %2634 = vmatmul.f32.gmra.mxu0 %v2378
        %v2635 = vpop.f32.mrf.mxu0
        %v2636 = vadd.f32 0.0, %v2635
        %2637 = vmatmul.f32.gmra.mxu0 %v2381
        %v2638 = vpop.f32.mrf.mxu0
        %v2639 = vadd.f32 0.0, %v2638
        %2640 = vmatmul.f32.gmra.mxu0 %v2384
        %v2641 = vpop.f32.mrf.mxu0
        %v2642 = vadd.f32 0.0, %v2641
        %2643 = vmatmul.f32.gmra.mxu0 %v2387
        %v2644 = vpop.f32.mrf.mxu0
        %v2645 = vadd.f32 0.0, %v2644
        %2646 = vmatmul.f32.gmra.mxu0 %v2390
        %v2647 = vpop.f32.mrf.mxu0
        %v2648 = vadd.f32 0.0, %v2647
        %2649 = vmatmul.f32.gmra.mxu0 %v2393
        %v2650 = vpop.f32.mrf.mxu0
        %v2651 = vadd.f32 0.0, %v2650
        %2652 = vmatmul.f32.gmra.mxu0 %v2541
        %v2653 = vpop.f32.mrf.mxu0
        %v2654 = vadd.f32 0.0, %v2653
        %2655 = vmatmul.f32.gmra.mxu0 %v2544
        %v2656 = vpop.f32.mrf.mxu0
        %v2657 = vadd.f32 0.0, %v2656
        %2658 = vdwg.mxu0
        %v2659 = vadd.f32 %v2508, %v2564
        %v2660 = vadd.f32 %v2509, %v2567
        %v2661 = vadd.f32 %v2510, %v2570
        %v2662 = vadd.f32 %v2511, %v2573
        %v2663 = vadd.f32 %v2512, %v2576
        %v2664 = vadd.f32 %v2513, %v2579
        %v2665 = vadd.f32 %v2514, %v2582
        %v2666 = vadd.f32 %v2515, %v2585
        %v2667 = vadd.f32 %v2516, %v2588
        %v2668 = vadd.f32 %v2517, %v2591
        %v2669 = vadd.f32 %v2518, %v2594
        %v2670 = vadd.f32 %v2519, %v2597
        %v2671 = vadd.f32 %v2520, %v2600
        %v2672 = vadd.f32 %v2521, %v2603
        %v2673 = vadd.f32 %v2522, %v2606
        %v2674 = vadd.f32 %v2523, %v2609
        %v2675 = vadd.f32 %v2524, %v2612
        %v2676 = vadd.f32 %v2525, %v2615
        %v2677 = vadd.f32 %v2526, %v2618
        %v2678 = vadd.f32 %v2527, %v2621
        %v2679 = vadd.f32 %v2528, %v2624
        %v2680 = vadd.f32 %v2529, %v2627
        %v2681 = vadd.f32 %v2530, %v2630
        %v2682 = vadd.f32 %v2531, %v2633
        %v2683 = vadd.f32 %v2532, %v2636
        %v2684 = vadd.f32 %v2533, %v2639
        %v2685 = vadd.f32 %v2534, %v2642
        %v2686 = vadd.f32 %v2535, %v2645
        %v2687 = vadd.f32 %v2536, %v2648
        %v2688 = vadd.f32 %v2537, %v2651
        %v2689 = vadd.f32 %v2538, %v2654
        %v2690 = vadd.f32 %v2539, %v2657
        %v2692 = vsel %vm2144, %v2297, 0
        %v2695 = vsel %vm2144, %v2298, 0
        %2697 = vmatpush.msra.mxu0 0.0
        %2698 = vmatpush.msra.mxu0 0.0
        %2699 = vmatpush.msra.mxu0 0.0
        %2700 = vmatpush.msra.mxu0 0.0
        %2701 = vmatpush.msra.mxu0 0.0
        %2702 = vmatpush.msra.mxu0 0.0
        %2703 = vmatpush.msra.mxu0 0.0
        %2704 = vmatpush.msra.mxu0 0.0
        %2705 = vmatpush.msra.mxu0 0.0
        %2706 = vmatpush.msra.mxu0 0.0
        %2707 = vmatpush.msra.mxu0 0.0
        %2708 = vmatpush.msra.mxu0 0.0
        %2709 = vmatpush.msra.mxu0 %v2250
        %2710 = vmatpush.msra.mxu0 %v2249
        %2711 = vmatpush.msra.mxu0 %v2248
        %2712 = vmatpush.msra.mxu0 %v2247
        %2713 = vmatmul.f32.gmra.mxu0 %v2312
        %v2714 = vpop.f32.mrf.mxu0
        %v2715 = vadd.f32 0.0, %v2714
        %2716 = vmatmul.f32.gmra.mxu0 %v2315
        %v2717 = vpop.f32.mrf.mxu0
        %v2718 = vadd.f32 0.0, %v2717
        %2719 = vmatmul.f32.gmra.mxu0 %v2318
        %v2720 = vpop.f32.mrf.mxu0
        %v2721 = vadd.f32 0.0, %v2720
        %2722 = vmatmul.f32.gmra.mxu0 %v2321
        %v2723 = vpop.f32.mrf.mxu0
        %v2724 = vadd.f32 0.0, %v2723
        %2725 = vmatmul.f32.gmra.mxu0 %v2324
        %v2726 = vpop.f32.mrf.mxu0
        %v2727 = vadd.f32 0.0, %v2726
        %2728 = vmatmul.f32.gmra.mxu0 %v2327
        %v2729 = vpop.f32.mrf.mxu0
        %v2730 = vadd.f32 0.0, %v2729
        %2731 = vmatmul.f32.gmra.mxu0 %v2330
        %v2732 = vpop.f32.mrf.mxu0
        %v2733 = vadd.f32 0.0, %v2732
        %2734 = vmatmul.f32.gmra.mxu0 %v2333
        %v2735 = vpop.f32.mrf.mxu0
        %v2736 = vadd.f32 0.0, %v2735
        %2737 = vmatmul.f32.gmra.mxu0 %v2336
        %v2738 = vpop.f32.mrf.mxu0
        %v2739 = vadd.f32 0.0, %v2738
        %2740 = vmatmul.f32.gmra.mxu0 %v2339
        %v2741 = vpop.f32.mrf.mxu0
        %v2742 = vadd.f32 0.0, %v2741
        %2743 = vmatmul.f32.gmra.mxu0 %v2342
        %v2744 = vpop.f32.mrf.mxu0
        %v2745 = vadd.f32 0.0, %v2744
        %2746 = vmatmul.f32.gmra.mxu0 %v2345
        %v2747 = vpop.f32.mrf.mxu0
        %v2748 = vadd.f32 0.0, %v2747
        %2749 = vmatmul.f32.gmra.mxu0 %v2348
        %v2750 = vpop.f32.mrf.mxu0
        %v2751 = vadd.f32 0.0, %v2750
        %2752 = vmatmul.f32.gmra.mxu0 %v2351
        %v2753 = vpop.f32.mrf.mxu0
        %v2754 = vadd.f32 0.0, %v2753
        %2755 = vmatmul.f32.gmra.mxu0 %v2354
        %v2756 = vpop.f32.mrf.mxu0
        %v2757 = vadd.f32 0.0, %v2756
        %2758 = vmatmul.f32.gmra.mxu0 %v2357
        %v2759 = vpop.f32.mrf.mxu0
        %v2760 = vadd.f32 0.0, %v2759
        %2761 = vmatmul.f32.gmra.mxu0 %v2360
        %v2762 = vpop.f32.mrf.mxu0
        %v2763 = vadd.f32 0.0, %v2762
        %2764 = vmatmul.f32.gmra.mxu0 %v2363
        %v2765 = vpop.f32.mrf.mxu0
        %v2766 = vadd.f32 0.0, %v2765
        %2767 = vmatmul.f32.gmra.mxu0 %v2366
        %v2768 = vpop.f32.mrf.mxu0
        %v2769 = vadd.f32 0.0, %v2768
        %2770 = vmatmul.f32.gmra.mxu0 %v2369
        %v2771 = vpop.f32.mrf.mxu0
        %v2772 = vadd.f32 0.0, %v2771
        %2773 = vmatmul.f32.gmra.mxu0 %v2372
        %v2774 = vpop.f32.mrf.mxu0
        %v2775 = vadd.f32 0.0, %v2774
        %2776 = vmatmul.f32.gmra.mxu0 %v2375
        %v2777 = vpop.f32.mrf.mxu0
        %v2778 = vadd.f32 0.0, %v2777
        %2779 = vmatmul.f32.gmra.mxu0 %v2378
        %v2780 = vpop.f32.mrf.mxu0
        %v2781 = vadd.f32 0.0, %v2780
        %2782 = vmatmul.f32.gmra.mxu0 %v2381
        %v2783 = vpop.f32.mrf.mxu0
        %v2784 = vadd.f32 0.0, %v2783
        %2785 = vmatmul.f32.gmra.mxu0 %v2384
        %v2786 = vpop.f32.mrf.mxu0
        %v2787 = vadd.f32 0.0, %v2786
        %2788 = vmatmul.f32.gmra.mxu0 %v2387
        %v2789 = vpop.f32.mrf.mxu0
        %v2790 = vadd.f32 0.0, %v2789
        %2791 = vmatmul.f32.gmra.mxu0 %v2390
        %v2792 = vpop.f32.mrf.mxu0
        %v2793 = vadd.f32 0.0, %v2792
        %2794 = vmatmul.f32.gmra.mxu0 %v2393
        %v2795 = vpop.f32.mrf.mxu0
        %v2796 = vadd.f32 0.0, %v2795
        %2797 = vmatmul.f32.gmra.mxu0 %v2541
        %v2798 = vpop.f32.mrf.mxu0
        %v2799 = vadd.f32 0.0, %v2798
        %2800 = vmatmul.f32.gmra.mxu0 %v2544
        %v2801 = vpop.f32.mrf.mxu0
        %v2802 = vadd.f32 0.0, %v2801
        %2803 = vmatmul.f32.gmra.mxu0 %v2692
        %v2804 = vpop.f32.mrf.mxu0
        %v2805 = vadd.f32 0.0, %v2804
        %2806 = vmatmul.f32.gmra.mxu0 %v2695
        %v2807 = vpop.f32.mrf.mxu0
        %v2808 = vadd.f32 0.0, %v2807
        %2809 = vdwg.mxu0
        %v2810 = vadd.f32 %v2659, %v2715
        %v2811 = vadd.f32 %v2660, %v2718
        %v2812 = vadd.f32 %v2661, %v2721
        %v2813 = vadd.f32 %v2662, %v2724
        %v2814 = vadd.f32 %v2663, %v2727
        %v2815 = vadd.f32 %v2664, %v2730
        %v2816 = vadd.f32 %v2665, %v2733
        %v2817 = vadd.f32 %v2666, %v2736
        %v2818 = vadd.f32 %v2667, %v2739
        %v2819 = vadd.f32 %v2668, %v2742
        %v2820 = vadd.f32 %v2669, %v2745
        %v2821 = vadd.f32 %v2670, %v2748
        %v2822 = vadd.f32 %v2671, %v2751
        %v2823 = vadd.f32 %v2672, %v2754
        %v2824 = vadd.f32 %v2673, %v2757
        %v2825 = vadd.f32 %v2674, %v2760
        %v2826 = vadd.f32 %v2675, %v2763
        %v2827 = vadd.f32 %v2676, %v2766
        %v2828 = vadd.f32 %v2677, %v2769
        %v2829 = vadd.f32 %v2678, %v2772
        %v2830 = vadd.f32 %v2679, %v2775
        %v2831 = vadd.f32 %v2680, %v2778
        %v2832 = vadd.f32 %v2681, %v2781
        %v2833 = vadd.f32 %v2682, %v2784
        %v2834 = vadd.f32 %v2683, %v2787
        %v2835 = vadd.f32 %v2684, %v2790
        %v2836 = vadd.f32 %v2685, %v2793
        %v2837 = vadd.f32 %v2686, %v2796
        %v2838 = vadd.f32 %v2687, %v2799
        %v2839 = vadd.f32 %v2688, %v2802
        %v2840 = vadd.f32 %v2689, %v2805
        %v2841 = vadd.f32 %v2690, %v2808
        %v2842 = vld [vmem:[#allocation3 + $0x1] sm:$0xff]
        %v2843 = vld [vmem:[#allocation3 + $0x9] sm:$0xff]
        %v2844 = vld [vmem:[#allocation3 + $0x19] sm:$0xff]
        %v2845 = vld [vmem:[#allocation3 + $0x21] sm:$0xff]
        %v2846 = vld [vmem:[#allocation3 + $0x31] sm:$0xff]
        %v2847 = vld [vmem:[#allocation3 + $0x39] sm:$0xff]
        %v2848 = vld [vmem:[#allocation3 + $0x49] sm:$0xff]
        %v2849 = vld [vmem:[#allocation3 + $0x51] sm:$0xff]
        %v2850 = vld [vmem:[#allocation3 + $0x61] sm:$0xff]
        %v2851 = vld [vmem:[#allocation3 + $0x69] sm:$0xff]
        %v2852 = vld [vmem:[#allocation3 + $0x79] sm:$0xff]
        %v2853 = vld [vmem:[#allocation3 + $0x81] sm:$0xff]
        %v2854 = vld [vmem:[#allocation3 + $0x91] sm:$0xff]
        %v2855 = vld [vmem:[#allocation3 + $0x99] sm:$0xff]
        %v2856 = vld [vmem:[#allocation3 + $0xa9] sm:$0xff]
        %v2857 = vld [vmem:[#allocation3 + $0xb1] sm:$0xff]
        %v2858 = vld [vmem:[#allocation3 + $0xc1] sm:$0xff]
        %v2859 = vld [vmem:[#allocation3 + $0xc9] sm:$0xff]
        %v2860 = vld [vmem:[#allocation3 + $0xd9] sm:$0xff]
        %v2861 = vld [vmem:[#allocation3 + $0xe1] sm:$0xff]
        %v2862 = vld [vmem:[#allocation3 + $0xf1] sm:$0xff]
        %v2863 = vld [vmem:[#allocation3 + $0xf9] sm:$0xff]
        %v2864 = vld [vmem:[#allocation3 + $0x109] sm:$0xff]
        %v2865 = vld [vmem:[#allocation3 + $0x111] sm:$0xff]
        %v2866 = vld [vmem:[#allocation3 + $0x121] sm:$0xff]
        %v2867 = vld [vmem:[#allocation3 + $0x129] sm:$0xff]
        %v2868 = vld [vmem:[#allocation3 + $0x139] sm:$0xff]
        %v2869 = vld [vmem:[#allocation3 + $0x141] sm:$0xff]
        %v2870 = vld [vmem:[#allocation3 + $0x151] sm:$0xff]
        %v2871 = vld [vmem:[#allocation3 + $0x159] sm:$0xff]
        %v2872 = vld [vmem:[#allocation3 + $0x169] sm:$0xff]
        %v2873 = vld [vmem:[#allocation3 + $0x171] sm:$0xff]
        %v2874 = vld [vmem:[#allocation3 + $0x181] sm:$0xff]
        %v2875 = vld [vmem:[#allocation3 + $0x189] sm:$0xff]
        %v2876 = vld [vmem:[#allocation3 + $0x199] sm:$0xff]
        %v2877 = vld [vmem:[#allocation3 + $0x1a1] sm:$0xff]
        %v2879 = vsel %vm2144, %v2842, 0
        %v2882 = vsel %vm2144, %v2843, 0
        %v2885 = vsel %vm2144, %v2844, 0
        %v2888 = vsel %vm2144, %v2845, 0
        %v2891 = vsel %vm2144, %v2846, 0
        %v2894 = vsel %vm2144, %v2847, 0
        %v2897 = vsel %vm2144, %v2848, 0
        %v2900 = vsel %vm2144, %v2849, 0
        %v2903 = vsel %vm2144, %v2850, 0
        %v2906 = vsel %vm2144, %v2851, 0
        %v2909 = vsel %vm2144, %v2852, 0
        %v2912 = vsel %vm2144, %v2853, 0
        %v2915 = vsel %vm2144, %v2854, 0
        %v2918 = vsel %vm2144, %v2855, 0
        %v2921 = vsel %vm2144, %v2856, 0
        %v2924 = vsel %vm2144, %v2857, 0
        %v2927 = vsel %vm2144, %v2858, 0
        %v2930 = vsel %vm2144, %v2859, 0
        %v2933 = vsel %vm2144, %v2860, 0
        %v2936 = vsel %vm2144, %v2861, 0
        %v2939 = vsel %vm2144, %v2862, 0
        %v2942 = vsel %vm2144, %v2863, 0
        %v2945 = vsel %vm2144, %v2864, 0
        %v2948 = vsel %vm2144, %v2865, 0
        %v2951 = vsel %vm2144, %v2866, 0
        %v2954 = vsel %vm2144, %v2867, 0
        %v2957 = vsel %vm2144, %v2868, 0
        %v2960 = vsel %vm2144, %v2869, 0
        %v2963 = vsel %vm2144, %v2870, 0
        %v2966 = vsel %vm2144, %v2871, 0
        %v2969 = vsel %vm2144, %v2872, 0
        %v2972 = vsel %vm2144, %v2873, 0
        %2974 = vmatpush.msra.mxu0 0.0
        %2975 = vmatpush.msra.mxu0 0.0
        %2976 = vmatpush.msra.mxu0 0.0
        %2977 = vmatpush.msra.mxu0 0.0
        %2978 = vmatpush.msra.mxu0 0.0
        %2979 = vmatpush.msra.mxu0 0.0
        %2980 = vmatpush.msra.mxu0 0.0
        %2981 = vmatpush.msra.mxu0 0.0
        %2982 = vmatpush.msra.mxu0 0.0
        %2983 = vmatpush.msra.mxu0 0.0
        %2984 = vmatpush.msra.mxu0 0.0
        %2985 = vmatpush.msra.mxu0 0.0
        %2986 = vmatpush.msra.mxu0 %v2230
        %2987 = vmatpush.msra.mxu0 %v2229
        %2988 = vmatpush.msra.mxu0 %v2228
        %2989 = vmatpush.msra.mxu0 %v2227
        %2990 = vmatmul.f32.gmra.mxu0 %v2879
        %v2991 = vpop.f32.mrf.mxu0
        %v2992 = vadd.f32 0.0, %v2991
        %2993 = vmatmul.f32.gmra.mxu0 %v2882
        %v2994 = vpop.f32.mrf.mxu0
        %v2995 = vadd.f32 0.0, %v2994
        %2996 = vmatmul.f32.gmra.mxu0 %v2885
        %v2997 = vpop.f32.mrf.mxu0
        %v2998 = vadd.f32 0.0, %v2997
        %2999 = vmatmul.f32.gmra.mxu0 %v2888
        %v3000 = vpop.f32.mrf.mxu0
        %v3001 = vadd.f32 0.0, %v3000
        %3002 = vmatmul.f32.gmra.mxu0 %v2891
        %v3003 = vpop.f32.mrf.mxu0
        %v3004 = vadd.f32 0.0, %v3003
        %3005 = vmatmul.f32.gmra.mxu0 %v2894
        %v3006 = vpop.f32.mrf.mxu0
        %v3007 = vadd.f32 0.0, %v3006
        %3008 = vmatmul.f32.gmra.mxu0 %v2897
        %v3009 = vpop.f32.mrf.mxu0
        %v3010 = vadd.f32 0.0, %v3009
        %3011 = vmatmul.f32.gmra.mxu0 %v2900
        %v3012 = vpop.f32.mrf.mxu0
        %v3013 = vadd.f32 0.0, %v3012
        %3014 = vmatmul.f32.gmra.mxu0 %v2903
        %v3015 = vpop.f32.mrf.mxu0
        %v3016 = vadd.f32 0.0, %v3015
        %3017 = vmatmul.f32.gmra.mxu0 %v2906
        %v3018 = vpop.f32.mrf.mxu0
        %v3019 = vadd.f32 0.0, %v3018
        %3020 = vmatmul.f32.gmra.mxu0 %v2909
        %v3021 = vpop.f32.mrf.mxu0
        %v3022 = vadd.f32 0.0, %v3021
        %3023 = vmatmul.f32.gmra.mxu0 %v2912
        %v3024 = vpop.f32.mrf.mxu0
        %v3025 = vadd.f32 0.0, %v3024
        %3026 = vmatmul.f32.gmra.mxu0 %v2915
        %v3027 = vpop.f32.mrf.mxu0
        %v3028 = vadd.f32 0.0, %v3027
        %3029 = vmatmul.f32.gmra.mxu0 %v2918
        %v3030 = vpop.f32.mrf.mxu0
        %v3031 = vadd.f32 0.0, %v3030
        %3032 = vmatmul.f32.gmra.mxu0 %v2921
        %v3033 = vpop.f32.mrf.mxu0
        %v3034 = vadd.f32 0.0, %v3033
        %3035 = vmatmul.f32.gmra.mxu0 %v2924
        %v3036 = vpop.f32.mrf.mxu0
        %v3037 = vadd.f32 0.0, %v3036
        %3038 = vmatmul.f32.gmra.mxu0 %v2927
        %v3039 = vpop.f32.mrf.mxu0
        %v3040 = vadd.f32 0.0, %v3039
        %3041 = vmatmul.f32.gmra.mxu0 %v2930
        %v3042 = vpop.f32.mrf.mxu0
        %v3043 = vadd.f32 0.0, %v3042
        %3044 = vmatmul.f32.gmra.mxu0 %v2933
        %v3045 = vpop.f32.mrf.mxu0
        %v3046 = vadd.f32 0.0, %v3045
        %3047 = vmatmul.f32.gmra.mxu0 %v2936
        %v3048 = vpop.f32.mrf.mxu0
        %v3049 = vadd.f32 0.0, %v3048
        %3050 = vmatmul.f32.gmra.mxu0 %v2939
        %v3051 = vpop.f32.mrf.mxu0
        %v3052 = vadd.f32 0.0, %v3051
        %3053 = vmatmul.f32.gmra.mxu0 %v2942
        %v3054 = vpop.f32.mrf.mxu0
        %v3055 = vadd.f32 0.0, %v3054
        %3056 = vmatmul.f32.gmra.mxu0 %v2945
        %v3057 = vpop.f32.mrf.mxu0
        %v3058 = vadd.f32 0.0, %v3057
        %3059 = vmatmul.f32.gmra.mxu0 %v2948
        %v3060 = vpop.f32.mrf.mxu0
        %v3061 = vadd.f32 0.0, %v3060
        %3062 = vmatmul.f32.gmra.mxu0 %v2951
        %v3063 = vpop.f32.mrf.mxu0
        %v3064 = vadd.f32 0.0, %v3063
        %3065 = vmatmul.f32.gmra.mxu0 %v2954
        %v3066 = vpop.f32.mrf.mxu0
        %v3067 = vadd.f32 0.0, %v3066
        %3068 = vmatmul.f32.gmra.mxu0 %v2957
        %v3069 = vpop.f32.mrf.mxu0
        %v3070 = vadd.f32 0.0, %v3069
        %3071 = vmatmul.f32.gmra.mxu0 %v2960
        %v3072 = vpop.f32.mrf.mxu0
        %v3073 = vadd.f32 0.0, %v3072
        %3074 = vmatmul.f32.gmra.mxu0 %v2963
        %v3075 = vpop.f32.mrf.mxu0
        %v3076 = vadd.f32 0.0, %v3075
        %3077 = vmatmul.f32.gmra.mxu0 %v2966
        %v3078 = vpop.f32.mrf.mxu0
        %v3079 = vadd.f32 0.0, %v3078
        %3080 = vmatmul.f32.gmra.mxu0 %v2969
        %v3081 = vpop.f32.mrf.mxu0
        %v3082 = vadd.f32 0.0, %v3081
        %3083 = vmatmul.f32.gmra.mxu0 %v2972
        %v3084 = vpop.f32.mrf.mxu0
        %v3085 = vadd.f32 0.0, %v3084
        %3086 = vdwg.mxu0
        %v3087 = vadd.f32 %v2810, %v2992
        %v3088 = vadd.f32 %v2811, %v2995
        %v3089 = vadd.f32 %v2812, %v2998
        %v3090 = vadd.f32 %v2813, %v3001
        %v3091 = vadd.f32 %v2814, %v3004
        %v3092 = vadd.f32 %v2815, %v3007
        %v3093 = vadd.f32 %v2816, %v3010
        %v3094 = vadd.f32 %v2817, %v3013
        %v3095 = vadd.f32 %v2818, %v3016
        %v3096 = vadd.f32 %v2819, %v3019
        %v3097 = vadd.f32 %v2820, %v3022
        %v3098 = vadd.f32 %v2821, %v3025
        %v3099 = vadd.f32 %v2822, %v3028
        %v3100 = vadd.f32 %v2823, %v3031
        %v3101 = vadd.f32 %v2824, %v3034
        %v3102 = vadd.f32 %v2825, %v3037
        %v3103 = vadd.f32 %v2826, %v3040
        %v3104 = vadd.f32 %v2827, %v3043
        %v3105 = vadd.f32 %v2828, %v3046
        %v3106 = vadd.f32 %v2829, %v3049
        %v3107 = vadd.f32 %v2830, %v3052
        %v3108 = vadd.f32 %v2831, %v3055
        %v3109 = vadd.f32 %v2832, %v3058
        %v3110 = vadd.f32 %v2833, %v3061
        %v3111 = vadd.f32 %v2834, %v3064
        %v3112 = vadd.f32 %v2835, %v3067
        %v3113 = vadd.f32 %v2836, %v3070
        %v3114 = vadd.f32 %v2837, %v3073
        %v3115 = vadd.f32 %v2838, %v3076
        %v3116 = vadd.f32 %v2839, %v3079
        %v3117 = vadd.f32 %v2840, %v3082
        %v3118 = vadd.f32 %v2841, %v3085
        %v3120 = vsel %vm2144, %v2874, 0
        %v3123 = vsel %vm2144, %v2875, 0
        %3125 = vmatpush.msra.mxu0 0.0
        %3126 = vmatpush.msra.mxu0 0.0
        %3127 = vmatpush.msra.mxu0 0.0
        %3128 = vmatpush.msra.mxu0 0.0
        %3129 = vmatpush.msra.mxu0 0.0
        %3130 = vmatpush.msra.mxu0 0.0
        %3131 = vmatpush.msra.mxu0 0.0
        %3132 = vmatpush.msra.mxu0 0.0
        %3133 = vmatpush.msra.mxu0 0.0
        %3134 = vmatpush.msra.mxu0 0.0
        %3135 = vmatpush.msra.mxu0 0.0
        %3136 = vmatpush.msra.mxu0 0.0
        %3137 = vmatpush.msra.mxu0 %v2242
        %3138 = vmatpush.msra.mxu0 %v2241
        %3139 = vmatpush.msra.mxu0 %v2240
        %3140 = vmatpush.msra.mxu0 %v2239
        %3141 = vmatmul.f32.gmra.mxu0 %v2885
        %v3142 = vpop.f32.mrf.mxu0
        %v3143 = vadd.f32 0.0, %v3142
        %3144 = vmatmul.f32.gmra.mxu0 %v2888
        %v3145 = vpop.f32.mrf.mxu0
        %v3146 = vadd.f32 0.0, %v3145
        %3147 = vmatmul.f32.gmra.mxu0 %v2891
        %v3148 = vpop.f32.mrf.mxu0
        %v3149 = vadd.f32 0.0, %v3148
        %3150 = vmatmul.f32.gmra.mxu0 %v2894
        %v3151 = vpop.f32.mrf.mxu0
        %v3152 = vadd.f32 0.0, %v3151
        %3153 = vmatmul.f32.gmra.mxu0 %v2897
        %v3154 = vpop.f32.mrf.mxu0
        %v3155 = vadd.f32 0.0, %v3154
        %3156 = vmatmul.f32.gmra.mxu0 %v2900
        %v3157 = vpop.f32.mrf.mxu0
        %v3158 = vadd.f32 0.0, %v3157
        %3159 = vmatmul.f32.gmra.mxu0 %v2903
        %v3160 = vpop.f32.mrf.mxu0
        %v3161 = vadd.f32 0.0, %v3160
        %3162 = vmatmul.f32.gmra.mxu0 %v2906
        %v3163 = vpop.f32.mrf.mxu0
        %v3164 = vadd.f32 0.0, %v3163
        %3165 = vmatmul.f32.gmra.mxu0 %v2909
        %v3166 = vpop.f32.mrf.mxu0
        %v3167 = vadd.f32 0.0, %v3166
        %3168 = vmatmul.f32.gmra.mxu0 %v2912
        %v3169 = vpop.f32.mrf.mxu0
        %v3170 = vadd.f32 0.0, %v3169
        %3171 = vmatmul.f32.gmra.mxu0 %v2915
        %v3172 = vpop.f32.mrf.mxu0
        %v3173 = vadd.f32 0.0, %v3172
        %3174 = vmatmul.f32.gmra.mxu0 %v2918
        %v3175 = vpop.f32.mrf.mxu0
        %v3176 = vadd.f32 0.0, %v3175
        %3177 = vmatmul.f32.gmra.mxu0 %v2921
        %v3178 = vpop.f32.mrf.mxu0
        %v3179 = vadd.f32 0.0, %v3178
        %3180 = vmatmul.f32.gmra.mxu0 %v2924
        %v3181 = vpop.f32.mrf.mxu0
        %v3182 = vadd.f32 0.0, %v3181
        %3183 = vmatmul.f32.gmra.mxu0 %v2927
        %v3184 = vpop.f32.mrf.mxu0
        %v3185 = vadd.f32 0.0, %v3184
        %3186 = vmatmul.f32.gmra.mxu0 %v2930
        %v3187 = vpop.f32.mrf.mxu0
        %v3188 = vadd.f32 0.0, %v3187
        %3189 = vmatmul.f32.gmra.mxu0 %v2933
        %v3190 = vpop.f32.mrf.mxu0
        %v3191 = vadd.f32 0.0, %v3190
        %3192 = vmatmul.f32.gmra.mxu0 %v2936
        %v3193 = vpop.f32.mrf.mxu0
        %v3194 = vadd.f32 0.0, %v3193
        %3195 = vmatmul.f32.gmra.mxu0 %v2939
        %v3196 = vpop.f32.mrf.mxu0
        %v3197 = vadd.f32 0.0, %v3196
        %3198 = vmatmul.f32.gmra.mxu0 %v2942
        %v3199 = vpop.f32.mrf.mxu0
        %v3200 = vadd.f32 0.0, %v3199
        %3201 = vmatmul.f32.gmra.mxu0 %v2945
        %v3202 = vpop.f32.mrf.mxu0
        %v3203 = vadd.f32 0.0, %v3202
        %3204 = vmatmul.f32.gmra.mxu0 %v2948
        %v3205 = vpop.f32.mrf.mxu0
        %v3206 = vadd.f32 0.0, %v3205
        %3207 = vmatmul.f32.gmra.mxu0 %v2951
        %v3208 = vpop.f32.mrf.mxu0
        %v3209 = vadd.f32 0.0, %v3208
        %3210 = vmatmul.f32.gmra.mxu0 %v2954
        %v3211 = vpop.f32.mrf.mxu0
        %v3212 = vadd.f32 0.0, %v3211
        %3213 = vmatmul.f32.gmra.mxu0 %v2957
        %v3214 = vpop.f32.mrf.mxu0
        %v3215 = vadd.f32 0.0, %v3214
        %3216 = vmatmul.f32.gmra.mxu0 %v2960
        %v3217 = vpop.f32.mrf.mxu0
        %v3218 = vadd.f32 0.0, %v3217
        %3219 = vmatmul.f32.gmra.mxu0 %v2963
        %v3220 = vpop.f32.mrf.mxu0
        %v3221 = vadd.f32 0.0, %v3220
        %3222 = vmatmul.f32.gmra.mxu0 %v2966
        %v3223 = vpop.f32.mrf.mxu0
        %v3224 = vadd.f32 0.0, %v3223
        %3225 = vmatmul.f32.gmra.mxu0 %v2969
        %v3226 = vpop.f32.mrf.mxu0
        %v3227 = vadd.f32 0.0, %v3226
        %3228 = vmatmul.f32.gmra.mxu0 %v2972
        %v3229 = vpop.f32.mrf.mxu0
        %v3230 = vadd.f32 0.0, %v3229
        %3231 = vmatmul.f32.gmra.mxu0 %v3120
        %v3232 = vpop.f32.mrf.mxu0
        %v3233 = vadd.f32 0.0, %v3232
        %3234 = vmatmul.f32.gmra.mxu0 %v3123
        %v3235 = vpop.f32.mrf.mxu0
        %v3236 = vadd.f32 0.0, %v3235
        %3237 = vdwg.mxu0
        %v3238 = vadd.f32 %v3087, %v3143
        %v3239 = vadd.f32 %v3088, %v3146
        %v3240 = vadd.f32 %v3089, %v3149
        %v3241 = vadd.f32 %v3090, %v3152
        %v3242 = vadd.f32 %v3091, %v3155
        %v3243 = vadd.f32 %v3092, %v3158
        %v3244 = vadd.f32 %v3093, %v3161
        %v3245 = vadd.f32 %v3094, %v3164
        %v3246 = vadd.f32 %v3095, %v3167
        %v3247 = vadd.f32 %v3096, %v3170
        %v3248 = vadd.f32 %v3097, %v3173
        %v3249 = vadd.f32 %v3098, %v3176
        %v3250 = vadd.f32 %v3099, %v3179
        %v3251 = vadd.f32 %v3100, %v3182
        %v3252 = vadd.f32 %v3101, %v3185
        %v3253 = vadd.f32 %v3102, %v3188
        %v3254 = vadd.f32 %v3103, %v3191
        %v3255 = vadd.f32 %v3104, %v3194
        %v3256 = vadd.f32 %v3105, %v3197
        %v3257 = vadd.f32 %v3106, %v3200
        %v3258 = vadd.f32 %v3107, %v3203
        %v3259 = vadd.f32 %v3108, %v3206
        %v3260 = vadd.f32 %v3109, %v3209
        %v3261 = vadd.f32 %v3110, %v3212
        %v3262 = vadd.f32 %v3111, %v3215
        %v3263 = vadd.f32 %v3112, %v3218
        %v3264 = vadd.f32 %v3113, %v3221
        %v3265 = vadd.f32 %v3114, %v3224
        %v3266 = vadd.f32 %v3115, %v3227
        %v3267 = vadd.f32 %v3116, %v3230
        %v3268 = vadd.f32 %v3117, %v3233
        %v3269 = vadd.f32 %v3118, %v3236
        %v3271 = vsel %vm2144, %v2876, 0
        %v3274 = vsel %vm2144, %v2877, 0
        %3276 = vmatpush.msra.mxu0 0.0
        %3277 = vmatpush.msra.mxu0 0.0
        %3278 = vmatpush.msra.mxu0 0.0
        %3279 = vmatpush.msra.mxu0 0.0
        %3280 = vmatpush.msra.mxu0 0.0
        %3281 = vmatpush.msra.mxu0 0.0
        %3282 = vmatpush.msra.mxu0 0.0
        %3283 = vmatpush.msra.mxu0 0.0
        %3284 = vmatpush.msra.mxu0 0.0
        %3285 = vmatpush.msra.mxu0 0.0
        %3286 = vmatpush.msra.mxu0 0.0
        %3287 = vmatpush.msra.mxu0 0.0
        %3288 = vmatpush.msra.mxu0 %v2254
        %3289 = vmatpush.msra.mxu0 %v2253
        %3290 = vmatpush.msra.mxu0 %v2252
        %3291 = vmatpush.msra.mxu0 %v2251
        %3292 = vmatmul.f32.gmra.mxu0 %v2891
        %v3293 = vpop.f32.mrf.mxu0
        %v3294 = vadd.f32 0.0, %v3293
        %3295 = vmatmul.f32.gmra.mxu0 %v2894
        %v3296 = vpop.f32.mrf.mxu0
        %v3297 = vadd.f32 0.0, %v3296
        %3298 = vmatmul.f32.gmra.mxu0 %v2897
        %v3299 = vpop.f32.mrf.mxu0
        %v3300 = vadd.f32 0.0, %v3299
        %3301 = vmatmul.f32.gmra.mxu0 %v2900
        %v3302 = vpop.f32.mrf.mxu0
        %v3303 = vadd.f32 0.0, %v3302
        %3304 = vmatmul.f32.gmra.mxu0 %v2903
        %v3305 = vpop.f32.mrf.mxu0
        %v3306 = vadd.f32 0.0, %v3305
        %3307 = vmatmul.f32.gmra.mxu0 %v2906
        %v3308 = vpop.f32.mrf.mxu0
        %v3309 = vadd.f32 0.0, %v3308
        %3310 = vmatmul.f32.gmra.mxu0 %v2909
        %v3311 = vpop.f32.mrf.mxu0
        %v3312 = vadd.f32 0.0, %v3311
        %3313 = vmatmul.f32.gmra.mxu0 %v2912
        %v3314 = vpop.f32.mrf.mxu0
        %v3315 = vadd.f32 0.0, %v3314
        %3316 = vmatmul.f32.gmra.mxu0 %v2915
        %v3317 = vpop.f32.mrf.mxu0
        %v3318 = vadd.f32 0.0, %v3317
        %3319 = vmatmul.f32.gmra.mxu0 %v2918
        %v3320 = vpop.f32.mrf.mxu0
        %v3321 = vadd.f32 0.0, %v3320
        %3322 = vmatmul.f32.gmra.mxu0 %v2921
        %v3323 = vpop.f32.mrf.mxu0
        %v3324 = vadd.f32 0.0, %v3323
        %3325 = vmatmul.f32.gmra.mxu0 %v2924
        %v3326 = vpop.f32.mrf.mxu0
        %v3327 = vadd.f32 0.0, %v3326
        %3328 = vmatmul.f32.gmra.mxu0 %v2927
        %v3329 = vpop.f32.mrf.mxu0
        %v3330 = vadd.f32 0.0, %v3329
        %3331 = vmatmul.f32.gmra.mxu0 %v2930
        %v3332 = vpop.f32.mrf.mxu0
        %v3333 = vadd.f32 0.0, %v3332
        %3334 = vmatmul.f32.gmra.mxu0 %v2933
        %v3335 = vpop.f32.mrf.mxu0
        %v3336 = vadd.f32 0.0, %v3335
        %3337 = vmatmul.f32.gmra.mxu0 %v2936
        %v3338 = vpop.f32.mrf.mxu0
        %v3339 = vadd.f32 0.0, %v3338
        %3340 = vmatmul.f32.gmra.mxu0 %v2939
        %v3341 = vpop.f32.mrf.mxu0
        %v3342 = vadd.f32 0.0, %v3341
        %3343 = vmatmul.f32.gmra.mxu0 %v2942
        %v3344 = vpop.f32.mrf.mxu0
        %v3345 = vadd.f32 0.0, %v3344
        %3346 = vmatmul.f32.gmra.mxu0 %v2945
        %v3347 = vpop.f32.mrf.mxu0
        %v3348 = vadd.f32 0.0, %v3347
        %3349 = vmatmul.f32.gmra.mxu0 %v2948
        %v3350 = vpop.f32.mrf.mxu0
        %v3351 = vadd.f32 0.0, %v3350
        %3352 = vmatmul.f32.gmra.mxu0 %v2951
        %v3353 = vpop.f32.mrf.mxu0
        %v3354 = vadd.f32 0.0, %v3353
        %3355 = vmatmul.f32.gmra.mxu0 %v2954
        %v3356 = vpop.f32.mrf.mxu0
        %v3357 = vadd.f32 0.0, %v3356
        %3358 = vmatmul.f32.gmra.mxu0 %v2957
        %v3359 = vpop.f32.mrf.mxu0
        %v3360 = vadd.f32 0.0, %v3359
        %3361 = vmatmul.f32.gmra.mxu0 %v2960
        %v3362 = vpop.f32.mrf.mxu0
        %v3363 = vadd.f32 0.0, %v3362
        %3364 = vmatmul.f32.gmra.mxu0 %v2963
        %v3365 = vpop.f32.mrf.mxu0
        %v3366 = vadd.f32 0.0, %v3365
        %3367 = vmatmul.f32.gmra.mxu0 %v2966
        %v3368 = vpop.f32.mrf.mxu0
        %v3369 = vadd.f32 0.0, %v3368
        %3370 = vmatmul.f32.gmra.mxu0 %v2969
        %v3371 = vpop.f32.mrf.mxu0
        %v3372 = vadd.f32 0.0, %v3371
        %3373 = vmatmul.f32.gmra.mxu0 %v2972
        %v3374 = vpop.f32.mrf.mxu0
        %v3375 = vadd.f32 0.0, %v3374
        %3376 = vmatmul.f32.gmra.mxu0 %v3120
        %v3377 = vpop.f32.mrf.mxu0
        %v3378 = vadd.f32 0.0, %v3377
        %3379 = vmatmul.f32.gmra.mxu0 %v3123
        %v3380 = vpop.f32.mrf.mxu0
        %v3381 = vadd.f32 0.0, %v3380
        %3382 = vmatmul.f32.gmra.mxu0 %v3271
        %v3383 = vpop.f32.mrf.mxu0
        %v3384 = vadd.f32 0.0, %v3383
        %3385 = vmatmul.f32.gmra.mxu0 %v3274
        %v3386 = vpop.f32.mrf.mxu0
        %v3387 = vadd.f32 0.0, %v3386
        %3388 = vdwg.mxu0
        %v3389 = vadd.f32 %v3238, %v3294
        %v3390 = vadd.f32 %v3239, %v3297
        %v3391 = vadd.f32 %v3240, %v3300
        %v3392 = vadd.f32 %v3241, %v3303
        %v3393 = vadd.f32 %v3242, %v3306
        %v3394 = vadd.f32 %v3243, %v3309
        %v3395 = vadd.f32 %v3244, %v3312
        %v3396 = vadd.f32 %v3245, %v3315
        %v3397 = vadd.f32 %v3246, %v3318
        %v3398 = vadd.f32 %v3247, %v3321
        %v3399 = vadd.f32 %v3248, %v3324
        %v3400 = vadd.f32 %v3249, %v3327
        %v3401 = vadd.f32 %v3250, %v3330
        %v3402 = vadd.f32 %v3251, %v3333
        %v3403 = vadd.f32 %v3252, %v3336
        %v3404 = vadd.f32 %v3253, %v3339
        %v3405 = vadd.f32 %v3254, %v3342
        %v3406 = vadd.f32 %v3255, %v3345
        %v3407 = vadd.f32 %v3256, %v3348
        %v3408 = vadd.f32 %v3257, %v3351
        %v3409 = vadd.f32 %v3258, %v3354
        %v3410 = vadd.f32 %v3259, %v3357
        %v3411 = vadd.f32 %v3260, %v3360
        %v3412 = vadd.f32 %v3261, %v3363
        %v3413 = vadd.f32 %v3262, %v3366
        %v3414 = vadd.f32 %v3263, %v3369
        %v3415 = vadd.f32 %v3264, %v3372
        %v3416 = vadd.f32 %v3265, %v3375
        %v3417 = vadd.f32 %v3266, %v3378
        %v3418 = vadd.f32 %v3267, %v3381
        %v3419 = vadd.f32 %v3268, %v3384
        %v3420 = vadd.f32 %v3269, %v3387
        %v3421 = vld [vmem:[#allocation3 + $0x2] sm:$0xff]
        %v3422 = vld [vmem:[#allocation3 + $0xa] sm:$0xff]
        %v3423 = vld [vmem:[#allocation3 + $0x1a] sm:$0xff]
        %v3424 = vld [vmem:[#allocation3 + $0x22] sm:$0xff]
        %v3425 = vld [vmem:[#allocation3 + $0x32] sm:$0xff]
        %v3426 = vld [vmem:[#allocation3 + $0x3a] sm:$0xff]
        %v3427 = vld [vmem:[#allocation3 + $0x4a] sm:$0xff]
        %v3428 = vld [vmem:[#allocation3 + $0x52] sm:$0xff]
        %v3429 = vld [vmem:[#allocation3 + $0x62] sm:$0xff]
        %v3430 = vld [vmem:[#allocation3 + $0x6a] sm:$0xff]
        %v3431 = vld [vmem:[#allocation3 + $0x7a] sm:$0xff]
        %v3432 = vld [vmem:[#allocation3 + $0x82] sm:$0xff]
        %v3433 = vld [vmem:[#allocation3 + $0x92] sm:$0xff]
        %v3434 = vld [vmem:[#allocation3 + $0x9a] sm:$0xff]
        %v3435 = vld [vmem:[#allocation3 + $0xaa] sm:$0xff]
        %v3436 = vld [vmem:[#allocation3 + $0xb2] sm:$0xff]
        %v3437 = vld [vmem:[#allocation3 + $0xc2] sm:$0xff]
        %v3438 = vld [vmem:[#allocation3 + $0xca] sm:$0xff]
        %v3439 = vld [vmem:[#allocation3 + $0xda] sm:$0xff]
        %v3440 = vld [vmem:[#allocation3 + $0xe2] sm:$0xff]
        %v3441 = vld [vmem:[#allocation3 + $0xf2] sm:$0xff]
        %v3442 = vld [vmem:[#allocation3 + $0xfa] sm:$0xff]
        %v3443 = vld [vmem:[#allocation3 + $0x10a] sm:$0xff]
        %v3444 = vld [vmem:[#allocation3 + $0x112] sm:$0xff]
        %v3445 = vld [vmem:[#allocation3 + $0x122] sm:$0xff]
        %v3446 = vld [vmem:[#allocation3 + $0x12a] sm:$0xff]
        %v3447 = vld [vmem:[#allocation3 + $0x13a] sm:$0xff]
        %v3448 = vld [vmem:[#allocation3 + $0x142] sm:$0xff]
        %v3449 = vld [vmem:[#allocation3 + $0x152] sm:$0xff]
        %v3450 = vld [vmem:[#allocation3 + $0x15a] sm:$0xff]
        %v3451 = vld [vmem:[#allocation3 + $0x16a] sm:$0xff]
        %v3452 = vld [vmem:[#allocation3 + $0x172] sm:$0xff]
        %v3453 = vld [vmem:[#allocation3 + $0x182] sm:$0xff]
        %v3454 = vld [vmem:[#allocation3 + $0x18a] sm:$0xff]
        %v3455 = vld [vmem:[#allocation3 + $0x19a] sm:$0xff]
        %v3456 = vld [vmem:[#allocation3 + $0x1a2] sm:$0xff]
        %v3458 = vsel %vm2144, %v3421, 0
        %v3461 = vsel %vm2144, %v3422, 0
        %v3464 = vsel %vm2144, %v3423, 0
        %v3467 = vsel %vm2144, %v3424, 0
        %v3470 = vsel %vm2144, %v3425, 0
        %v3473 = vsel %vm2144, %v3426, 0
        %v3476 = vsel %vm2144, %v3427, 0
        %v3479 = vsel %vm2144, %v3428, 0
        %v3482 = vsel %vm2144, %v3429, 0
        %v3485 = vsel %vm2144, %v3430, 0
        %v3488 = vsel %vm2144, %v3431, 0
        %v3491 = vsel %vm2144, %v3432, 0
        %v3494 = vsel %vm2144, %v3433, 0
        %v3497 = vsel %vm2144, %v3434, 0
        %v3500 = vsel %vm2144, %v3435, 0
        %v3503 = vsel %vm2144, %v3436, 0
        %v3506 = vsel %vm2144, %v3437, 0
        %v3509 = vsel %vm2144, %v3438, 0
        %v3512 = vsel %vm2144, %v3439, 0
        %v3515 = vsel %vm2144, %v3440, 0
        %v3518 = vsel %vm2144, %v3441, 0
        %v3521 = vsel %vm2144, %v3442, 0
        %v3524 = vsel %vm2144, %v3443, 0
        %v3527 = vsel %vm2144, %v3444, 0
        %v3530 = vsel %vm2144, %v3445, 0
        %v3533 = vsel %vm2144, %v3446, 0
        %v3536 = vsel %vm2144, %v3447, 0
        %v3539 = vsel %vm2144, %v3448, 0
        %v3542 = vsel %vm2144, %v3449, 0
        %v3545 = vsel %vm2144, %v3450, 0
        %v3548 = vsel %vm2144, %v3451, 0
        %v3551 = vsel %vm2144, %v3452, 0
        %3553 = vmatpush.msra.mxu0 0.0
        %3554 = vmatpush.msra.mxu0 0.0
        %3555 = vmatpush.msra.mxu0 0.0
        %3556 = vmatpush.msra.mxu0 0.0
        %3557 = vmatpush.msra.mxu0 0.0
        %3558 = vmatpush.msra.mxu0 0.0
        %3559 = vmatpush.msra.mxu0 0.0
        %3560 = vmatpush.msra.mxu0 0.0
        %3561 = vmatpush.msra.mxu0 0.0
        %3562 = vmatpush.msra.mxu0 0.0
        %3563 = vmatpush.msra.mxu0 0.0
        %3564 = vmatpush.msra.mxu0 0.0
        %3565 = vmatpush.msra.mxu0 %v2234
        %3566 = vmatpush.msra.mxu0 %v2233
        %3567 = vmatpush.msra.mxu0 %v2232
        %3568 = vmatpush.msra.mxu0 %v2231
        %3569 = vmatmul.f32.gmra.mxu0 %v3458
        %v3570 = vpop.f32.mrf.mxu0
        %v3571 = vadd.f32 0.0, %v3570
        %3572 = vmatmul.f32.gmra.mxu0 %v3461
        %v3573 = vpop.f32.mrf.mxu0
        %v3574 = vadd.f32 0.0, %v3573
        %3575 = vmatmul.f32.gmra.mxu0 %v3464
        %v3576 = vpop.f32.mrf.mxu0
        %v3577 = vadd.f32 0.0, %v3576
        %3578 = vmatmul.f32.gmra.mxu0 %v3467
        %v3579 = vpop.f32.mrf.mxu0
        %v3580 = vadd.f32 0.0, %v3579
        %3581 = vmatmul.f32.gmra.mxu0 %v3470
        %v3582 = vpop.f32.mrf.mxu0
        %v3583 = vadd.f32 0.0, %v3582
        %3584 = vmatmul.f32.gmra.mxu0 %v3473
        %v3585 = vpop.f32.mrf.mxu0
        %v3586 = vadd.f32 0.0, %v3585
        %3587 = vmatmul.f32.gmra.mxu0 %v3476
        %v3588 = vpop.f32.mrf.mxu0
        %v3589 = vadd.f32 0.0, %v3588
        %3590 = vmatmul.f32.gmra.mxu0 %v3479
        %v3591 = vpop.f32.mrf.mxu0
        %v3592 = vadd.f32 0.0, %v3591
        %3593 = vmatmul.f32.gmra.mxu0 %v3482
        %v3594 = vpop.f32.mrf.mxu0
        %v3595 = vadd.f32 0.0, %v3594
        %3596 = vmatmul.f32.gmra.mxu0 %v3485
        %v3597 = vpop.f32.mrf.mxu0
        %v3598 = vadd.f32 0.0, %v3597
        %3599 = vmatmul.f32.gmra.mxu0 %v3488
        %v3600 = vpop.f32.mrf.mxu0
        %v3601 = vadd.f32 0.0, %v3600
        %3602 = vmatmul.f32.gmra.mxu0 %v3491
        %v3603 = vpop.f32.mrf.mxu0
        %v3604 = vadd.f32 0.0, %v3603
        %3605 = vmatmul.f32.gmra.mxu0 %v3494
        %v3606 = vpop.f32.mrf.mxu0
        %v3607 = vadd.f32 0.0, %v3606
        %3608 = vmatmul.f32.gmra.mxu0 %v3497
        %v3609 = vpop.f32.mrf.mxu0
        %v3610 = vadd.f32 0.0, %v3609
        %3611 = vmatmul.f32.gmra.mxu0 %v3500
        %v3612 = vpop.f32.mrf.mxu0
        %v3613 = vadd.f32 0.0, %v3612
        %3614 = vmatmul.f32.gmra.mxu0 %v3503
        %v3615 = vpop.f32.mrf.mxu0
        %v3616 = vadd.f32 0.0, %v3615
        %3617 = vmatmul.f32.gmra.mxu0 %v3506
        %v3618 = vpop.f32.mrf.mxu0
        %v3619 = vadd.f32 0.0, %v3618
        %3620 = vmatmul.f32.gmra.mxu0 %v3509
        %v3621 = vpop.f32.mrf.mxu0
        %v3622 = vadd.f32 0.0, %v3621
        %3623 = vmatmul.f32.gmra.mxu0 %v3512
        %v3624 = vpop.f32.mrf.mxu0
        %v3625 = vadd.f32 0.0, %v3624
        %3626 = vmatmul.f32.gmra.mxu0 %v3515
        %v3627 = vpop.f32.mrf.mxu0
        %v3628 = vadd.f32 0.0, %v3627
        %3629 = vmatmul.f32.gmra.mxu0 %v3518
        %v3630 = vpop.f32.mrf.mxu0
        %v3631 = vadd.f32 0.0, %v3630
        %3632 = vmatmul.f32.gmra.mxu0 %v3521
        %v3633 = vpop.f32.mrf.mxu0
        %v3634 = vadd.f32 0.0, %v3633
        %3635 = vmatmul.f32.gmra.mxu0 %v3524
        %v3636 = vpop.f32.mrf.mxu0
        %v3637 = vadd.f32 0.0, %v3636
        %3638 = vmatmul.f32.gmra.mxu0 %v3527
        %v3639 = vpop.f32.mrf.mxu0
        %v3640 = vadd.f32 0.0, %v3639
        %3641 = vmatmul.f32.gmra.mxu0 %v3530
        %v3642 = vpop.f32.mrf.mxu0
        %v3643 = vadd.f32 0.0, %v3642
        %3644 = vmatmul.f32.gmra.mxu0 %v3533
        %v3645 = vpop.f32.mrf.mxu0
        %v3646 = vadd.f32 0.0, %v3645
        %3647 = vmatmul.f32.gmra.mxu0 %v3536
        %v3648 = vpop.f32.mrf.mxu0
        %v3649 = vadd.f32 0.0, %v3648
        %3650 = vmatmul.f32.gmra.mxu0 %v3539
        %v3651 = vpop.f32.mrf.mxu0
        %v3652 = vadd.f32 0.0, %v3651
        %3653 = vmatmul.f32.gmra.mxu0 %v3542
        %v3654 = vpop.f32.mrf.mxu0
        %v3655 = vadd.f32 0.0, %v3654
        %3656 = vmatmul.f32.gmra.mxu0 %v3545
        %v3657 = vpop.f32.mrf.mxu0
        %v3658 = vadd.f32 0.0, %v3657
        %3659 = vmatmul.f32.gmra.mxu0 %v3548
        %v3660 = vpop.f32.mrf.mxu0
        %v3661 = vadd.f32 0.0, %v3660
        %3662 = vmatmul.f32.gmra.mxu0 %v3551
        %v3663 = vpop.f32.mrf.mxu0
        %v3664 = vadd.f32 0.0, %v3663
        %3665 = vdwg.mxu0
        %v3666 = vadd.f32 %v3389, %v3571
        %v3667 = vadd.f32 %v3390, %v3574
        %v3668 = vadd.f32 %v3391, %v3577
        %v3669 = vadd.f32 %v3392, %v3580
        %v3670 = vadd.f32 %v3393, %v3583
        %v3671 = vadd.f32 %v3394, %v3586
        %v3672 = vadd.f32 %v3395, %v3589
        %v3673 = vadd.f32 %v3396, %v3592
        %v3674 = vadd.f32 %v3397, %v3595
        %v3675 = vadd.f32 %v3398, %v3598
        %v3676 = vadd.f32 %v3399, %v3601
        %v3677 = vadd.f32 %v3400, %v3604
        %v3678 = vadd.f32 %v3401, %v3607
        %v3679 = vadd.f32 %v3402, %v3610
        %v3680 = vadd.f32 %v3403, %v3613
        %v3681 = vadd.f32 %v3404, %v3616
        %v3682 = vadd.f32 %v3405, %v3619
        %v3683 = vadd.f32 %v3406, %v3622
        %v3684 = vadd.f32 %v3407, %v3625
        %v3685 = vadd.f32 %v3408, %v3628
        %v3686 = vadd.f32 %v3409, %v3631
        %v3687 = vadd.f32 %v3410, %v3634
        %v3688 = vadd.f32 %v3411, %v3637
        %v3689 = vadd.f32 %v3412, %v3640
        %v3690 = vadd.f32 %v3413, %v3643
        %v3691 = vadd.f32 %v3414, %v3646
        %v3692 = vadd.f32 %v3415, %v3649
        %v3693 = vadd.f32 %v3416, %v3652
        %v3694 = vadd.f32 %v3417, %v3655
        %v3695 = vadd.f32 %v3418, %v3658
        %v3696 = vadd.f32 %v3419, %v3661
        %v3697 = vadd.f32 %v3420, %v3664
        %v3699 = vsel %vm2144, %v3453, 0
        %v3702 = vsel %vm2144, %v3454, 0
        %3704 = vmatpush.msra.mxu0 0.0
        %3705 = vmatpush.msra.mxu0 0.0
        %3706 = vmatpush.msra.mxu0 0.0
        %3707 = vmatpush.msra.mxu0 0.0
        %3708 = vmatpush.msra.mxu0 0.0
        %3709 = vmatpush.msra.mxu0 0.0
        %3710 = vmatpush.msra.mxu0 0.0
        %3711 = vmatpush.msra.mxu0 0.0
        %3712 = vmatpush.msra.mxu0 0.0
        %3713 = vmatpush.msra.mxu0 0.0
        %3714 = vmatpush.msra.mxu0 0.0
        %3715 = vmatpush.msra.mxu0 0.0
        %3716 = vmatpush.msra.mxu0 %v2246
        %3717 = vmatpush.msra.mxu0 %v2245
        %3718 = vmatpush.msra.mxu0 %v2244
        %3719 = vmatpush.msra.mxu0 %v2243
        %3720 = vmatmul.f32.gmra.mxu0 %v3464
        %v3721 = vpop.f32.mrf.mxu0
        %v3722 = vadd.f32 0.0, %v3721
        %3723 = vmatmul.f32.gmra.mxu0 %v3467
        %v3724 = vpop.f32.mrf.mxu0
        %v3725 = vadd.f32 0.0, %v3724
        %3726 = vmatmul.f32.gmra.mxu0 %v3470
        %v3727 = vpop.f32.mrf.mxu0
        %v3728 = vadd.f32 0.0, %v3727
        %3729 = vmatmul.f32.gmra.mxu0 %v3473
        %v3730 = vpop.f32.mrf.mxu0
        %v3731 = vadd.f32 0.0, %v3730
        %3732 = vmatmul.f32.gmra.mxu0 %v3476
        %v3733 = vpop.f32.mrf.mxu0
        %v3734 = vadd.f32 0.0, %v3733
        %3735 = vmatmul.f32.gmra.mxu0 %v3479
        %v3736 = vpop.f32.mrf.mxu0
        %v3737 = vadd.f32 0.0, %v3736
        %3738 = vmatmul.f32.gmra.mxu0 %v3482
        %v3739 = vpop.f32.mrf.mxu0
        %v3740 = vadd.f32 0.0, %v3739
        %3741 = vmatmul.f32.gmra.mxu0 %v3485
        %v3742 = vpop.f32.mrf.mxu0
        %v3743 = vadd.f32 0.0, %v3742
        %3744 = vmatmul.f32.gmra.mxu0 %v3488
        %v3745 = vpop.f32.mrf.mxu0
        %v3746 = vadd.f32 0.0, %v3745
        %3747 = vmatmul.f32.gmra.mxu0 %v3491
        %v3748 = vpop.f32.mrf.mxu0
        %v3749 = vadd.f32 0.0, %v3748
        %3750 = vmatmul.f32.gmra.mxu0 %v3494
        %v3751 = vpop.f32.mrf.mxu0
        %v3752 = vadd.f32 0.0, %v3751
        %3753 = vmatmul.f32.gmra.mxu0 %v3497
        %v3754 = vpop.f32.mrf.mxu0
        %v3755 = vadd.f32 0.0, %v3754
        %3756 = vmatmul.f32.gmra.mxu0 %v3500
        %v3757 = vpop.f32.mrf.mxu0
        %v3758 = vadd.f32 0.0, %v3757
        %3759 = vmatmul.f32.gmra.mxu0 %v3503
        %v3760 = vpop.f32.mrf.mxu0
        %v3761 = vadd.f32 0.0, %v3760
        %3762 = vmatmul.f32.gmra.mxu0 %v3506
        %v3763 = vpop.f32.mrf.mxu0
        %v3764 = vadd.f32 0.0, %v3763
        %3765 = vmatmul.f32.gmra.mxu0 %v3509
        %v3766 = vpop.f32.mrf.mxu0
        %v3767 = vadd.f32 0.0, %v3766
        %3768 = vmatmul.f32.gmra.mxu0 %v3512
        %v3769 = vpop.f32.mrf.mxu0
        %v3770 = vadd.f32 0.0, %v3769
        %3771 = vmatmul.f32.gmra.mxu0 %v3515
        %v3772 = vpop.f32.mrf.mxu0
        %v3773 = vadd.f32 0.0, %v3772
        %3774 = vmatmul.f32.gmra.mxu0 %v3518
        %v3775 = vpop.f32.mrf.mxu0
        %v3776 = vadd.f32 0.0, %v3775
        %3777 = vmatmul.f32.gmra.mxu0 %v3521
        %v3778 = vpop.f32.mrf.mxu0
        %v3779 = vadd.f32 0.0, %v3778
        %3780 = vmatmul.f32.gmra.mxu0 %v3524
        %v3781 = vpop.f32.mrf.mxu0
        %v3782 = vadd.f32 0.0, %v3781
        %3783 = vmatmul.f32.gmra.mxu0 %v3527
        %v3784 = vpop.f32.mrf.mxu0
        %v3785 = vadd.f32 0.0, %v3784
        %3786 = vmatmul.f32.gmra.mxu0 %v3530
        %v3787 = vpop.f32.mrf.mxu0
        %v3788 = vadd.f32 0.0, %v3787
        %3789 = vmatmul.f32.gmra.mxu0 %v3533
        %v3790 = vpop.f32.mrf.mxu0
        %v3791 = vadd.f32 0.0, %v3790
        %3792 = vmatmul.f32.gmra.mxu0 %v3536
        %v3793 = vpop.f32.mrf.mxu0
        %v3794 = vadd.f32 0.0, %v3793
        %3795 = vmatmul.f32.gmra.mxu0 %v3539
        %v3796 = vpop.f32.mrf.mxu0
        %v3797 = vadd.f32 0.0, %v3796
        %3798 = vmatmul.f32.gmra.mxu0 %v3542
        %v3799 = vpop.f32.mrf.mxu0
        %v3800 = vadd.f32 0.0, %v3799
        %3801 = vmatmul.f32.gmra.mxu0 %v3545
        %v3802 = vpop.f32.mrf.mxu0
        %v3803 = vadd.f32 0.0, %v3802
        %3804 = vmatmul.f32.gmra.mxu0 %v3548
        %v3805 = vpop.f32.mrf.mxu0
        %v3806 = vadd.f32 0.0, %v3805
        %3807 = vmatmul.f32.gmra.mxu0 %v3551
        %v3808 = vpop.f32.mrf.mxu0
        %v3809 = vadd.f32 0.0, %v3808
        %3810 = vmatmul.f32.gmra.mxu0 %v3699
        %v3811 = vpop.f32.mrf.mxu0
        %v3812 = vadd.f32 0.0, %v3811
        %3813 = vmatmul.f32.gmra.mxu0 %v3702
        %v3814 = vpop.f32.mrf.mxu0
        %v3815 = vadd.f32 0.0, %v3814
        %3816 = vdwg.mxu0
        %v3817 = vadd.f32 %v3666, %v3722
        %v3818 = vadd.f32 %v3667, %v3725
        %v3819 = vadd.f32 %v3668, %v3728
        %v3820 = vadd.f32 %v3669, %v3731
        %v3821 = vadd.f32 %v3670, %v3734
        %v3822 = vadd.f32 %v3671, %v3737
        %v3823 = vadd.f32 %v3672, %v3740
        %v3824 = vadd.f32 %v3673, %v3743
        %v3825 = vadd.f32 %v3674, %v3746
        %v3826 = vadd.f32 %v3675, %v3749
        %v3827 = vadd.f32 %v3676, %v3752
        %v3828 = vadd.f32 %v3677, %v3755
        %v3829 = vadd.f32 %v3678, %v3758
        %v3830 = vadd.f32 %v3679, %v3761
        %v3831 = vadd.f32 %v3680, %v3764
        %v3832 = vadd.f32 %v3681, %v3767
        %v3833 = vadd.f32 %v3682, %v3770
        %v3834 = vadd.f32 %v3683, %v3773
        %v3835 = vadd.f32 %v3684, %v3776
        %v3836 = vadd.f32 %v3685, %v3779
        %v3837 = vadd.f32 %v3686, %v3782
        %v3838 = vadd.f32 %v3687, %v3785
        %v3839 = vadd.f32 %v3688, %v3788
        %v3840 = vadd.f32 %v3689, %v3791
        %v3841 = vadd.f32 %v3690, %v3794
        %v3842 = vadd.f32 %v3691, %v3797
        %v3843 = vadd.f32 %v3692, %v3800
        %v3844 = vadd.f32 %v3693, %v3803
        %v3845 = vadd.f32 %v3694, %v3806
        %v3846 = vadd.f32 %v3695, %v3809
        %v3847 = vadd.f32 %v3696, %v3812
        %v3848 = vadd.f32 %v3697, %v3815
        %v3850 = vsel %vm2144, %v3455, 0
        %v3853 = vsel %vm2144, %v3456, 0
        %3855 = vmatpush.msra.mxu0 0.0
        %3856 = vmatpush.msra.mxu0 0.0
        %3857 = vmatpush.msra.mxu0 0.0
        %3858 = vmatpush.msra.mxu0 0.0
        %3859 = vmatpush.msra.mxu0 0.0
        %3860 = vmatpush.msra.mxu0 0.0
        %3861 = vmatpush.msra.mxu0 0.0
        %3862 = vmatpush.msra.mxu0 0.0
        %3863 = vmatpush.msra.mxu0 0.0
        %3864 = vmatpush.msra.mxu0 0.0
        %3865 = vmatpush.msra.mxu0 0.0
        %3866 = vmatpush.msra.mxu0 0.0
        %3867 = vmatpush.msra.mxu0 %v2258
        %3868 = vmatpush.msra.mxu0 %v2257
        %3869 = vmatpush.msra.mxu0 %v2256
        %3870 = vmatpush.msra.mxu0 %v2255
        %3871 = vmatmul.f32.gmra.mxu0 %v3470
        %v3872 = vpop.f32.mrf.mxu0
        %v3873 = vadd.f32 0.0, %v3872
        %3874 = vmatmul.f32.gmra.mxu0 %v3473
        %v3875 = vpop.f32.mrf.mxu0
        %v3876 = vadd.f32 0.0, %v3875
        %3877 = vmatmul.f32.gmra.mxu0 %v3476
        %v3878 = vpop.f32.mrf.mxu0
        %v3879 = vadd.f32 0.0, %v3878
        %3880 = vmatmul.f32.gmra.mxu0 %v3479
        %v3881 = vpop.f32.mrf.mxu0
        %v3882 = vadd.f32 0.0, %v3881
        %3883 = vmatmul.f32.gmra.mxu0 %v3482
        %v3884 = vpop.f32.mrf.mxu0
        %v3885 = vadd.f32 0.0, %v3884
        %3886 = vmatmul.f32.gmra.mxu0 %v3485
        %v3887 = vpop.f32.mrf.mxu0
        %v3888 = vadd.f32 0.0, %v3887
        %3889 = vmatmul.f32.gmra.mxu0 %v3488
        %v3890 = vpop.f32.mrf.mxu0
        %v3891 = vadd.f32 0.0, %v3890
        %3892 = vmatmul.f32.gmra.mxu0 %v3491
        %v3893 = vpop.f32.mrf.mxu0
        %v3894 = vadd.f32 0.0, %v3893
        %3895 = vmatmul.f32.gmra.mxu0 %v3494
        %v3896 = vpop.f32.mrf.mxu0
        %v3897 = vadd.f32 0.0, %v3896
        %3898 = vmatmul.f32.gmra.mxu0 %v3497
        %v3899 = vpop.f32.mrf.mxu0
        %v3900 = vadd.f32 0.0, %v3899
        %3901 = vmatmul.f32.gmra.mxu0 %v3500
        %v3902 = vpop.f32.mrf.mxu0
        %v3903 = vadd.f32 0.0, %v3902
        %3904 = vmatmul.f32.gmra.mxu0 %v3503
        %v3905 = vpop.f32.mrf.mxu0
        %v3906 = vadd.f32 0.0, %v3905
        %3907 = vmatmul.f32.gmra.mxu0 %v3506
        %v3908 = vpop.f32.mrf.mxu0
        %v3909 = vadd.f32 0.0, %v3908
        %3910 = vmatmul.f32.gmra.mxu0 %v3509
        %v3911 = vpop.f32.mrf.mxu0
        %v3912 = vadd.f32 0.0, %v3911
        %3913 = vmatmul.f32.gmra.mxu0 %v3512
        %v3914 = vpop.f32.mrf.mxu0
        %v3915 = vadd.f32 0.0, %v3914
        %3916 = vmatmul.f32.gmra.mxu0 %v3515
        %v3917 = vpop.f32.mrf.mxu0
        %v3918 = vadd.f32 0.0, %v3917
        %3919 = vmatmul.f32.gmra.mxu0 %v3518
        %v3920 = vpop.f32.mrf.mxu0
        %v3921 = vadd.f32 0.0, %v3920
        %3922 = vmatmul.f32.gmra.mxu0 %v3521
        %v3923 = vpop.f32.mrf.mxu0
        %v3924 = vadd.f32 0.0, %v3923
        %3925 = vmatmul.f32.gmra.mxu0 %v3524
        %v3926 = vpop.f32.mrf.mxu0
        %v3927 = vadd.f32 0.0, %v3926
        %3928 = vmatmul.f32.gmra.mxu0 %v3527
        %v3929 = vpop.f32.mrf.mxu0
        %v3930 = vadd.f32 0.0, %v3929
        %3931 = vmatmul.f32.gmra.mxu0 %v3530
        %v3932 = vpop.f32.mrf.mxu0
        %v3933 = vadd.f32 0.0, %v3932
        %3934 = vmatmul.f32.gmra.mxu0 %v3533
        %v3935 = vpop.f32.mrf.mxu0
        %v3936 = vadd.f32 0.0, %v3935
        %3937 = vmatmul.f32.gmra.mxu0 %v3536
        %v3938 = vpop.f32.mrf.mxu0
        %v3939 = vadd.f32 0.0, %v3938
        %3940 = vmatmul.f32.gmra.mxu0 %v3539
        %v3941 = vpop.f32.mrf.mxu0
        %v3942 = vadd.f32 0.0, %v3941
        %3943 = vmatmul.f32.gmra.mxu0 %v3542
        %v3944 = vpop.f32.mrf.mxu0
        %v3945 = vadd.f32 0.0, %v3944
        %3946 = vmatmul.f32.gmra.mxu0 %v3545
        %v3947 = vpop.f32.mrf.mxu0
        %v3948 = vadd.f32 0.0, %v3947
        %3949 = vmatmul.f32.gmra.mxu0 %v3548
        %v3950 = vpop.f32.mrf.mxu0
        %v3951 = vadd.f32 0.0, %v3950
        %3952 = vmatmul.f32.gmra.mxu0 %v3551
        %v3953 = vpop.f32.mrf.mxu0
        %v3954 = vadd.f32 0.0, %v3953
        %3955 = vmatmul.f32.gmra.mxu0 %v3699
        %v3956 = vpop.f32.mrf.mxu0
        %v3957 = vadd.f32 0.0, %v3956
        %3958 = vmatmul.f32.gmra.mxu0 %v3702
        %v3959 = vpop.f32.mrf.mxu0
        %v3960 = vadd.f32 0.0, %v3959
        %3961 = vmatmul.f32.gmra.mxu0 %v3850
        %v3962 = vpop.f32.mrf.mxu0
        %v3963 = vadd.f32 0.0, %v3962
        %3964 = vmatmul.f32.gmra.mxu0 %v3853
        %v3965 = vpop.f32.mrf.mxu0
        %v3966 = vadd.f32 0.0, %v3965
        %3967 = vdwg.mxu0
        %v3968 = vadd.f32 %v3817, %v3873
        %v3969 = vadd.f32 %v3818, %v3876
        %v3970 = vadd.f32 %v3819, %v3879
        %v3971 = vadd.f32 %v3820, %v3882
        %v3972 = vadd.f32 %v3821, %v3885
        %v3973 = vadd.f32 %v3822, %v3888
        %v3974 = vadd.f32 %v3823, %v3891
        %v3975 = vadd.f32 %v3824, %v3894
        %v3976 = vadd.f32 %v3825, %v3897
        %v3977 = vadd.f32 %v3826, %v3900
        %v3978 = vadd.f32 %v3827, %v3903
        %v3979 = vadd.f32 %v3828, %v3906
        %v3980 = vadd.f32 %v3829, %v3909
        %v3981 = vadd.f32 %v3830, %v3912
        %v3982 = vadd.f32 %v3831, %v3915
        %v3983 = vadd.f32 %v3832, %v3918
        %v3984 = vadd.f32 %v3833, %v3921
        %v3985 = vadd.f32 %v3834, %v3924
        %v3986 = vadd.f32 %v3835, %v3927
        %v3987 = vadd.f32 %v3836, %v3930
        %v3988 = vadd.f32 %v3837, %v3933
        %v3989 = vadd.f32 %v3838, %v3936
        %v3990 = vadd.f32 %v3839, %v3939
        %v3991 = vadd.f32 %v3840, %v3942
        %v3992 = vadd.f32 %v3841, %v3945
        %v3993 = vadd.f32 %v3842, %v3948
        %v3994 = vadd.f32 %v3843, %v3951
        %v3995 = vadd.f32 %v3844, %v3954
        %v3996 = vadd.f32 %v3845, %v3957
        %v3997 = vadd.f32 %v3846, %v3960
        %v3998 = vadd.f32 %v3847, %v3963
        %v3999 = vadd.f32 %v3848, %v3966
        %v4000 = vmax.f32 %v3968, 0.0
        %v4001 = vmax.f32 %v3969, 0.0
        %v4002 = vmax.f32 %v3970, 0.0
        %v4003 = vmax.f32 %v3971, 0.0
        %v4004 = vmax.f32 %v3972, 0.0
        %v4005 = vmax.f32 %v3973, 0.0
        %v4006 = vmax.f32 %v3974, 0.0
        %v4007 = vmax.f32 %v3975, 0.0
        %v4008 = vmax.f32 %v3976, 0.0
        %v4009 = vmax.f32 %v3977, 0.0
        %v4010 = vmax.f32 %v3978, 0.0
        %v4011 = vmax.f32 %v3979, 0.0
        %v4012 = vmax.f32 %v3980, 0.0
        %v4013 = vmax.f32 %v3981, 0.0
        %v4014 = vmax.f32 %v3982, 0.0
        %v4015 = vmax.f32 %v3983, 0.0
        %v4016 = vmax.f32 %v3984, 0.0
        %v4017 = vmax.f32 %v3985, 0.0
        %v4018 = vmax.f32 %v3986, 0.0
        %v4019 = vmax.f32 %v3987, 0.0
        %v4020 = vmax.f32 %v3988, 0.0
        %v4021 = vmax.f32 %v3989, 0.0
        %v4022 = vmax.f32 %v3990, 0.0
        %v4023 = vmax.f32 %v3991, 0.0
        %v4024 = vmax.f32 %v3992, 0.0
        %v4025 = vmax.f32 %v3993, 0.0
        %v4026 = vmax.f32 %v3994, 0.0
        %v4027 = vmax.f32 %v3995, 0.0
        %v4028 = vmax.f32 %v3996, 0.0
        %v4029 = vmax.f32 %v3997, 0.0
        %v4030 = vmax.f32 %v3998, 0.0
        %v4031 = vmax.f32 %v3999, 0.0
        %4032 = vst.msk [vmem:[%s217] sm:$0xff] %vm2144, %v4000
        %4033 = vst.msk [vmem:[%s217 + $0x8] sm:$0xff] %vm2144, %v4001
        %4034 = vst.msk [vmem:[%s217 + $0x10] sm:$0xff] %vm2144, %v4002
        %4035 = vst.msk [vmem:[%s217 + $0x18] sm:$0xff] %vm2144, %v4003
        %4036 = vst.msk [vmem:[%s217 + $0x20] sm:$0xff] %vm2144, %v4004
        %4037 = vst.msk [vmem:[%s217 + $0x28] sm:$0xff] %vm2144, %v4005
        %4038 = vst.msk [vmem:[%s217 + $0x30] sm:$0xff] %vm2144, %v4006
        %4039 = vst.msk [vmem:[%s217 + $0x38] sm:$0xff] %vm2144, %v4007
        %4040 = vst.msk [vmem:[%s217 + $0x40] sm:$0xff] %vm2144, %v4008
        %4041 = vst.msk [vmem:[%s217 + $0x48] sm:$0xff] %vm2144, %v4009
        %4042 = vst.msk [vmem:[%s217 + $0x50] sm:$0xff] %vm2144, %v4010
        %4043 = vst.msk [vmem:[%s217 + $0x58] sm:$0xff] %vm2144, %v4011
        %4044 = vst.msk [vmem:[%s217 + $0x60] sm:$0xff] %vm2144, %v4012
        %4045 = vst.msk [vmem:[%s217 + $0x68] sm:$0xff] %vm2144, %v4013
        %4046 = vst.msk [vmem:[%s217 + $0x70] sm:$0xff] %vm2144, %v4014
        %4047 = vst.msk [vmem:[%s217 + $0x78] sm:$0xff] %vm2144, %v4015
        %4048 = vst.msk [vmem:[%s217 + $0x80] sm:$0xff] %vm2144, %v4016
        %4049 = vst.msk [vmem:[%s217 + $0x88] sm:$0xff] %vm2144, %v4017
        %4050 = vst.msk [vmem:[%s217 + $0x90] sm:$0xff] %vm2144, %v4018
        %4051 = vst.msk [vmem:[%s217 + $0x98] sm:$0xff] %vm2144, %v4019
        %4052 = vst.msk [vmem:[%s217 + $0xa0] sm:$0xff] %vm2144, %v4020
        %4053 = vst.msk [vmem:[%s217 + $0xa8] sm:$0xff] %vm2144, %v4021
        %4054 = vst.msk [vmem:[%s217 + $0xb0] sm:$0xff] %vm2144, %v4022
        %4055 = vst.msk [vmem:[%s217 + $0xb8] sm:$0xff] %vm2144, %v4023
        %4056 = vst.msk [vmem:[%s217 + $0xc0] sm:$0xff] %vm2144, %v4024
        %4057 = vst.msk [vmem:[%s217 + $0xc8] sm:$0xff] %vm2144, %v4025
        %4058 = vst.msk [vmem:[%s217 + $0xd0] sm:$0xff] %vm2144, %v4026
        %4059 = vst.msk [vmem:[%s217 + $0xd8] sm:$0xff] %vm2144, %v4027
        %4060 = vst.msk [vmem:[%s217 + $0xe0] sm:$0xff] %vm2144, %v4028
        %4061 = vst.msk [vmem:[%s217 + $0xe8] sm:$0xff] %vm2144, %v4029
        %4062 = vst.msk [vmem:[%s217 + $0xf0] sm:$0xff] %vm2144, %v4030
        %4063 = vst.msk [vmem:[%s217 + $0xf8] sm:$0xff] %vm2144, %v4031
        %s4064 = sand.u32 %s137, 1
        %s4065 = scalar_lea.sflag [#allocation5], %s4064
        %s4066 = sand.u32 %s137, 1
        %s4067 = smul.addr %s4066, 256
        %s4068 = scalar_lea.vmem [#allocation4], %s4067
        // Predicated region
        $region41: #{unet_conv2_forward.1} parent=39 // pred_check
          %p4069 = pneg %p147
        $region42: #{unet_conv2_forward.1} parent=39 // pred_check_branch
          %4071 = sbr.rel (%p4069) target = $region44
        $region43: #{unet_conv2_forward.1} parent=39 // pred_region
          %4073 = vsyncadd %s4065, 0
          %s4074 = smul.addr %s19, 32
          %s4075 = smul.addr %s4074, 8
          %s4076 = scalar_lea.hbm %s5, %s4075
          %s4077 = sshll.u32 %s4068, 4
          %s4078 = int_to_ptr.vmem [resolvable:$true] %s4077
          %s4079 = sshll.u32 %s4076, 4
          %s4080 = int_to_ptr.hbm [resolvable:$true] %s4079
          %4085 = dma.vmem_to_hbm [thread:$0]  %s4078, 4096, %s4080, %s4065, 128, 128, 8
        $region44: #{unet_conv2_forward.1} parent=39 // pred_fallthru
          _
      $region40: #{unet_conv2_forward.1} parent=5 // pred_fallthru
        _
      %p4086 = scmp.le.s32.totalorder 2, %s14
      // Predicated region
      $region45: #{unet_conv2_forward.1} parent=5 // pred_check
        %p4087 = pneg %p4086
      $region46: #{unet_conv2_forward.1} parent=5 // pred_check_branch
        %4089 = sbr.rel (%p4087) target = $region48
      $region47: #{unet_conv2_forward.1} parent=5 // pred_region
        %s4090 = ssub.s32 %s14, 2
        // Predicated region
        $region49: #{unet_conv2_forward.1} parent=47 // pred_check
          %p4091 = pneg %p153
        $region50: #{unet_conv2_forward.1} parent=47 // pred_check_branch
          %4093 = sbr.rel (%p4091) target = $region52
        $region51: #{unet_conv2_forward.1} parent=47 // pred_region
          %s4094 = sand.u32 %s138, 1
          %s4095 = scalar_lea.sflag [#allocation5], %s4094
          %s4096 = sand.u32 %s138, 1
          %s4097 = smul.addr %s4096, 256
          %s4098 = scalar_lea.vmem [#allocation4], %s4097
          %4100 = dma.done %s4095, 4096
        $region52: #{unet_conv2_forward.1} parent=47 // pred_fallthru
          _
      $region48: #{unet_conv2_forward.1} parent=5 // pred_fallthru
        _
    $region6: #{unet_conv2_forward.1} parent=1 // loop_footer
      %s18 = sadd.s32 1, %s14
    $region7: #{unet_conv2_forward.1} parent=1 // loop_footer_branch
      %13 = sbr.rel target = $region3
    $region8: #{unet_conv2_forward.1} parent=1 // loop_exit
      _
    %4101 = vsyncpa [#allocation5], 1
    %s4102 = scalar_lea.sflag [#allocation5], 1
    %4103 = vsyncpa %s4102, 1

</llo_original>
